<compile_context>
chip_gen: v6e
topology: v6e:2x2x1
jax: 0.10.0
libtpu: 0.0.40
codegen_flags: <defaults>
</compile_context>

<pallas_src>
import random

import jax
import jax.numpy as jnp
from jax import lax
from jax.experimental import pallas as pl
from jax.experimental.pallas import tpu as pltpu

# ---- small, deterministic model dims (stand-ins for the torchtext vocabs) ----
SRC_VOCAB = 40     # len(ger_text.vocab)
TGT_VOCAB = 48     # len(eng_text.vocab)
EMBED_DIM = 32     # 512 in the original
HIDDEN_DIM = 32    # 1024 in the original
NUM_LAYERS = 2
VOCAB_PAD = ((TGT_VOCAB + 127) // 128) * 128   # lane-dense logits slab (=128)


# --------------------------- in-kernel helpers --------------------------------
def _lstm_cell(x, h, c, w_ih, w_hh, b):
    """One LSTM cell step: split matmuls avoid a lane-axis concat relayout.

    x:(B,Din)  h,c:(B,H)  w_ih:(Din,4H)  w_hh:(H,4H)  b:(B,4H) pre-broadcast.
    """
    gates = (jnp.dot(x, w_ih, preferred_element_type=jnp.float32)
             + jnp.dot(h, w_hh, preferred_element_type=jnp.float32) + b)
    H = h.shape[-1]
    # PyTorch gate order: input, forget, cell(g), output
    i = jax.nn.sigmoid(gates[:, 0 * H:1 * H])
    f = jax.nn.sigmoid(gates[:, 1 * H:2 * H])
    g = jnp.tanh(gates[:, 2 * H:3 * H])
    o = jax.nn.sigmoid(gates[:, 3 * H:4 * H])
    c_new = f * c + i * g
    h_new = o * jnp.tanh(c_new)
    return h_new, c_new


def _lstm_cell_zero_state(x, w_ih, b):
    """LSTM cell with h=c=0 (reference decoder bug): W_hh@h and f*c vanish."""
    gates = jnp.dot(x, w_ih, preferred_element_type=jnp.float32) + b
    H = gates.shape[-1] // 4
    i = jax.nn.sigmoid(gates[:, 0 * H:1 * H])
    # forget gate skipped: it multiplies c=0 exactly.
    g = jnp.tanh(gates[:, 2 * H:3 * H])
    o = jax.nn.sigmoid(gates[:, 3 * H:4 * H])
    return o * jnp.tanh(i * g)


# --------------------------- fused Pallas kernel -------------------------------
def fused_kernel(forced_ref,
                 enc_emb_ref, ew0i_ref, ew0h_ref, eb0_ref,
                 ew1i_ref, ew1h_ref, eb1_ref,
                 tgt_ids_ref, demb_ref, dw0_ref, db0_ref, dw1_ref, db1_ref,
                 fcw_ref, fcb_ref,
                 h_ref, c_ref, out_ref):
    """Single-invocation kernel: full encoder recurrence + full decoder loop.

    forced:(T-1,) int32 in SMEM (scalar prefetch).  enc_emb:(S,B,E).
    tgt_ids:(T-1,B,1) int32.  Outputs: h,c:(L,B,H), logits:(T-1,B,Vp).
    """
    S, B, _ = enc_emb_ref.shape
    H = HIDDEN_DIM
    steps, _, Vp = out_ref.shape

    # ----------------- encoder: 2-layer LSTM over S source steps --------------
    ew0i = ew0i_ref[...]
    ew0h = ew0h_ref[...]
    ew1i = ew1i_ref[...]
    ew1h = ew1h_ref[...]
    eb0 = jnp.broadcast_to(eb0_ref[...], (B, 4 * H))      # hoisted broadcasts
    eb1 = jnp.broadcast_to(eb1_ref[...], (B, 4 * H))
    # TODO(synk): training-mode dropout (embeddings + inter-layer LSTM, p=0.5)
    # is stochastic; eval (identity) semantics are used.
    zeros = jnp.zeros((B, H), jnp.float32)

    def enc_body(s, carry):
        h0, c0, h1, c1 = carry
        x = enc_emb_ref[s]                                           # (B, E)
        h0, c0 = _lstm_cell(x, h0, c0, ew0i, ew0h, eb0)
        h1, c1 = _lstm_cell(h0, h1, c1, ew1i, ew1h, eb1)
        return (h0, c0, h1, c1)

    h0, c0, h1, c1 = lax.fori_loop(0, S, enc_body,
                                   (zeros, zeros, zeros, zeros), unroll=True)
    h_ref[0] = h0
    h_ref[1] = h1
    c_ref[0] = c0
    c_ref[1] = c1

    # ----------------- decoder: T-1 target steps (zero-state LSTM bug) --------
    demb = demb_ref[...]
    dw0 = dw0_ref[...]
    dw1 = dw1_ref[...]
    fcw = fcw_ref[...]
    db0 = jnp.broadcast_to(db0_ref[...], (B, 4 * H))
    db1 = jnp.broadcast_to(db1_ref[...], (B, 4 * H))
    fcb = jnp.broadcast_to(fcb_ref[...], (B, Vp))
    lane = jax.lax.broadcasted_iota(jnp.int32, (B, Vp), 1)           # hoisted
    lane_f = lane.astype(jnp.float32)

    def dec_body(t, pred_oh):
        # One-hot of target[t], built in-kernel from int32 ids (no host one_hot).
        tgt_oh = (lane == tgt_ids_ref[t]).astype(jnp.float32)        # (B, Vp)
        # Teacher-forcing blend of one-hots (both exactly 0/1 -> exact select).
        use_tgt = (forced_ref[t] == 1).astype(jnp.float32)
        x_oh = use_tgt * tgt_oh + (1.0 - use_tgt) * pred_oh

        # Embedding lookup as a one-hot matmul against the resident table.
        emb = jnp.dot(x_oh, demb, preferred_element_type=jnp.float32)  # (B, E)

        # Reference bug reproduced: decoder LSTM restarts from zeros each step.
        hh0 = _lstm_cell_zero_state(emb, dw0, db0)
        hh1 = _lstm_cell_zero_state(hh0, dw1, db1)

        logits = (jnp.dot(hh1, fcw, preferred_element_type=jnp.float32)
                  + fcb)                                              # (B, Vp)
        out_ref[t] = logits

        # First-occurrence argmax kept as a one-hot for the next (non-forced) step.
        maxv = jnp.max(logits, axis=1, keepdims=True)
        first = jnp.min(jnp.where(logits == maxv, lane_f, float(Vp)),
                        axis=1, keepdims=True)
        return (lane_f == first).astype(jnp.float32)

    lax.fori_loop(0, steps, dec_body,
                  jnp.zeros((B, Vp), jnp.float32), unroll=True)


# ------------------------------ wrappers --------------------------------------
@jax.jit
def _network_forward_device(prep, source, target, forced):
    S, B = source.shape
    T = target.shape[0]
    steps = T - 1
    H, Vp = HIDDEN_DIM, VOCAB_PAD

    enc_emb = jnp.take(prep["enc_embed"], source, axis=0)            # (S, B, E)
    tgt_ids = target[:steps].astype(jnp.int32)[..., None]            # (steps,B,1)

    grid_spec = pltpu.PrefetchScalarGridSpec(
        num_scalar_prefetch=1,
        grid=(1,),
        in_specs=[
            pl.BlockSpec(enc_emb.shape, lambda i, f: (0, 0, 0)),       # enc emb
            pl.BlockSpec(prep["ew0i"].shape, lambda i, f: (0, 0)),     # enc L0 W_ih
            pl.BlockSpec(prep["ew0h"].shape, lambda i, f: (0, 0)),     # enc L0 W_hh
            pl.BlockSpec(prep["eb0"].shape, lambda i, f: (0, 0)),      # enc L0 bias
            pl.BlockSpec(prep["ew1i"].shape, lambda i, f: (0, 0)),     # enc L1 W_ih
            pl.BlockSpec(prep["ew1h"].shape, lambda i, f: (0, 0)),     # enc L1 W_hh
            pl.BlockSpec(prep["eb1"].shape, lambda i, f: (0, 0)),      # enc L1 bias
            pl.BlockSpec(tgt_ids.shape, lambda i, f: (0, 0, 0)),       # target ids
            pl.BlockSpec(prep["dec_emb_pad"].shape, lambda i, f: (0, 0)),
            pl.BlockSpec(prep["dw0"].shape, lambda i, f: (0, 0)),      # dec L0 W_ih
            pl.BlockSpec(prep["db0"].shape, lambda i, f: (0, 0)),      # dec L0 bias
            pl.BlockSpec(prep["dw1"].shape, lambda i, f: (0, 0)),      # dec L1 W_ih
            pl.BlockSpec(prep["db1"].shape, lambda i, f: (0, 0)),      # dec L1 bias
            pl.BlockSpec(prep["fcw"].shape, lambda i, f: (0, 0)),      # fc weight
            pl.BlockSpec(prep["fcb"].shape, lambda i, f: (0, 0)),      # fc bias
        ],
        out_specs=(
            pl.BlockSpec((NUM_LAYERS, B, H), lambda i, f: (0, 0, 0)),
            pl.BlockSpec((NUM_LAYERS, B, H), lambda i, f: (0, 0, 0)),
            pl.BlockSpec((steps, B, Vp), lambda i, f: (0, 0, 0)),
        ),
    )
    h, c, dec_out = pl.pallas_call(
        fused_kernel,
        out_shape=(jax.ShapeDtypeStruct((NUM_LAYERS, B, H), jnp.float32),
                   jax.ShapeDtypeStruct((NUM_LAYERS, B, H), jnp.float32),
                   jax.ShapeDtypeStruct((steps, B, Vp), jnp.float32)),
        grid_spec=grid_spec,
        compiler_params=pltpu.CompilerParams(
            dimension_semantics=("arbitrary",)),
    )(forced, enc_emb,
      prep["ew0i"], prep["ew0h"], prep["eb0"],
      prep["ew1i"], prep["ew1h"], prep["eb1"],
      tgt_ids, prep["dec_emb_pad"],
      prep["dw0"], prep["db0"], prep["dw1"], prep["db1"],
      prep["fcw"], prep["fcb"])

    outputs = jnp.concatenate(
        [jnp.zeros((1, B, TGT_VOCAB), jnp.float32), dec_out[:, :, :TGT_VOCAB]],
        axis=0)
    return outputs, h, c


def network_forward(prep, source, target, ratio=0.5, tf_seed=0):
    target_len = target.shape[0]
    rng = random.Random(tf_seed)   # deterministic stand-in for random.random()
    # Decision drawn at iteration t selects the *next* step's input; the last
    # draw is unused (as in the reference loop).
    decisions = [1 if rng.random() < ratio else 0 for _ in range(1, target_len)]
    forced = jnp.asarray([1] + decisions[:-1], dtype=jnp.int32)  # per dec step
    outputs, _h, _c = _network_forward_device(prep, source, target, forced)
    return outputs                                   # (target_len, B, TGT_VOCAB)


# --------------------------- parameter init -----------------------------------
def _uniform(key, shape, bound):
    return jax.random.uniform(key, shape, jnp.float32, -bound, bound)


def init_lstm_layer(key, in_dim, hidden_dim):
    bound = 1.0 / float(hidden_dim) ** 0.5
    k1, k2, k3, k4 = jax.random.split(key, 4)
    return {
        "w_ih": _uniform(k1, (in_dim, 4 * hidden_dim), bound),       # W_ih^T
        "w_hh": _uniform(k2, (hidden_dim, 4 * hidden_dim), bound),   # W_hh^T
        "b": (_uniform(k3, (1, 4 * hidden_dim), bound)
              + _uniform(k4, (1, 4 * hidden_dim), bound)),           # b_ih+b_hh
    }


def init_params(key):
    keys = jax.random.split(key, 8)
    fc_bound = 1.0 / float(HIDDEN_DIM) ** 0.5
    return {
        "enc_embed": jax.random.normal(keys[0], (SRC_VOCAB, EMBED_DIM), jnp.float32),
        "dec_embed": jax.random.normal(keys[1], (TGT_VOCAB, EMBED_DIM), jnp.float32),
        "enc_lstm": [init_lstm_layer(keys[2], EMBED_DIM, HIDDEN_DIM),
                     init_lstm_layer(keys[3], HIDDEN_DIM, HIDDEN_DIM)],
        "dec_lstm": [init_lstm_layer(keys[4], EMBED_DIM, HIDDEN_DIM),
                     init_lstm_layer(keys[5], HIDDEN_DIM, HIDDEN_DIM)],
        "fc_w_t": _uniform(keys[6], (HIDDEN_DIM, TGT_VOCAB), fc_bound),
        "fc_b": _uniform(keys[7], (1, TGT_VOCAB), fc_bound),
    }


def prepare_params(params):
    """One-time prep: vocab padding, -1e30 pad bias, decoder W_ih extraction.

    Hoisted out of the per-call path so the jitted forward gets final arrays.
    """
    V, Vp = TGT_VOCAB, VOCAB_PAD
    return {
        "enc_embed": params["enc_embed"],
        "ew0i": params["enc_lstm"][0]["w_ih"],
        "ew0h": params["enc_lstm"][0]["w_hh"],
        "eb0": params["enc_lstm"][0]["b"],
        "ew1i": params["enc_lstm"][1]["w_ih"],
        "ew1h": params["enc_lstm"][1]["w_hh"],
        "eb1": params["enc_lstm"][1]["b"],
        # Vocab axis padded to 128 lanes; pad bias -1e30 so argmax never picks
        # a pad column.
        "dec_emb_pad": jnp.pad(params["dec_embed"], ((0, Vp - V), (0, 0))),
        "dw0": params["dec_lstm"][0]["w_ih"],   # W_ih only: zero-state bug
        "db0": params["dec_lstm"][0]["b"],
        "dw1": params["dec_lstm"][1]["w_ih"],
        "db1": params["dec_lstm"][1]["b"],
        "fcw": jnp.pad(params["fc_w_t"], ((0, 0), (0, Vp - V))),
        "fcb": jnp.concatenate(
            [params["fc_b"], jnp.full((1, Vp - V), -1e30, jnp.float32)], axis=1),
    }


# --------------------------------- main ----------------------------------------
if __name__ == "__main__":
    key = jax.random.PRNGKey(0)
    kp, ks, kt = jax.random.split(key, 3)

    params = prepare_params(init_params(kp))

    src_len, tgt_len, batch = 6, 5, 8
    source = jax.random.randint(ks, (src_len, batch), 0, SRC_VOCAB, dtype=jnp.int32)
    target = jax.random.randint(kt, (tgt_len, batch), 0, TGT_VOCAB, dtype=jnp.int32)

    outputs = network_forward(params, source, target, ratio=0.5)
    outputs = jax.block_until_ready(outputs)

    assert outputs.shape == (tgt_len, batch, TGT_VOCAB)
    assert bool(jnp.all(outputs[0] == 0.0))   # outputs[0] untouched, as in reference
    assert bool(jnp.all(jnp.isfinite(outputs)))
    print("KERNEL_OK")
</pallas_src>

<mosaic_0001>
module attributes {stable_mosaic.version = 11 : i64} {
  func.func @fused_kernel(%arg0: i32, %arg1: memref<4xi32, #tpu.memory_space<smem>>, %arg2: memref<6x8x32xf32, #tpu.memory_space<vmem>>, %arg3: memref<32x128xf32, #tpu.memory_space<vmem>>, %arg4: memref<32x128xf32, #tpu.memory_space<vmem>>, %arg5: memref<1x128xf32, #tpu.memory_space<vmem>>, %arg6: memref<32x128xf32, #tpu.memory_space<vmem>>, %arg7: memref<32x128xf32, #tpu.memory_space<vmem>>, %arg8: memref<1x128xf32, #tpu.memory_space<vmem>>, %arg9: memref<4x8x1xi32, #tpu.memory_space<vmem>>, %arg10: memref<128x32xf32, #tpu.memory_space<vmem>>, %arg11: memref<32x128xf32, #tpu.memory_space<vmem>>, %arg12: memref<1x128xf32, #tpu.memory_space<vmem>>, %arg13: memref<32x128xf32, #tpu.memory_space<vmem>>, %arg14: memref<1x128xf32, #tpu.memory_space<vmem>>, %arg15: memref<32x128xf32, #tpu.memory_space<vmem>>, %arg16: memref<1x128xf32, #tpu.memory_space<vmem>>, %arg17: memref<2x8x32xf32, #tpu.memory_space<vmem>>, %arg18: memref<2x8x32xf32, #tpu.memory_space<vmem>>, %arg19: memref<4x8x128xf32, #tpu.memory_space<vmem>>) attributes {dimension_semantics = [#tpu.dimension_semantics<arbitrary>], iteration_bounds = array<i64: 1>, scalar_prefetch = 1 : i64, scratch_operands = 0 : i64, tpu.core_type = #tpu.core_type<tc>, window_params = [{pipeline_mode = #tpu.pipeline_mode<synchronous>, transform_indices = @transform_0, window_bounds = array<i64: 6, 8, 32>}, {pipeline_mode = #tpu.pipeline_mode<synchronous>, transform_indices = @transform_1, window_bounds = array<i64: 32, 128>}, {pipeline_mode = #tpu.pipeline_mode<synchronous>, transform_indices = @transform_2, window_bounds = array<i64: 32, 128>}, {pipeline_mode = #tpu.pipeline_mode<synchronous>, transform_indices = @transform_3, window_bounds = array<i64: 1, 128>}, {pipeline_mode = #tpu.pipeline_mode<synchronous>, transform_indices = @transform_4, window_bounds = array<i64: 32, 128>}, {pipeline_mode = #tpu.pipeline_mode<synchronous>, transform_indices = @transform_5, window_bounds = array<i64: 32, 128>}, {pipeline_mode = #tpu.pipeline_mode<synchronous>, transform_indices = @transform_6, window_bounds = array<i64: 1, 128>}, {pipeline_mode = #tpu.pipeline_mode<synchronous>, transform_indices = @transform_7, window_bounds = array<i64: 4, 8, 1>}, {pipeline_mode = #tpu.pipeline_mode<synchronous>, transform_indices = @transform_8, window_bounds = array<i64: 128, 32>}, {pipeline_mode = #tpu.pipeline_mode<synchronous>, transform_indices = @transform_9, window_bounds = array<i64: 32, 128>}, {pipeline_mode = #tpu.pipeline_mode<synchronous>, transform_indices = @transform_10, window_bounds = array<i64: 1, 128>}, {pipeline_mode = #tpu.pipeline_mode<synchronous>, transform_indices = @transform_11, window_bounds = array<i64: 32, 128>}, {pipeline_mode = #tpu.pipeline_mode<synchronous>, transform_indices = @transform_12, window_bounds = array<i64: 1, 128>}, {pipeline_mode = #tpu.pipeline_mode<synchronous>, transform_indices = @transform_13, window_bounds = array<i64: 32, 128>}, {pipeline_mode = #tpu.pipeline_mode<synchronous>, transform_indices = @transform_14, window_bounds = array<i64: 1, 128>}, {pipeline_mode = #tpu.pipeline_mode<synchronous>, transform_indices = @transform_15, window_bounds = array<i64: 2, 8, 32>}, {pipeline_mode = #tpu.pipeline_mode<synchronous>, transform_indices = @transform_16, window_bounds = array<i64: 2, 8, 32>}, {pipeline_mode = #tpu.pipeline_mode<synchronous>, transform_indices = @transform_17, window_bounds = array<i64: 4, 8, 128>}]} {
    %c0 = arith.constant 0 : index
    %c0_0 = arith.constant 0 : index
    %0 = vector.load %arg3[%c0, %c0_0] : memref<32x128xf32, #tpu.memory_space<vmem>>, vector<32x128xf32>
    %c0_1 = arith.constant 0 : index
    %c0_2 = arith.constant 0 : index
    %1 = vector.load %arg4[%c0_1, %c0_2] : memref<32x128xf32, #tpu.memory_space<vmem>>, vector<32x128xf32>
    %c0_3 = arith.constant 0 : index
    %c0_4 = arith.constant 0 : index
    %2 = vector.load %arg6[%c0_3, %c0_4] : memref<32x128xf32, #tpu.memory_space<vmem>>, vector<32x128xf32>
    %c0_5 = arith.constant 0 : index
    %c0_6 = arith.constant 0 : index
    %3 = vector.load %arg7[%c0_5, %c0_6] : memref<32x128xf32, #tpu.memory_space<vmem>>, vector<32x128xf32>
    %c0_7 = arith.constant 0 : index
    %c0_8 = arith.constant 0 : index
    %4 = vector.load %arg5[%c0_7, %c0_8] : memref<1x128xf32, #tpu.memory_space<vmem>>, vector<1x128xf32>
    %5 = vector.shape_cast %4 : vector<1x128xf32> to vector<1x128xf32>
    %6 = vector.broadcast %5 : vector<1x128xf32> to vector<8x128xf32>
    %c0_9 = arith.constant 0 : index
    %c0_10 = arith.constant 0 : index
    %7 = vector.load %arg8[%c0_9, %c0_10] : memref<1x128xf32, #tpu.memory_space<vmem>>, vector<1x128xf32>
    %8 = vector.shape_cast %7 : vector<1x128xf32> to vector<1x128xf32>
    %9 = vector.broadcast %8 : vector<1x128xf32> to vector<8x128xf32>
    %cst = arith.constant 0.000000e+00 : f32
    %10 = vector.broadcast %cst : f32 to vector<8x32xf32>
    %c0_i32 = arith.constant 0 : i32
    %11 = arith.index_cast %c0_i32 : i32 to index
    %c0_11 = arith.constant 0 : index
    %c0_12 = arith.constant 0 : index
    %12 = vector.load %arg2[%11, %c0_11, %c0_12] : memref<6x8x32xf32, #tpu.memory_space<vmem>>, vector<1x8x32xf32>
    %13 = vector.shape_cast %12 : vector<1x8x32xf32> to vector<8x32xf32>
    %cst_13 = arith.constant dense<0.000000e+00> : vector<8x128xf32>
    %14 = tpu.matmul %13, %0, %cst_13 {dimension_numbers = #tpu.dot_dimension_numbers<[1], [0], [0], [1], [0, 0, 1, 1], [], []>} : vector<8x32xf32>, vector<32x128xf32>, vector<8x128xf32> -> vector<8x128xf32>
    %cst_14 = arith.constant dense<0.000000e+00> : vector<8x128xf32>
    %15 = tpu.matmul %10, %1, %cst_14 {dimension_numbers = #tpu.dot_dimension_numbers<[1], [0], [0], [1], [0, 0, 1, 1], [], []>} : vector<8x32xf32>, vector<32x128xf32>, vector<8x128xf32> -> vector<8x128xf32>
    %16 = arith.addf %14, %15 : vector<8x128xf32>
    %17 = arith.addf %16, %6 : vector<8x128xf32>
    %18 = vector.extract_strided_slice %17 {offsets = [0, 0], sizes = [8, 32], strides = [1, 1]} : vector<8x128xf32> to vector<8x32xf32>
    %19 = arith.negf %18 : vector<8x32xf32>
    %20 = math.exp %19 : vector<8x32xf32>
    %cst_15 = arith.constant 1.000000e+00 : f32
    %21 = vector.broadcast %cst_15 : f32 to vector<8x32xf32>
    %22 = arith.addf %21, %20 : vector<8x32xf32>
    %23 = arith.divf %21, %22 : vector<8x32xf32>
    %24 = vector.extract_strided_slice %17 {offsets = [0, 32], sizes = [8, 32], strides = [1, 1]} : vector<8x128xf32> to vector<8x32xf32>
    %25 = arith.negf %24 : vector<8x32xf32>
    %26 = math.exp %25 : vector<8x32xf32>
    %cst_16 = arith.constant 1.000000e+00 : f32
    %27 = vector.broadcast %cst_16 : f32 to vector<8x32xf32>
    %28 = arith.addf %27, %26 : vector<8x32xf32>
    %29 = arith.divf %27, %28 : vector<8x32xf32>
    %30 = vector.extract_strided_slice %17 {offsets = [0, 64], sizes = [8, 32], strides = [1, 1]} : vector<8x128xf32> to vector<8x32xf32>
    %31 = math.tanh %30 : vector<8x32xf32>
    %32 = vector.extract_strided_slice %17 {offsets = [0, 96], sizes = [8, 32], strides = [1, 1]} : vector<8x128xf32> to vector<8x32xf32>
    %33 = arith.negf %32 : vector<8x32xf32>
    %34 = math.exp %33 : vector<8x32xf32>
    %cst_17 = arith.constant 1.000000e+00 : f32
    %35 = vector.broadcast %cst_17 : f32 to vector<8x32xf32>
    %36 = arith.addf %35, %34 : vector<8x32xf32>
    %37 = arith.divf %35, %36 : vector<8x32xf32>
    %38 = arith.mulf %29, %10 : vector<8x32xf32>
    %39 = arith.mulf %23, %31 : vector<8x32xf32>
    %40 = arith.addf %38, %39 : vector<8x32xf32>
    %41 = math.tanh %40 : vector<8x32xf32>
    %42 = arith.mulf %37, %41 : vector<8x32xf32>
    %cst_18 = arith.constant dense<0.000000e+00> : vector<8x128xf32>
    %43 = tpu.matmul %42, %2, %cst_18 {dimension_numbers = #tpu.dot_dimension_numbers<[1], [0], [0], [1], [0, 0, 1, 1], [], []>} : vector<8x32xf32>, vector<32x128xf32>, vector<8x128xf32> -> vector<8x128xf32>
    %cst_19 = arith.constant dense<0.000000e+00> : vector<8x128xf32>
    %44 = tpu.matmul %10, %3, %cst_19 {dimension_numbers = #tpu.dot_dimension_numbers<[1], [0], [0], [1], [0, 0, 1, 1], [], []>} : vector<8x32xf32>, vector<32x128xf32>, vector<8x128xf32> -> vector<8x128xf32>
    %45 = arith.addf %43, %44 : vector<8x128xf32>
    %46 = arith.addf %45, %9 : vector<8x128xf32>
    %47 = vector.extract_strided_slice %46 {offsets = [0, 0], sizes = [8, 32], strides = [1, 1]} : vector<8x128xf32> to vector<8x32xf32>
    %48 = arith.negf %47 : vector<8x32xf32>
    %49 = math.exp %48 : vector<8x32xf32>
    %cst_20 = arith.constant 1.000000e+00 : f32
    %50 = vector.broadcast %cst_20 : f32 to vector<8x32xf32>
    %51 = arith.addf %50, %49 : vector<8x32xf32>
    %52 = arith.divf %50, %51 : vector<8x32xf32>
    %53 = vector.extract_strided_slice %46 {offsets = [0, 32], sizes = [8, 32], strides = [1, 1]} : vector<8x128xf32> to vector<8x32xf32>
    %54 = arith.negf %53 : vector<8x32xf32>
    %55 = math.exp %54 : vector<8x32xf32>
    %cst_21 = arith.constant 1.000000e+00 : f32
    %56 = vector.broadcast %cst_21 : f32 to vector<8x32xf32>
    %57 = arith.addf %56, %55 : vector<8x32xf32>
    %58 = arith.divf %56, %57 : vector<8x32xf32>
    %59 = vector.extract_strided_slice %46 {offsets = [0, 64], sizes = [8, 32], strides = [1, 1]} : vector<8x128xf32> to vector<8x32xf32>
    %60 = math.tanh %59 : vector<8x32xf32>
    %61 = vector.extract_strided_slice %46 {offsets = [0, 96], sizes = [8, 32], strides = [1, 1]} : vector<8x128xf32> to vector<8x32xf32>
    %62 = arith.negf %61 : vector<8x32xf32>
    %63 = math.exp %62 : vector<8x32xf32>
    %cst_22 = arith.constant 1.000000e+00 : f32
    %64 = vector.broadcast %cst_22 : f32 to vector<8x32xf32>
    %65 = arith.addf %64, %63 : vector<8x32xf32>
    %66 = arith.divf %64, %65 : vector<8x32xf32>
    %67 = arith.mulf %58, %10 : vector<8x32xf32>
    %68 = arith.mulf %52, %60 : vector<8x32xf32>
    %69 = arith.addf %67, %68 : vector<8x32xf32>
    %70 = math.tanh %69 : vector<8x32xf32>
    %71 = arith.mulf %66, %70 : vector<8x32xf32>
    %c1_i32 = arith.constant 1 : i32
    %72 = arith.index_cast %c1_i32 : i32 to index
    %c0_23 = arith.constant 0 : index
    %c0_24 = arith.constant 0 : index
    %73 = vector.load %arg2[%72, %c0_23, %c0_24] : memref<6x8x32xf32, #tpu.memory_space<vmem>>, vector<1x8x32xf32>
    %74 = vector.shape_cast %73 : vector<1x8x32xf32> to vector<8x32xf32>
    %cst_25 = arith.constant dense<0.000000e+00> : vector<8x128xf32>
    %75 = tpu.matmul %74, %0, %cst_25 {dimension_numbers = #tpu.dot_dimension_numbers<[1], [0], [0], [1], [0, 0, 1, 1], [], []>} : vector<8x32xf32>, vector<32x128xf32>, vector<8x128xf32> -> vector<8x128xf32>
    %cst_26 = arith.constant dense<0.000000e+00> : vector<8x128xf32>
    %76 = tpu.matmul %42, %1, %cst_26 {dimension_numbers = #tpu.dot_dimension_numbers<[1], [0], [0], [1], [0, 0, 1, 1], [], []>} : vector<8x32xf32>, vector<32x128xf32>, vector<8x128xf32> -> vector<8x128xf32>
    %77 = arith.addf %75, %76 : vector<8x128xf32>
    %78 = arith.addf %77, %6 : vector<8x128xf32>
    %79 = vector.extract_strided_slice %78 {offsets = [0, 0], sizes = [8, 32], strides = [1, 1]} : vector<8x128xf32> to vector<8x32xf32>
    %80 = arith.negf %79 : vector<8x32xf32>
    %81 = math.exp %80 : vector<8x32xf32>
    %cst_27 = arith.constant 1.000000e+00 : f32
    %82 = vector.broadcast %cst_27 : f32 to vector<8x32xf32>
    %83 = arith.addf %82, %81 : vector<8x32xf32>
    %84 = arith.divf %82, %83 : vector<8x32xf32>
    %85 = vector.extract_strided_slice %78 {offsets = [0, 32], sizes = [8, 32], strides = [1, 1]} : vector<8x128xf32> to vector<8x32xf32>
    %86 = arith.negf %85 : vector<8x32xf32>
    %87 = math.exp %86 : vector<8x32xf32>
    %cst_28 = arith.constant 1.000000e+00 : f32
    %88 = vector.broadcast %cst_28 : f32 to vector<8x32xf32>
    %89 = arith.addf %88, %87 : vector<8x32xf32>
    %90 = arith.divf %88, %89 : vector<8x32xf32>
    %91 = vector.extract_strided_slice %78 {offsets = [0, 64], sizes = [8, 32], strides = [1, 1]} : vector<8x128xf32> to vector<8x32xf32>
    %92 = math.tanh %91 : vector<8x32xf32>
    %93 = vector.extract_strided_slice %78 {offsets = [0, 96], sizes = [8, 32], strides = [1, 1]} : vector<8x128xf32> to vector<8x32xf32>
    %94 = arith.negf %93 : vector<8x32xf32>
    %95 = math.exp %94 : vector<8x32xf32>
    %cst_29 = arith.constant 1.000000e+00 : f32
    %96 = vector.broadcast %cst_29 : f32 to vector<8x32xf32>
    %97 = arith.addf %96, %95 : vector<8x32xf32>
    %98 = arith.divf %96, %97 : vector<8x32xf32>
    %99 = arith.mulf %90, %40 : vector<8x32xf32>
    %100 = arith.mulf %84, %92 : vector<8x32xf32>
    %101 = arith.addf %99, %100 : vector<8x32xf32>
    %102 = math.tanh %101 : vector<8x32xf32>
    %103 = arith.mulf %98, %102 : vector<8x32xf32>
    %cst_30 = arith.constant dense<0.000000e+00> : vector<8x128xf32>
    %104 = tpu.matmul %103, %2, %cst_30 {dimension_numbers = #tpu.dot_dimension_numbers<[1], [0], [0], [1], [0, 0, 1, 1], [], []>} : vector<8x32xf32>, vector<32x128xf32>, vector<8x128xf32> -> vector<8x128xf32>
    %cst_31 = arith.constant dense<0.000000e+00> : vector<8x128xf32>
    %105 = tpu.matmul %71, %3, %cst_31 {dimension_numbers = #tpu.dot_dimension_numbers<[1], [0], [0], [1], [0, 0, 1, 1], [], []>} : vector<8x32xf32>, vector<32x128xf32>, vector<8x128xf32> -> vector<8x128xf32>
    %106 = arith.addf %104, %105 : vector<8x128xf32>
    %107 = arith.addf %106, %9 : vector<8x128xf32>
    %108 = vector.extract_strided_slice %107 {offsets = [0, 0], sizes = [8, 32], strides = [1, 1]} : vector<8x128xf32> to vector<8x32xf32>
    %109 = arith.negf %108 : vector<8x32xf32>
    %110 = math.exp %109 : vector<8x32xf32>
    %cst_32 = arith.constant 1.000000e+00 : f32
    %111 = vector.broadcast %cst_32 : f32 to vector<8x32xf32>
    %112 = arith.addf %111, %110 : vector<8x32xf32>
    %113 = arith.divf %111, %112 : vector<8x32xf32>
    %114 = vector.extract_strided_slice %107 {offsets = [0, 32], sizes = [8, 32], strides = [1, 1]} : vector<8x128xf32> to vector<8x32xf32>
    %115 = arith.negf %114 : vector<8x32xf32>
    %116 = math.exp %115 : vector<8x32xf32>
    %cst_33 = arith.constant 1.000000e+00 : f32
    %117 = vector.broadcast %cst_33 : f32 to vector<8x32xf32>
    %118 = arith.addf %117, %116 : vector<8x32xf32>
    %119 = arith.divf %117, %118 : vector<8x32xf32>
    %120 = vector.extract_strided_slice %107 {offsets = [0, 64], sizes = [8, 32], strides = [1, 1]} : vector<8x128xf32> to vector<8x32xf32>
    %121 = math.tanh %120 : vector<8x32xf32>
    %122 = vector.extract_strided_slice %107 {offsets = [0, 96], sizes = [8, 32], strides = [1, 1]} : vector<8x128xf32> to vector<8x32xf32>
    %123 = arith.negf %122 : vector<8x32xf32>
    %124 = math.exp %123 : vector<8x32xf32>
    %cst_34 = arith.constant 1.000000e+00 : f32
    %125 = vector.broadcast %cst_34 : f32 to vector<8x32xf32>
    %126 = arith.addf %125, %124 : vector<8x32xf32>
    %127 = arith.divf %125, %126 : vector<8x32xf32>
    %128 = arith.mulf %119, %69 : vector<8x32xf32>
    %129 = arith.mulf %113, %121 : vector<8x32xf32>
    %130 = arith.addf %128, %129 : vector<8x32xf32>
    %131 = math.tanh %130 : vector<8x32xf32>
    %132 = arith.mulf %127, %131 : vector<8x32xf32>
    %c2_i32 = arith.constant 2 : i32
    %133 = arith.index_cast %c2_i32 : i32 to index
    %c0_35 = arith.constant 0 : index
    %c0_36 = arith.constant 0 : index
    %134 = vector.load %arg2[%133, %c0_35, %c0_36] : memref<6x8x32xf32, #tpu.memory_space<vmem>>, vector<1x8x32xf32>
    %135 = vector.shape_cast %134 : vector<1x8x32xf32> to vector<8x32xf32>
    %cst_37 = arith.constant dense<0.000000e+00> : vector<8x128xf32>
    %136 = tpu.matmul %135, %0, %cst_37 {dimension_numbers = #tpu.dot_dimension_numbers<[1], [0], [0], [1], [0, 0, 1, 1], [], []>} : vector<8x32xf32>, vector<32x128xf32>, vector<8x128xf32> -> vector<8x128xf32>
    %cst_38 = arith.constant dense<0.000000e+00> : vector<8x128xf32>
    %137 = tpu.matmul %103, %1, %cst_38 {dimension_numbers = #tpu.dot_dimension_numbers<[1], [0], [0], [1], [0, 0, 1, 1], [], []>} : vector<8x32xf32>, vector<32x128xf32>, vector<8x128xf32> -> vector<8x128xf32>
    %138 = arith.addf %136, %137 : vector<8x128xf32>
    %139 = arith.addf %138, %6 : vector<8x128xf32>
    %140 = vector.extract_strided_slice %139 {offsets = [0, 0], sizes = [8, 32], strides = [1, 1]} : vector<8x128xf32> to vector<8x32xf32>
    %141 = arith.negf %140 : vector<8x32xf32>
    %142 = math.exp %141 : vector<8x32xf32>
    %cst_39 = arith.constant 1.000000e+00 : f32
    %143 = vector.broadcast %cst_39 : f32 to vector<8x32xf32>
    %144 = arith.addf %143, %142 : vector<8x32xf32>
    %145 = arith.divf %143, %144 : vector<8x32xf32>
    %146 = vector.extract_strided_slice %139 {offsets = [0, 32], sizes = [8, 32], strides = [1, 1]} : vector<8x128xf32> to vector<8x32xf32>
    %147 = arith.negf %146 : vector<8x32xf32>
    %148 = math.exp %147 : vector<8x32xf32>
    %cst_40 = arith.constant 1.000000e+00 : f32
    %149 = vector.broadcast %cst_40 : f32 to vector<8x32xf32>
    %150 = arith.addf %149, %148 : vector<8x32xf32>
    %151 = arith.divf %149, %150 : vector<8x32xf32>
    %152 = vector.extract_strided_slice %139 {offsets = [0, 64], sizes = [8, 32], strides = [1, 1]} : vector<8x128xf32> to vector<8x32xf32>
    %153 = math.tanh %152 : vector<8x32xf32>
    %154 = vector.extract_strided_slice %139 {offsets = [0, 96], sizes = [8, 32], strides = [1, 1]} : vector<8x128xf32> to vector<8x32xf32>
    %155 = arith.negf %154 : vector<8x32xf32>
    %156 = math.exp %155 : vector<8x32xf32>
    %cst_41 = arith.constant 1.000000e+00 : f32
    %157 = vector.broadcast %cst_41 : f32 to vector<8x32xf32>
    %158 = arith.addf %157, %156 : vector<8x32xf32>
    %159 = arith.divf %157, %158 : vector<8x32xf32>
    %160 = arith.mulf %151, %101 : vector<8x32xf32>
    %161 = arith.mulf %145, %153 : vector<8x32xf32>
    %162 = arith.addf %160, %161 : vector<8x32xf32>
    %163 = math.tanh %162 : vector<8x32xf32>
    %164 = arith.mulf %159, %163 : vector<8x32xf32>
    %cst_42 = arith.constant dense<0.000000e+00> : vector<8x128xf32>
    %165 = tpu.matmul %164, %2, %cst_42 {dimension_numbers = #tpu.dot_dimension_numbers<[1], [0], [0], [1], [0, 0, 1, 1], [], []>} : vector<8x32xf32>, vector<32x128xf32>, vector<8x128xf32> -> vector<8x128xf32>
    %cst_43 = arith.constant dense<0.000000e+00> : vector<8x128xf32>
    %166 = tpu.matmul %132, %3, %cst_43 {dimension_numbers = #tpu.dot_dimension_numbers<[1], [0], [0], [1], [0, 0, 1, 1], [], []>} : vector<8x32xf32>, vector<32x128xf32>, vector<8x128xf32> -> vector<8x128xf32>
    %167 = arith.addf %165, %166 : vector<8x128xf32>
    %168 = arith.addf %167, %9 : vector<8x128xf32>
    %169 = vector.extract_strided_slice %168 {offsets = [0, 0], sizes = [8, 32], strides = [1, 1]} : vector<8x128xf32> to vector<8x32xf32>
    %170 = arith.negf %169 : vector<8x32xf32>
    %171 = math.exp %170 : vector<8x32xf32>
    %cst_44 = arith.constant 1.000000e+00 : f32
    %172 = vector.broadcast %cst_44 : f32 to vector<8x32xf32>
    %173 = arith.addf %172, %171 : vector<8x32xf32>
    %174 = arith.divf %172, %173 : vector<8x32xf32>
    %175 = vector.extract_strided_slice %168 {offsets = [0, 32], sizes = [8, 32], strides = [1, 1]} : vector<8x128xf32> to vector<8x32xf32>
    %176 = arith.negf %175 : vector<8x32xf32>
    %177 = math.exp %176 : vector<8x32xf32>
    %cst_45 = arith.constant 1.000000e+00 : f32
    %178 = vector.broadcast %cst_45 : f32 to vector<8x32xf32>
    %179 = arith.addf %178, %177 : vector<8x32xf32>
    %180 = arith.divf %178, %179 : vector<8x32xf32>
    %181 = vector.extract_strided_slice %168 {offsets = [0, 64], sizes = [8, 32], strides = [1, 1]} : vector<8x128xf32> to vector<8x32xf32>
    %182 = math.tanh %181 : vector<8x32xf32>
    %183 = vector.extract_strided_slice %168 {offsets = [0, 96], sizes = [8, 32], strides = [1, 1]} : vector<8x128xf32> to vector<8x32xf32>
    %184 = arith.negf %183 : vector<8x32xf32>
    %185 = math.exp %184 : vector<8x32xf32>
    %cst_46 = arith.constant 1.000000e+00 : f32
    %186 = vector.broadcast %cst_46 : f32 to vector<8x32xf32>
    %187 = arith.addf %186, %185 : vector<8x32xf32>
    %188 = arith.divf %186, %187 : vector<8x32xf32>
    %189 = arith.mulf %180, %130 : vector<8x32xf32>
    %190 = arith.mulf %174, %182 : vector<8x32xf32>
    %191 = arith.addf %189, %190 : vector<8x32xf32>
    %192 = math.tanh %191 : vector<8x32xf32>
    %193 = arith.mulf %188, %192 : vector<8x32xf32>
    %c3_i32 = arith.constant 3 : i32
    %194 = arith.index_cast %c3_i32 : i32 to index
    %c0_47 = arith.constant 0 : index
    %c0_48 = arith.constant 0 : index
    %195 = vector.load %arg2[%194, %c0_47, %c0_48] : memref<6x8x32xf32, #tpu.memory_space<vmem>>, vector<1x8x32xf32>
    %196 = vector.shape_cast %195 : vector<1x8x32xf32> to vector<8x32xf32>
    %cst_49 = arith.constant dense<0.000000e+00> : vector<8x128xf32>
    %197 = tpu.matmul %196, %0, %cst_49 {dimension_numbers = #tpu.dot_dimension_numbers<[1], [0], [0], [1], [0, 0, 1, 1], [], []>} : vector<8x32xf32>, vector<32x128xf32>, vector<8x128xf32> -> vector<8x128xf32>
    %cst_50 = arith.constant dense<0.000000e+00> : vector<8x128xf32>
    %198 = tpu.matmul %164, %1, %cst_50 {dimension_numbers = #tpu.dot_dimension_numbers<[1], [0], [0], [1], [0, 0, 1, 1], [], []>} : vector<8x32xf32>, vector<32x128xf32>, vector<8x128xf32> -> vector<8x128xf32>
    %199 = arith.addf %197, %198 : vector<8x128xf32>
    %200 = arith.addf %199, %6 : vector<8x128xf32>
    %201 = vector.extract_strided_slice %200 {offsets = [0, 0], sizes = [8, 32], strides = [1, 1]} : vector<8x128xf32> to vector<8x32xf32>
    %202 = arith.negf %201 : vector<8x32xf32>
    %203 = math.exp %202 : vector<8x32xf32>
    %cst_51 = arith.constant 1.000000e+00 : f32
    %204 = vector.broadcast %cst_51 : f32 to vector<8x32xf32>
    %205 = arith.addf %204, %203 : vector<8x32xf32>
    %206 = arith.divf %204, %205 : vector<8x32xf32>
    %207 = vector.extract_strided_slice %200 {offsets = [0, 32], sizes = [8, 32], strides = [1, 1]} : vector<8x128xf32> to vector<8x32xf32>
    %208 = arith.negf %207 : vector<8x32xf32>
    %209 = math.exp %208 : vector<8x32xf32>
    %cst_52 = arith.constant 1.000000e+00 : f32
    %210 = vector.broadcast %cst_52 : f32 to vector<8x32xf32>
    %211 = arith.addf %210, %209 : vector<8x32xf32>
    %212 = arith.divf %210, %211 : vector<8x32xf32>
    %213 = vector.extract_strided_slice %200 {offsets = [0, 64], sizes = [8, 32], strides = [1, 1]} : vector<8x128xf32> to vector<8x32xf32>
    %214 = math.tanh %213 : vector<8x32xf32>
    %215 = vector.extract_strided_slice %200 {offsets = [0, 96], sizes = [8, 32], strides = [1, 1]} : vector<8x128xf32> to vector<8x32xf32>
    %216 = arith.negf %215 : vector<8x32xf32>
    %217 = math.exp %216 : vector<8x32xf32>
    %cst_53 = arith.constant 1.000000e+00 : f32
    %218 = vector.broadcast %cst_53 : f32 to vector<8x32xf32>
    %219 = arith.addf %218, %217 : vector<8x32xf32>
    %220 = arith.divf %218, %219 : vector<8x32xf32>
    %221 = arith.mulf %212, %162 : vector<8x32xf32>
    %222 = arith.mulf %206, %214 : vector<8x32xf32>
    %223 = arith.addf %221, %222 : vector<8x32xf32>
    %224 = math.tanh %223 : vector<8x32xf32>
    %225 = arith.mulf %220, %224 : vector<8x32xf32>
    %cst_54 = arith.constant dense<0.000000e+00> : vector<8x128xf32>
    %226 = tpu.matmul %225, %2, %cst_54 {dimension_numbers = #tpu.dot_dimension_numbers<[1], [0], [0], [1], [0, 0, 1, 1], [], []>} : vector<8x32xf32>, vector<32x128xf32>, vector<8x128xf32> -> vector<8x128xf32>
    %cst_55 = arith.constant dense<0.000000e+00> : vector<8x128xf32>
    %227 = tpu.matmul %193, %3, %cst_55 {dimension_numbers = #tpu.dot_dimension_numbers<[1], [0], [0], [1], [0, 0, 1, 1], [], []>} : vector<8x32xf32>, vector<32x128xf32>, vector<8x128xf32> -> vector<8x128xf32>
    %228 = arith.addf %226, %227 : vector<8x128xf32>
    %229 = arith.addf %228, %9 : vector<8x128xf32>
    %230 = vector.extract_strided_slice %229 {offsets = [0, 0], sizes = [8, 32], strides = [1, 1]} : vector<8x128xf32> to vector<8x32xf32>
    %231 = arith.negf %230 : vector<8x32xf32>
    %232 = math.exp %231 : vector<8x32xf32>
    %cst_56 = arith.constant 1.000000e+00 : f32
    %233 = vector.broadcast %cst_56 : f32 to vector<8x32xf32>
    %234 = arith.addf %233, %232 : vector<8x32xf32>
    %235 = arith.divf %233, %234 : vector<8x32xf32>
    %236 = vector.extract_strided_slice %229 {offsets = [0, 32], sizes = [8, 32], strides = [1, 1]} : vector<8x128xf32> to vector<8x32xf32>
    %237 = arith.negf %236 : vector<8x32xf32>
    %238 = math.exp %237 : vector<8x32xf32>
    %cst_57 = arith.constant 1.000000e+00 : f32
    %239 = vector.broadcast %cst_57 : f32 to vector<8x32xf32>
    %240 = arith.addf %239, %238 : vector<8x32xf32>
    %241 = arith.divf %239, %240 : vector<8x32xf32>
    %242 = vector.extract_strided_slice %229 {offsets = [0, 64], sizes = [8, 32], strides = [1, 1]} : vector<8x128xf32> to vector<8x32xf32>
    %243 = math.tanh %242 : vector<8x32xf32>
    %244 = vector.extract_strided_slice %229 {offsets = [0, 96], sizes = [8, 32], strides = [1, 1]} : vector<8x128xf32> to vector<8x32xf32>
    %245 = arith.negf %244 : vector<8x32xf32>
    %246 = math.exp %245 : vector<8x32xf32>
    %cst_58 = arith.constant 1.000000e+00 : f32
    %247 = vector.broadcast %cst_58 : f32 to vector<8x32xf32>
    %248 = arith.addf %247, %246 : vector<8x32xf32>
    %249 = arith.divf %247, %248 : vector<8x32xf32>
    %250 = arith.mulf %241, %191 : vector<8x32xf32>
    %251 = arith.mulf %235, %243 : vector<8x32xf32>
    %252 = arith.addf %250, %251 : vector<8x32xf32>
    %253 = math.tanh %252 : vector<8x32xf32>
    %254 = arith.mulf %249, %253 : vector<8x32xf32>
    %c4_i32 = arith.constant 4 : i32
    %255 = arith.index_cast %c4_i32 : i32 to index
    %c0_59 = arith.constant 0 : index
    %c0_60 = arith.constant 0 : index
    %256 = vector.load %arg2[%255, %c0_59, %c0_60] : memref<6x8x32xf32, #tpu.memory_space<vmem>>, vector<1x8x32xf32>
    %257 = vector.shape_cast %256 : vector<1x8x32xf32> to vector<8x32xf32>
    %cst_61 = arith.constant dense<0.000000e+00> : vector<8x128xf32>
    %258 = tpu.matmul %257, %0, %cst_61 {dimension_numbers = #tpu.dot_dimension_numbers<[1], [0], [0], [1], [0, 0, 1, 1], [], []>} : vector<8x32xf32>, vector<32x128xf32>, vector<8x128xf32> -> vector<8x128xf32>
    %cst_62 = arith.constant dense<0.000000e+00> : vector<8x128xf32>
    %259 = tpu.matmul %225, %1, %cst_62 {dimension_numbers = #tpu.dot_dimension_numbers<[1], [0], [0], [1], [0, 0, 1, 1], [], []>} : vector<8x32xf32>, vector<32x128xf32>, vector<8x128xf32> -> vector<8x128xf32>
    %260 = arith.addf %258, %259 : vector<8x128xf32>
    %261 = arith.addf %260, %6 : vector<8x128xf32>
    %262 = vector.extract_strided_slice %261 {offsets = [0, 0], sizes = [8, 32], strides = [1, 1]} : vector<8x128xf32> to vector<8x32xf32>
    %263 = arith.negf %262 : vector<8x32xf32>
    %264 = math.exp %263 : vector<8x32xf32>
    %cst_63 = arith.constant 1.000000e+00 : f32
    %265 = vector.broadcast %cst_63 : f32 to vector<8x32xf32>
    %266 = arith.addf %265, %264 : vector<8x32xf32>
    %267 = arith.divf %265, %266 : vector<8x32xf32>
    %268 = vector.extract_strided_slice %261 {offsets = [0, 32], sizes = [8, 32], strides = [1, 1]} : vector<8x128xf32> to vector<8x32xf32>
    %269 = arith.negf %268 : vector<8x32xf32>
    %270 = math.exp %269 : vector<8x32xf32>
    %cst_64 = arith.constant 1.000000e+00 : f32
    %271 = vector.broadcast %cst_64 : f32 to vector<8x32xf32>
    %272 = arith.addf %271, %270 : vector<8x32xf32>
    %273 = arith.divf %271, %272 : vector<8x32xf32>
    %274 = vector.extract_strided_slice %261 {offsets = [0, 64], sizes = [8, 32], strides = [1, 1]} : vector<8x128xf32> to vector<8x32xf32>
    %275 = math.tanh %274 : vector<8x32xf32>
    %276 = vector.extract_strided_slice %261 {offsets = [0, 96], sizes = [8, 32], strides = [1, 1]} : vector<8x128xf32> to vector<8x32xf32>
    %277 = arith.negf %276 : vector<8x32xf32>
    %278 = math.exp %277 : vector<8x32xf32>
    %cst_65 = arith.constant 1.000000e+00 : f32
    %279 = vector.broadcast %cst_65 : f32 to vector<8x32xf32>
    %280 = arith.addf %279, %278 : vector<8x32xf32>
    %281 = arith.divf %279, %280 : vector<8x32xf32>
    %282 = arith.mulf %273, %223 : vector<8x32xf32>
    %283 = arith.mulf %267, %275 : vector<8x32xf32>
    %284 = arith.addf %282, %283 : vector<8x32xf32>
    %285 = math.tanh %284 : vector<8x32xf32>
    %286 = arith.mulf %281, %285 : vector<8x32xf32>
    %cst_66 = arith.constant dense<0.000000e+00> : vector<8x128xf32>
    %287 = tpu.matmul %286, %2, %cst_66 {dimension_numbers = #tpu.dot_dimension_numbers<[1], [0], [0], [1], [0, 0, 1, 1], [], []>} : vector<8x32xf32>, vector<32x128xf32>, vector<8x128xf32> -> vector<8x128xf32>
    %cst_67 = arith.constant dense<0.000000e+00> : vector<8x128xf32>
    %288 = tpu.matmul %254, %3, %cst_67 {dimension_numbers = #tpu.dot_dimension_numbers<[1], [0], [0], [1], [0, 0, 1, 1], [], []>} : vector<8x32xf32>, vector<32x128xf32>, vector<8x128xf32> -> vector<8x128xf32>
    %289 = arith.addf %287, %288 : vector<8x128xf32>
    %290 = arith.addf %289, %9 : vector<8x128xf32>
    %291 = vector.extract_strided_slice %290 {offsets = [0, 0], sizes = [8, 32], strides = [1, 1]} : vector<8x128xf32> to vector<8x32xf32>
    %292 = arith.negf %291 : vector<8x32xf32>
    %293 = math.exp %292 : vector<8x32xf32>
    %cst_68 = arith.constant 1.000000e+00 : f32
    %294 = vector.broadcast %cst_68 : f32 to vector<8x32xf32>
    %295 = arith.addf %294, %293 : vector<8x32xf32>
    %296 = arith.divf %294, %295 : vector<8x32xf32>
    %297 = vector.extract_strided_slice %290 {offsets = [0, 32], sizes = [8, 32], strides = [1, 1]} : vector<8x128xf32> to vector<8x32xf32>
    %298 = arith.negf %297 : vector<8x32xf32>
    %299 = math.exp %298 : vector<8x32xf32>
    %cst_69 = arith.constant 1.000000e+00 : f32
    %300 = vector.broadcast %cst_69 : f32 to vector<8x32xf32>
    %301 = arith.addf %300, %299 : vector<8x32xf32>
    %302 = arith.divf %300, %301 : vector<8x32xf32>
    %303 = vector.extract_strided_slice %290 {offsets = [0, 64], sizes = [8, 32], strides = [1, 1]} : vector<8x128xf32> to vector<8x32xf32>
    %304 = math.tanh %303 : vector<8x32xf32>
    %305 = vector.extract_strided_slice %290 {offsets = [0, 96], sizes = [8, 32], strides = [1, 1]} : vector<8x128xf32> to vector<8x32xf32>
    %306 = arith.negf %305 : vector<8x32xf32>
    %307 = math.exp %306 : vector<8x32xf32>
    %cst_70 = arith.constant 1.000000e+00 : f32
    %308 = vector.broadcast %cst_70 : f32 to vector<8x32xf32>
    %309 = arith.addf %308, %307 : vector<8x32xf32>
    %310 = arith.divf %308, %309 : vector<8x32xf32>
    %311 = arith.mulf %302, %252 : vector<8x32xf32>
    %312 = arith.mulf %296, %304 : vector<8x32xf32>
    %313 = arith.addf %311, %312 : vector<8x32xf32>
    %314 = math.tanh %313 : vector<8x32xf32>
    %315 = arith.mulf %310, %314 : vector<8x32xf32>
    %c5_i32 = arith.constant 5 : i32
    %316 = arith.index_cast %c5_i32 : i32 to index
    %c0_71 = arith.constant 0 : index
    %c0_72 = arith.constant 0 : index
    %317 = vector.load %arg2[%316, %c0_71, %c0_72] : memref<6x8x32xf32, #tpu.memory_space<vmem>>, vector<1x8x32xf32>
    %318 = vector.shape_cast %317 : vector<1x8x32xf32> to vector<8x32xf32>
    %cst_73 = arith.constant dense<0.000000e+00> : vector<8x128xf32>
    %319 = tpu.matmul %318, %0, %cst_73 {dimension_numbers = #tpu.dot_dimension_numbers<[1], [0], [0], [1], [0, 0, 1, 1], [], []>} : vector<8x32xf32>, vector<32x128xf32>, vector<8x128xf32> -> vector<8x128xf32>
    %cst_74 = arith.constant dense<0.000000e+00> : vector<8x128xf32>
    %320 = tpu.matmul %286, %1, %cst_74 {dimension_numbers = #tpu.dot_dimension_numbers<[1], [0], [0], [1], [0, 0, 1, 1], [], []>} : vector<8x32xf32>, vector<32x128xf32>, vector<8x128xf32> -> vector<8x128xf32>
    %321 = arith.addf %319, %320 : vector<8x128xf32>
    %322 = arith.addf %321, %6 : vector<8x128xf32>
    %323 = vector.extract_strided_slice %322 {offsets = [0, 0], sizes = [8, 32], strides = [1, 1]} : vector<8x128xf32> to vector<8x32xf32>
    %324 = arith.negf %323 : vector<8x32xf32>
    %325 = math.exp %324 : vector<8x32xf32>
    %cst_75 = arith.constant 1.000000e+00 : f32
    %326 = vector.broadcast %cst_75 : f32 to vector<8x32xf32>
    %327 = arith.addf %326, %325 : vector<8x32xf32>
    %328 = arith.divf %326, %327 : vector<8x32xf32>
    %329 = vector.extract_strided_slice %322 {offsets = [0, 32], sizes = [8, 32], strides = [1, 1]} : vector<8x128xf32> to vector<8x32xf32>
    %330 = arith.negf %329 : vector<8x32xf32>
    %331 = math.exp %330 : vector<8x32xf32>
    %cst_76 = arith.constant 1.000000e+00 : f32
    %332 = vector.broadcast %cst_76 : f32 to vector<8x32xf32>
    %333 = arith.addf %332, %331 : vector<8x32xf32>
    %334 = arith.divf %332, %333 : vector<8x32xf32>
    %335 = vector.extract_strided_slice %322 {offsets = [0, 64], sizes = [8, 32], strides = [1, 1]} : vector<8x128xf32> to vector<8x32xf32>
    %336 = math.tanh %335 : vector<8x32xf32>
    %337 = vector.extract_strided_slice %322 {offsets = [0, 96], sizes = [8, 32], strides = [1, 1]} : vector<8x128xf32> to vector<8x32xf32>
    %338 = arith.negf %337 : vector<8x32xf32>
    %339 = math.exp %338 : vector<8x32xf32>
    %cst_77 = arith.constant 1.000000e+00 : f32
    %340 = vector.broadcast %cst_77 : f32 to vector<8x32xf32>
    %341 = arith.addf %340, %339 : vector<8x32xf32>
    %342 = arith.divf %340, %341 : vector<8x32xf32>
    %343 = arith.mulf %334, %284 : vector<8x32xf32>
    %344 = arith.mulf %328, %336 : vector<8x32xf32>
    %345 = arith.addf %343, %344 : vector<8x32xf32>
    %346 = math.tanh %345 : vector<8x32xf32>
    %347 = arith.mulf %342, %346 : vector<8x32xf32>
    %cst_78 = arith.constant dense<0.000000e+00> : vector<8x128xf32>
    %348 = tpu.matmul %347, %2, %cst_78 {dimension_numbers = #tpu.dot_dimension_numbers<[1], [0], [0], [1], [0, 0, 1, 1], [], []>} : vector<8x32xf32>, vector<32x128xf32>, vector<8x128xf32> -> vector<8x128xf32>
    %cst_79 = arith.constant dense<0.000000e+00> : vector<8x128xf32>
    %349 = tpu.matmul %315, %3, %cst_79 {dimension_numbers = #tpu.dot_dimension_numbers<[1], [0], [0], [1], [0, 0, 1, 1], [], []>} : vector<8x32xf32>, vector<32x128xf32>, vector<8x128xf32> -> vector<8x128xf32>
    %350 = arith.addf %348, %349 : vector<8x128xf32>
    %351 = arith.addf %350, %9 : vector<8x128xf32>
    %352 = vector.extract_strided_slice %351 {offsets = [0, 0], sizes = [8, 32], strides = [1, 1]} : vector<8x128xf32> to vector<8x32xf32>
    %353 = arith.negf %352 : vector<8x32xf32>
    %354 = math.exp %353 : vector<8x32xf32>
    %cst_80 = arith.constant 1.000000e+00 : f32
    %355 = vector.broadcast %cst_80 : f32 to vector<8x32xf32>
    %356 = arith.addf %355, %354 : vector<8x32xf32>
    %357 = arith.divf %355, %356 : vector<8x32xf32>
    %358 = vector.extract_strided_slice %351 {offsets = [0, 32], sizes = [8, 32], strides = [1, 1]} : vector<8x128xf32> to vector<8x32xf32>
    %359 = arith.negf %358 : vector<8x32xf32>
    %360 = math.exp %359 : vector<8x32xf32>
    %cst_81 = arith.constant 1.000000e+00 : f32
    %361 = vector.broadcast %cst_81 : f32 to vector<8x32xf32>
    %362 = arith.addf %361, %360 : vector<8x32xf32>
    %363 = arith.divf %361, %362 : vector<8x32xf32>
    %364 = vector.extract_strided_slice %351 {offsets = [0, 64], sizes = [8, 32], strides = [1, 1]} : vector<8x128xf32> to vector<8x32xf32>
    %365 = math.tanh %364 : vector<8x32xf32>
    %366 = vector.extract_strided_slice %351 {offsets = [0, 96], sizes = [8, 32], strides = [1, 1]} : vector<8x128xf32> to vector<8x32xf32>
    %367 = arith.negf %366 : vector<8x32xf32>
    %368 = math.exp %367 : vector<8x32xf32>
    %cst_82 = arith.constant 1.000000e+00 : f32
    %369 = vector.broadcast %cst_82 : f32 to vector<8x32xf32>
    %370 = arith.addf %369, %368 : vector<8x32xf32>
    %371 = arith.divf %369, %370 : vector<8x32xf32>
    %372 = arith.mulf %363, %313 : vector<8x32xf32>
    %373 = arith.mulf %357, %365 : vector<8x32xf32>
    %374 = arith.addf %372, %373 : vector<8x32xf32>
    %375 = math.tanh %374 : vector<8x32xf32>
    %376 = arith.mulf %371, %375 : vector<8x32xf32>
    %c6_i32 = arith.constant 6 : i32
    %c0_83 = arith.constant 0 : index
    %c0_84 = arith.constant 0 : index
    %c0_85 = arith.constant 0 : index
    %377 = vector.load %arg17[%c0_83, %c0_84, %c0_85] : memref<2x8x32xf32, #tpu.memory_space<vmem>>, vector<1x8x32xf32>
    %378 = vector.shape_cast %377 : vector<1x8x32xf32> to vector<8x32xf32>
    %379 = vector.shape_cast %347 : vector<8x32xf32> to vector<1x8x32xf32>
    tpu.vector_store %arg17[%c0_83, %c0_84, %c0_85], %379 {strides = array<i32>} : memref<2x8x32xf32, #tpu.memory_space<vmem>>, vector<1x8x32xf32>,
    %c1 = arith.constant 1 : index
    %c0_86 = arith.constant 0 : index
    %c0_87 = arith.constant 0 : index
    %380 = vector.load %arg17[%c1, %c0_86, %c0_87] : memref<2x8x32xf32, #tpu.memory_space<vmem>>, vector<1x8x32xf32>
    %381 = vector.shape_cast %380 : vector<1x8x32xf32> to vector<8x32xf32>
    %382 = vector.shape_cast %376 : vector<8x32xf32> to vector<1x8x32xf32>
    tpu.vector_store %arg17[%c1, %c0_86, %c0_87], %382 {strides = array<i32>} : memref<2x8x32xf32, #tpu.memory_space<vmem>>, vector<1x8x32xf32>,
    %c0_88 = arith.constant 0 : index
    %c0_89 = arith.constant 0 : index
    %c0_90 = arith.constant 0 : index
    %383 = vector.load %arg18[%c0_88, %c0_89, %c0_90] : memref<2x8x32xf32, #tpu.memory_space<vmem>>, vector<1x8x32xf32>
    %384 = vector.shape_cast %383 : vector<1x8x32xf32> to vector<8x32xf32>
    %385 = vector.shape_cast %345 : vector<8x32xf32> to vector<1x8x32xf32>
    tpu.vector_store %arg18[%c0_88, %c0_89, %c0_90], %385 {strides = array<i32>} : memref<2x8x32xf32, #tpu.memory_space<vmem>>, vector<1x8x32xf32>,
    %c1_91 = arith.constant 1 : index
    %c0_92 = arith.constant 0 : index
    %c0_93 = arith.constant 0 : index
    %386 = vector.load %arg18[%c1_91, %c0_92, %c0_93] : memref<2x8x32xf32, #tpu.memory_space<vmem>>, vector<1x8x32xf32>
    %387 = vector.shape_cast %386 : vector<1x8x32xf32> to vector<8x32xf32>
    %388 = vector.shape_cast %374 : vector<8x32xf32> to vector<1x8x32xf32>
    tpu.vector_store %arg18[%c1_91, %c0_92, %c0_93], %388 {strides = array<i32>} : memref<2x8x32xf32, #tpu.memory_space<vmem>>, vector<1x8x32xf32>,
    %c0_94 = arith.constant 0 : index
    %c0_95 = arith.constant 0 : index
    %389 = vector.load %arg10[%c0_94, %c0_95] : memref<128x32xf32, #tpu.memory_space<vmem>>, vector<128x32xf32>
    %c0_96 = arith.constant 0 : index
    %c0_97 = arith.constant 0 : index
    %390 = vector.load %arg11[%c0_96, %c0_97] : memref<32x128xf32, #tpu.memory_space<vmem>>, vector<32x128xf32>
    %c0_98 = arith.constant 0 : index
    %c0_99 = arith.constant 0 : index
    %391 = vector.load %arg13[%c0_98, %c0_99] : memref<32x128xf32, #tpu.memory_space<vmem>>, vector<32x128xf32>
    %c0_100 = arith.constant 0 : index
    %c0_101 = arith.constant 0 : index
    %392 = vector.load %arg15[%c0_100, %c0_101] : memref<32x128xf32, #tpu.memory_space<vmem>>, vector<32x128xf32>
    %c0_102 = arith.constant 0 : index
    %c0_103 = arith.constant 0 : index
    %393 = vector.load %arg12[%c0_102, %c0_103] : memref<1x128xf32, #tpu.memory_space<vmem>>, vector<1x128xf32>
    %394 = vector.shape_cast %393 : vector<1x128xf32> to vector<1x128xf32>
    %395 = vector.broadcast %394 : vector<1x128xf32> to vector<8x128xf32>
    %c0_104 = arith.constant 0 : index
    %c0_105 = arith.constant 0 : index
    %396 = vector.load %arg14[%c0_104, %c0_105] : memref<1x128xf32, #tpu.memory_space<vmem>>, vector<1x128xf32>
    %397 = vector.shape_cast %396 : vector<1x128xf32> to vector<1x128xf32>
    %398 = vector.broadcast %397 : vector<1x128xf32> to vector<8x128xf32>
    %c0_106 = arith.constant 0 : index
    %c0_107 = arith.constant 0 : index
    %399 = vector.load %arg16[%c0_106, %c0_107] : memref<1x128xf32, #tpu.memory_space<vmem>>, vector<1x128xf32>
    %400 = vector.shape_cast %399 : vector<1x128xf32> to vector<1x128xf32>
    %401 = vector.broadcast %400 : vector<1x128xf32> to vector<8x128xf32>
    %402 = tpu.iota {dimensions = array<i32: 1>} : vector<8x128xi32>
    %403 = arith.sitofp %402 : vector<8x128xi32> to vector<8x128xf32>
    %cst_108 = arith.constant 0.000000e+00 : f32
    %404 = vector.broadcast %cst_108 : f32 to vector<8x128xf32>
    %c0_i32_109 = arith.constant 0 : i32
    %405 = arith.index_cast %c0_i32_109 : i32 to index
    %c0_110 = arith.constant 0 : index
    %c0_111 = arith.constant 0 : index
    %406 = vector.load %arg9[%405, %c0_110, %c0_111] : memref<4x8x1xi32, #tpu.memory_space<vmem>>, vector<1x8x1xi32>
    %407 = vector.shape_cast %406 : vector<1x8x1xi32> to vector<8x1xi32>
    %408 = vector.broadcast %407 : vector<8x1xi32> to vector<8x128xi32>
    %409 = arith.cmpi eq, %402, %408 : vector<8x128xi32>
    %410 = arith.extui %409 : vector<8x128xi1> to vector<8x128xi32>
    %411 = arith.sitofp %410 : vector<8x128xi32> to vector<8x128xf32>
    %412 = arith.index_cast %c0_i32_109 : i32 to index
    %413 = memref.load %arg1[%412] : memref<4xi32, #tpu.memory_space<smem>>
    %c1_i32_112 = arith.constant 1 : i32
    %414 = arith.cmpi eq, %413, %c1_i32_112 : i32
    %415 = arith.extui %414 : i1 to i32
    %416 = arith.sitofp %415 : i32 to f32
    %417 = vector.broadcast %416 : f32 to vector<8x128xf32>
    %418 = arith.mulf %417, %411 : vector<8x128xf32>
    %cst_113 = arith.constant 1.000000e+00 : f32
    %419 = arith.subf %cst_113, %416 : f32
    %420 = vector.broadcast %419 : f32 to vector<8x128xf32>
    %421 = arith.mulf %420, %404 : vector<8x128xf32>
    %422 = arith.addf %418, %421 : vector<8x128xf32>
    %cst_114 = arith.constant dense<0.000000e+00> : vector<8x32xf32>
    %423 = tpu.matmul %422, %389, %cst_114 {dimension_numbers = #tpu.dot_dimension_numbers<[1], [0], [0], [1], [0, 0, 1, 1], [], []>} : vector<8x128xf32>, vector<128x32xf32>, vector<8x32xf32> -> vector<8x32xf32>
    %cst_115 = arith.constant dense<0.000000e+00> : vector<8x128xf32>
    %424 = tpu.matmul %423, %390, %cst_115 {dimension_numbers = #tpu.dot_dimension_numbers<[1], [0], [0], [1], [0, 0, 1, 1], [], []>} : vector<8x32xf32>, vector<32x128xf32>, vector<8x128xf32> -> vector<8x128xf32>
    %425 = arith.addf %424, %395 : vector<8x128xf32>
    %426 = vector.extract_strided_slice %425 {offsets = [0, 0], sizes = [8, 32], strides = [1, 1]} : vector<8x128xf32> to vector<8x32xf32>
    %427 = arith.negf %426 : vector<8x32xf32>
    %428 = math.exp %427 : vector<8x32xf32>
    %cst_116 = arith.constant 1.000000e+00 : f32
    %429 = vector.broadcast %cst_116 : f32 to vector<8x32xf32>
    %430 = arith.addf %429, %428 : vector<8x32xf32>
    %431 = arith.divf %429, %430 : vector<8x32xf32>
    %432 = vector.extract_strided_slice %425 {offsets = [0, 64], sizes = [8, 32], strides = [1, 1]} : vector<8x128xf32> to vector<8x32xf32>
    %433 = math.tanh %432 : vector<8x32xf32>
    %434 = vector.extract_strided_slice %425 {offsets = [0, 96], sizes = [8, 32], strides = [1, 1]} : vector<8x128xf32> to vector<8x32xf32>
    %435 = arith.negf %434 : vector<8x32xf32>
    %436 = math.exp %435 : vector<8x32xf32>
    %cst_117 = arith.constant 1.000000e+00 : f32
    %437 = vector.broadcast %cst_117 : f32 to vector<8x32xf32>
    %438 = arith.addf %437, %436 : vector<8x32xf32>
    %439 = arith.divf %437, %438 : vector<8x32xf32>
    %440 = arith.mulf %431, %433 : vector<8x32xf32>
    %441 = math.tanh %440 : vector<8x32xf32>
    %442 = arith.mulf %439, %441 : vector<8x32xf32>
    %cst_118 = arith.constant dense<0.000000e+00> : vector<8x128xf32>
    %443 = tpu.matmul %442, %391, %cst_118 {dimension_numbers = #tpu.dot_dimension_numbers<[1], [0], [0], [1], [0, 0, 1, 1], [], []>} : vector<8x32xf32>, vector<32x128xf32>, vector<8x128xf32> -> vector<8x128xf32>
    %444 = arith.addf %443, %398 : vector<8x128xf32>
    %445 = vector.extract_strided_slice %444 {offsets = [0, 0], sizes = [8, 32], strides = [1, 1]} : vector<8x128xf32> to vector<8x32xf32>
    %446 = arith.negf %445 : vector<8x32xf32>
    %447 = math.exp %446 : vector<8x32xf32>
    %cst_119 = arith.constant 1.000000e+00 : f32
    %448 = vector.broadcast %cst_119 : f32 to vector<8x32xf32>
    %449 = arith.addf %448, %447 : vector<8x32xf32>
    %450 = arith.divf %448, %449 : vector<8x32xf32>
    %451 = vector.extract_strided_slice %444 {offsets = [0, 64], sizes = [8, 32], strides = [1, 1]} : vector<8x128xf32> to vector<8x32xf32>
    %452 = math.tanh %451 : vector<8x32xf32>
    %453 = vector.extract_strided_slice %444 {offsets = [0, 96], sizes = [8, 32], strides = [1, 1]} : vector<8x128xf32> to vector<8x32xf32>
    %454 = arith.negf %453 : vector<8x32xf32>
    %455 = math.exp %454 : vector<8x32xf32>
    %cst_120 = arith.constant 1.000000e+00 : f32
    %456 = vector.broadcast %cst_120 : f32 to vector<8x32xf32>
    %457 = arith.addf %456, %455 : vector<8x32xf32>
    %458 = arith.divf %456, %457 : vector<8x32xf32>
    %459 = arith.mulf %450, %452 : vector<8x32xf32>
    %460 = math.tanh %459 : vector<8x32xf32>
    %461 = arith.mulf %458, %460 : vector<8x32xf32>
    %cst_121 = arith.constant dense<0.000000e+00> : vector<8x128xf32>
    %462 = tpu.matmul %461, %392, %cst_121 {dimension_numbers = #tpu.dot_dimension_numbers<[1], [0], [0], [1], [0, 0, 1, 1], [], []>} : vector<8x32xf32>, vector<32x128xf32>, vector<8x128xf32> -> vector<8x128xf32>
    %463 = arith.addf %462, %401 : vector<8x128xf32>
    %464 = arith.index_cast %c0_i32_109 : i32 to index
    %c0_122 = arith.constant 0 : index
    %c0_123 = arith.constant 0 : index
    %465 = vector.load %arg19[%464, %c0_122, %c0_123] : memref<4x8x128xf32, #tpu.memory_space<vmem>>, vector<1x8x128xf32>
    %466 = vector.shape_cast %465 : vector<1x8x128xf32> to vector<8x128xf32>
    %467 = vector.shape_cast %463 : vector<8x128xf32> to vector<1x8x128xf32>
    tpu.vector_store %arg19[%464, %c0_122, %c0_123], %467 {strides = array<i32>} : memref<4x8x128xf32, #tpu.memory_space<vmem>>, vector<1x8x128xf32>,
    %cst_124 = arith.constant dense<0xFF800000> : vector<8xf32>
    %468 = vector.multi_reduction <maximumf>, %463, %cst_124 [1] : vector<8x128xf32> to vector<8xf32>
    %469 = vector.shape_cast %468 : vector<8xf32> to vector<8x1xf32>
    %470 = vector.broadcast %469 : vector<8x1xf32> to vector<8x128xf32>
    %471 = arith.cmpf oeq, %463, %470 : vector<8x128xf32>
    %cst_125 = arith.constant 1.280000e+02 : f32
    %472 = vector.broadcast %cst_125 : f32 to vector<8x128xf32>
    %473 = arith.select %471, %403, %472 : vector<8x128xi1>, vector<8x128xf32>
    %cst_126 = arith.constant dense<0x7F800000> : vector<8xf32>
    %474 = vector.multi_reduction <minimumf>, %473, %cst_126 [1] : vector<8x128xf32> to vector<8xf32>
    %475 = vector.shape_cast %474 : vector<8xf32> to vector<8x1xf32>
    %476 = vector.broadcast %475 : vector<8x1xf32> to vector<8x128xf32>
    %477 = arith.cmpf oeq, %403, %476 : vector<8x128xf32>
    %478 = arith.extui %477 : vector<8x128xi1> to vector<8x128xi32>
    %479 = arith.sitofp %478 : vector<8x128xi32> to vector<8x128xf32>
    %c1_i32_127 = arith.constant 1 : i32
    %480 = arith.index_cast %c1_i32_127 : i32 to index
    %c0_128 = arith.constant 0 : index
    %c0_129 = arith.constant 0 : index
    %481 = vector.load %arg9[%480, %c0_128, %c0_129] : memref<4x8x1xi32, #tpu.memory_space<vmem>>, vector<1x8x1xi32>
    %482 = vector.shape_cast %481 : vector<1x8x1xi32> to vector<8x1xi32>
    %483 = vector.broadcast %482 : vector<8x1xi32> to vector<8x128xi32>
    %484 = arith.cmpi eq, %402, %483 : vector<8x128xi32>
    %485 = arith.extui %484 : vector<8x128xi1> to vector<8x128xi32>
    %486 = arith.sitofp %485 : vector<8x128xi32> to vector<8x128xf32>
    %487 = arith.index_cast %c1_i32_127 : i32 to index
    %488 = memref.load %arg1[%487] : memref<4xi32, #tpu.memory_space<smem>>
    %c1_i32_130 = arith.constant 1 : i32
    %489 = arith.cmpi eq, %488, %c1_i32_130 : i32
    %490 = arith.extui %489 : i1 to i32
    %491 = arith.sitofp %490 : i32 to f32
    %492 = vector.broadcast %491 : f32 to vector<8x128xf32>
    %493 = arith.mulf %492, %486 : vector<8x128xf32>
    %cst_131 = arith.constant 1.000000e+00 : f32
    %494 = arith.subf %cst_131, %491 : f32
    %495 = vector.broadcast %494 : f32 to vector<8x128xf32>
    %496 = arith.mulf %495, %479 : vector<8x128xf32>
    %497 = arith.addf %493, %496 : vector<8x128xf32>
    %cst_132 = arith.constant dense<0.000000e+00> : vector<8x32xf32>
    %498 = tpu.matmul %497, %389, %cst_132 {dimension_numbers = #tpu.dot_dimension_numbers<[1], [0], [0], [1], [0, 0, 1, 1], [], []>} : vector<8x128xf32>, vector<128x32xf32>, vector<8x32xf32> -> vector<8x32xf32>
    %cst_133 = arith.constant dense<0.000000e+00> : vector<8x128xf32>
    %499 = tpu.matmul %498, %390, %cst_133 {dimension_numbers = #tpu.dot_dimension_numbers<[1], [0], [0], [1], [0, 0, 1, 1], [], []>} : vector<8x32xf32>, vector<32x128xf32>, vector<8x128xf32> -> vector<8x128xf32>
    %500 = arith.addf %499, %395 : vector<8x128xf32>
    %501 = vector.extract_strided_slice %500 {offsets = [0, 0], sizes = [8, 32], strides = [1, 1]} : vector<8x128xf32> to vector<8x32xf32>
    %502 = arith.negf %501 : vector<8x32xf32>
    %503 = math.exp %502 : vector<8x32xf32>
    %cst_134 = arith.constant 1.000000e+00 : f32
    %504 = vector.broadcast %cst_134 : f32 to vector<8x32xf32>
    %505 = arith.addf %504, %503 : vector<8x32xf32>
    %506 = arith.divf %504, %505 : vector<8x32xf32>
    %507 = vector.extract_strided_slice %500 {offsets = [0, 64], sizes = [8, 32], strides = [1, 1]} : vector<8x128xf32> to vector<8x32xf32>
    %508 = math.tanh %507 : vector<8x32xf32>
    %509 = vector.extract_strided_slice %500 {offsets = [0, 96], sizes = [8, 32], strides = [1, 1]} : vector<8x128xf32> to vector<8x32xf32>
    %510 = arith.negf %509 : vector<8x32xf32>
    %511 = math.exp %510 : vector<8x32xf32>
    %cst_135 = arith.constant 1.000000e+00 : f32
    %512 = vector.broadcast %cst_135 : f32 to vector<8x32xf32>
    %513 = arith.addf %512, %511 : vector<8x32xf32>
    %514 = arith.divf %512, %513 : vector<8x32xf32>
    %515 = arith.mulf %506, %508 : vector<8x32xf32>
    %516 = math.tanh %515 : vector<8x32xf32>
    %517 = arith.mulf %514, %516 : vector<8x32xf32>
    %cst_136 = arith.constant dense<0.000000e+00> : vector<8x128xf32>
    %518 = tpu.matmul %517, %391, %cst_136 {dimension_numbers = #tpu.dot_dimension_numbers<[1], [0], [0], [1], [0, 0, 1, 1], [], []>} : vector<8x32xf32>, vector<32x128xf32>, vector<8x128xf32> -> vector<8x128xf32>
    %519 = arith.addf %518, %398 : vector<8x128xf32>
    %520 = vector.extract_strided_slice %519 {offsets = [0, 0], sizes = [8, 32], strides = [1, 1]} : vector<8x128xf32> to vector<8x32xf32>
    %521 = arith.negf %520 : vector<8x32xf32>
    %522 = math.exp %521 : vector<8x32xf32>
    %cst_137 = arith.constant 1.000000e+00 : f32
    %523 = vector.broadcast %cst_137 : f32 to vector<8x32xf32>
    %524 = arith.addf %523, %522 : vector<8x32xf32>
    %525 = arith.divf %523, %524 : vector<8x32xf32>
    %526 = vector.extract_strided_slice %519 {offsets = [0, 64], sizes = [8, 32], strides = [1, 1]} : vector<8x128xf32> to vector<8x32xf32>
    %527 = math.tanh %526 : vector<8x32xf32>
    %528 = vector.extract_strided_slice %519 {offsets = [0, 96], sizes = [8, 32], strides = [1, 1]} : vector<8x128xf32> to vector<8x32xf32>
    %529 = arith.negf %528 : vector<8x32xf32>
    %530 = math.exp %529 : vector<8x32xf32>
    %cst_138 = arith.constant 1.000000e+00 : f32
    %531 = vector.broadcast %cst_138 : f32 to vector<8x32xf32>
    %532 = arith.addf %531, %530 : vector<8x32xf32>
    %533 = arith.divf %531, %532 : vector<8x32xf32>
    %534 = arith.mulf %525, %527 : vector<8x32xf32>
    %535 = math.tanh %534 : vector<8x32xf32>
    %536 = arith.mulf %533, %535 : vector<8x32xf32>
    %cst_139 = arith.constant dense<0.000000e+00> : vector<8x128xf32>
    %537 = tpu.matmul %536, %392, %cst_139 {dimension_numbers = #tpu.dot_dimension_numbers<[1], [0], [0], [1], [0, 0, 1, 1], [], []>} : vector<8x32xf32>, vector<32x128xf32>, vector<8x128xf32> -> vector<8x128xf32>
    %538 = arith.addf %537, %401 : vector<8x128xf32>
    %539 = arith.index_cast %c1_i32_127 : i32 to index
    %c0_140 = arith.constant 0 : index
    %c0_141 = arith.constant 0 : index
    %540 = vector.load %arg19[%539, %c0_140, %c0_141] : memref<4x8x128xf32, #tpu.memory_space<vmem>>, vector<1x8x128xf32>
    %541 = vector.shape_cast %540 : vector<1x8x128xf32> to vector<8x128xf32>
    %542 = vector.shape_cast %538 : vector<8x128xf32> to vector<1x8x128xf32>
    tpu.vector_store %arg19[%539, %c0_140, %c0_141], %542 {strides = array<i32>} : memref<4x8x128xf32, #tpu.memory_space<vmem>>, vector<1x8x128xf32>,
    %cst_142 = arith.constant dense<0xFF800000> : vector<8xf32>
    %543 = vector.multi_reduction <maximumf>, %538, %cst_142 [1] : vector<8x128xf32> to vector<8xf32>
    %544 = vector.shape_cast %543 : vector<8xf32> to vector<8x1xf32>
    %545 = vector.broadcast %544 : vector<8x1xf32> to vector<8x128xf32>
    %546 = arith.cmpf oeq, %538, %545 : vector<8x128xf32>
    %cst_143 = arith.constant 1.280000e+02 : f32
    %547 = vector.broadcast %cst_143 : f32 to vector<8x128xf32>
    %548 = arith.select %546, %403, %547 : vector<8x128xi1>, vector<8x128xf32>
    %cst_144 = arith.constant dense<0x7F800000> : vector<8xf32>
    %549 = vector.multi_reduction <minimumf>, %548, %cst_144 [1] : vector<8x128xf32> to vector<8xf32>
    %550 = vector.shape_cast %549 : vector<8xf32> to vector<8x1xf32>
    %551 = vector.broadcast %550 : vector<8x1xf32> to vector<8x128xf32>
    %552 = arith.cmpf oeq, %403, %551 : vector<8x128xf32>
    %553 = arith.extui %552 : vector<8x128xi1> to vector<8x128xi32>
    %554 = arith.sitofp %553 : vector<8x128xi32> to vector<8x128xf32>
    %c2_i32_145 = arith.constant 2 : i32
    %555 = arith.index_cast %c2_i32_145 : i32 to index
    %c0_146 = arith.constant 0 : index
    %c0_147 = arith.constant 0 : index
    %556 = vector.load %arg9[%555, %c0_146, %c0_147] : memref<4x8x1xi32, #tpu.memory_space<vmem>>, vector<1x8x1xi32>
    %557 = vector.shape_cast %556 : vector<1x8x1xi32> to vector<8x1xi32>
    %558 = vector.broadcast %557 : vector<8x1xi32> to vector<8x128xi32>
    %559 = arith.cmpi eq, %402, %558 : vector<8x128xi32>
    %560 = arith.extui %559 : vector<8x128xi1> to vector<8x128xi32>
    %561 = arith.sitofp %560 : vector<8x128xi32> to vector<8x128xf32>
    %562 = arith.index_cast %c2_i32_145 : i32 to index
    %563 = memref.load %arg1[%562] : memref<4xi32, #tpu.memory_space<smem>>
    %c1_i32_148 = arith.constant 1 : i32
    %564 = arith.cmpi eq, %563, %c1_i32_148 : i32
    %565 = arith.extui %564 : i1 to i32
    %566 = arith.sitofp %565 : i32 to f32
    %567 = vector.broadcast %566 : f32 to vector<8x128xf32>
    %568 = arith.mulf %567, %561 : vector<8x128xf32>
    %cst_149 = arith.constant 1.000000e+00 : f32
    %569 = arith.subf %cst_149, %566 : f32
    %570 = vector.broadcast %569 : f32 to vector<8x128xf32>
    %571 = arith.mulf %570, %554 : vector<8x128xf32>
    %572 = arith.addf %568, %571 : vector<8x128xf32>
    %cst_150 = arith.constant dense<0.000000e+00> : vector<8x32xf32>
    %573 = tpu.matmul %572, %389, %cst_150 {dimension_numbers = #tpu.dot_dimension_numbers<[1], [0], [0], [1], [0, 0, 1, 1], [], []>} : vector<8x128xf32>, vector<128x32xf32>, vector<8x32xf32> -> vector<8x32xf32>
    %cst_151 = arith.constant dense<0.000000e+00> : vector<8x128xf32>
    %574 = tpu.matmul %573, %390, %cst_151 {dimension_numbers = #tpu.dot_dimension_numbers<[1], [0], [0], [1], [0, 0, 1, 1], [], []>} : vector<8x32xf32>, vector<32x128xf32>, vector<8x128xf32> -> vector<8x128xf32>
    %575 = arith.addf %574, %395 : vector<8x128xf32>
    %576 = vector.extract_strided_slice %575 {offsets = [0, 0], sizes = [8, 32], strides = [1, 1]} : vector<8x128xf32> to vector<8x32xf32>
    %577 = arith.negf %576 : vector<8x32xf32>
    %578 = math.exp %577 : vector<8x32xf32>
    %cst_152 = arith.constant 1.000000e+00 : f32
    %579 = vector.broadcast %cst_152 : f32 to vector<8x32xf32>
    %580 = arith.addf %579, %578 : vector<8x32xf32>
    %581 = arith.divf %579, %580 : vector<8x32xf32>
    %582 = vector.extract_strided_slice %575 {offsets = [0, 64], sizes = [8, 32], strides = [1, 1]} : vector<8x128xf32> to vector<8x32xf32>
    %583 = math.tanh %582 : vector<8x32xf32>
    %584 = vector.extract_strided_slice %575 {offsets = [0, 96], sizes = [8, 32], strides = [1, 1]} : vector<8x128xf32> to vector<8x32xf32>
    %585 = arith.negf %584 : vector<8x32xf32>
    %586 = math.exp %585 : vector<8x32xf32>
    %cst_153 = arith.constant 1.000000e+00 : f32
    %587 = vector.broadcast %cst_153 : f32 to vector<8x32xf32>
    %588 = arith.addf %587, %586 : vector<8x32xf32>
    %589 = arith.divf %587, %588 : vector<8x32xf32>
    %590 = arith.mulf %581, %583 : vector<8x32xf32>
    %591 = math.tanh %590 : vector<8x32xf32>
    %592 = arith.mulf %589, %591 : vector<8x32xf32>
    %cst_154 = arith.constant dense<0.000000e+00> : vector<8x128xf32>
    %593 = tpu.matmul %592, %391, %cst_154 {dimension_numbers = #tpu.dot_dimension_numbers<[1], [0], [0], [1], [0, 0, 1, 1], [], []>} : vector<8x32xf32>, vector<32x128xf32>, vector<8x128xf32> -> vector<8x128xf32>
    %594 = arith.addf %593, %398 : vector<8x128xf32>
    %595 = vector.extract_strided_slice %594 {offsets = [0, 0], sizes = [8, 32], strides = [1, 1]} : vector<8x128xf32> to vector<8x32xf32>
    %596 = arith.negf %595 : vector<8x32xf32>
    %597 = math.exp %596 : vector<8x32xf32>
    %cst_155 = arith.constant 1.000000e+00 : f32
    %598 = vector.broadcast %cst_155 : f32 to vector<8x32xf32>
    %599 = arith.addf %598, %597 : vector<8x32xf32>
    %600 = arith.divf %598, %599 : vector<8x32xf32>
    %601 = vector.extract_strided_slice %594 {offsets = [0, 64], sizes = [8, 32], strides = [1, 1]} : vector<8x128xf32> to vector<8x32xf32>
    %602 = math.tanh %601 : vector<8x32xf32>
    %603 = vector.extract_strided_slice %594 {offsets = [0, 96], sizes = [8, 32], strides = [1, 1]} : vector<8x128xf32> to vector<8x32xf32>
    %604 = arith.negf %603 : vector<8x32xf32>
    %605 = math.exp %604 : vector<8x32xf32>
    %cst_156 = arith.constant 1.000000e+00 : f32
    %606 = vector.broadcast %cst_156 : f32 to vector<8x32xf32>
    %607 = arith.addf %606, %605 : vector<8x32xf32>
    %608 = arith.divf %606, %607 : vector<8x32xf32>
    %609 = arith.mulf %600, %602 : vector<8x32xf32>
    %610 = math.tanh %609 : vector<8x32xf32>
    %611 = arith.mulf %608, %610 : vector<8x32xf32>
    %cst_157 = arith.constant dense<0.000000e+00> : vector<8x128xf32>
    %612 = tpu.matmul %611, %392, %cst_157 {dimension_numbers = #tpu.dot_dimension_numbers<[1], [0], [0], [1], [0, 0, 1, 1], [], []>} : vector<8x32xf32>, vector<32x128xf32>, vector<8x128xf32> -> vector<8x128xf32>
    %613 = arith.addf %612, %401 : vector<8x128xf32>
    %614 = arith.index_cast %c2_i32_145 : i32 to index
    %c0_158 = arith.constant 0 : index
    %c0_159 = arith.constant 0 : index
    %615 = vector.load %arg19[%614, %c0_158, %c0_159] : memref<4x8x128xf32, #tpu.memory_space<vmem>>, vector<1x8x128xf32>
    %616 = vector.shape_cast %615 : vector<1x8x128xf32> to vector<8x128xf32>
    %617 = vector.shape_cast %613 : vector<8x128xf32> to vector<1x8x128xf32>
    tpu.vector_store %arg19[%614, %c0_158, %c0_159], %617 {strides = array<i32>} : memref<4x8x128xf32, #tpu.memory_space<vmem>>, vector<1x8x128xf32>,
    %cst_160 = arith.constant dense<0xFF800000> : vector<8xf32>
    %618 = vector.multi_reduction <maximumf>, %613, %cst_160 [1] : vector<8x128xf32> to vector<8xf32>
    %619 = vector.shape_cast %618 : vector<8xf32> to vector<8x1xf32>
    %620 = vector.broadcast %619 : vector<8x1xf32> to vector<8x128xf32>
    %621 = arith.cmpf oeq, %613, %620 : vector<8x128xf32>
    %cst_161 = arith.constant 1.280000e+02 : f32
    %622 = vector.broadcast %cst_161 : f32 to vector<8x128xf32>
    %623 = arith.select %621, %403, %622 : vector<8x128xi1>, vector<8x128xf32>
    %cst_162 = arith.constant dense<0x7F800000> : vector<8xf32>
    %624 = vector.multi_reduction <minimumf>, %623, %cst_162 [1] : vector<8x128xf32> to vector<8xf32>
    %625 = vector.shape_cast %624 : vector<8xf32> to vector<8x1xf32>
    %626 = vector.broadcast %625 : vector<8x1xf32> to vector<8x128xf32>
    %627 = arith.cmpf oeq, %403, %626 : vector<8x128xf32>
    %628 = arith.extui %627 : vector<8x128xi1> to vector<8x128xi32>
    %629 = arith.sitofp %628 : vector<8x128xi32> to vector<8x128xf32>
    %c3_i32_163 = arith.constant 3 : i32
    %630 = arith.index_cast %c3_i32_163 : i32 to index
    %c0_164 = arith.constant 0 : index
    %c0_165 = arith.constant 0 : index
    %631 = vector.load %arg9[%630, %c0_164, %c0_165] : memref<4x8x1xi32, #tpu.memory_space<vmem>>, vector<1x8x1xi32>
    %632 = vector.shape_cast %631 : vector<1x8x1xi32> to vector<8x1xi32>
    %633 = vector.broadcast %632 : vector<8x1xi32> to vector<8x128xi32>
    %634 = arith.cmpi eq, %402, %633 : vector<8x128xi32>
    %635 = arith.extui %634 : vector<8x128xi1> to vector<8x128xi32>
    %636 = arith.sitofp %635 : vector<8x128xi32> to vector<8x128xf32>
    %637 = arith.index_cast %c3_i32_163 : i32 to index
    %638 = memref.load %arg1[%637] : memref<4xi32, #tpu.memory_space<smem>>
    %c1_i32_166 = arith.constant 1 : i32
    %639 = arith.cmpi eq, %638, %c1_i32_166 : i32
    %640 = arith.extui %639 : i1 to i32
    %641 = arith.sitofp %640 : i32 to f32
    %642 = vector.broadcast %641 : f32 to vector<8x128xf32>
    %643 = arith.mulf %642, %636 : vector<8x128xf32>
    %cst_167 = arith.constant 1.000000e+00 : f32
    %644 = arith.subf %cst_167, %641 : f32
    %645 = vector.broadcast %644 : f32 to vector<8x128xf32>
    %646 = arith.mulf %645, %629 : vector<8x128xf32>
    %647 = arith.addf %643, %646 : vector<8x128xf32>
    %cst_168 = arith.constant dense<0.000000e+00> : vector<8x32xf32>
    %648 = tpu.matmul %647, %389, %cst_168 {dimension_numbers = #tpu.dot_dimension_numbers<[1], [0], [0], [1], [0, 0, 1, 1], [], []>} : vector<8x128xf32>, vector<128x32xf32>, vector<8x32xf32> -> vector<8x32xf32>
    %cst_169 = arith.constant dense<0.000000e+00> : vector<8x128xf32>
    %649 = tpu.matmul %648, %390, %cst_169 {dimension_numbers = #tpu.dot_dimension_numbers<[1], [0], [0], [1], [0, 0, 1, 1], [], []>} : vector<8x32xf32>, vector<32x128xf32>, vector<8x128xf32> -> vector<8x128xf32>
    %650 = arith.addf %649, %395 : vector<8x128xf32>
    %651 = vector.extract_strided_slice %650 {offsets = [0, 0], sizes = [8, 32], strides = [1, 1]} : vector<8x128xf32> to vector<8x32xf32>
    %652 = arith.negf %651 : vector<8x32xf32>
    %653 = math.exp %652 : vector<8x32xf32>
    %cst_170 = arith.constant 1.000000e+00 : f32
    %654 = vector.broadcast %cst_170 : f32 to vector<8x32xf32>
    %655 = arith.addf %654, %653 : vector<8x32xf32>
    %656 = arith.divf %654, %655 : vector<8x32xf32>
    %657 = vector.extract_strided_slice %650 {offsets = [0, 64], sizes = [8, 32], strides = [1, 1]} : vector<8x128xf32> to vector<8x32xf32>
    %658 = math.tanh %657 : vector<8x32xf32>
    %659 = vector.extract_strided_slice %650 {offsets = [0, 96], sizes = [8, 32], strides = [1, 1]} : vector<8x128xf32> to vector<8x32xf32>
    %660 = arith.negf %659 : vector<8x32xf32>
    %661 = math.exp %660 : vector<8x32xf32>
    %cst_171 = arith.constant 1.000000e+00 : f32
    %662 = vector.broadcast %cst_171 : f32 to vector<8x32xf32>
    %663 = arith.addf %662, %661 : vector<8x32xf32>
    %664 = arith.divf %662, %663 : vector<8x32xf32>
    %665 = arith.mulf %656, %658 : vector<8x32xf32>
    %666 = math.tanh %665 : vector<8x32xf32>
    %667 = arith.mulf %664, %666 : vector<8x32xf32>
    %cst_172 = arith.constant dense<0.000000e+00> : vector<8x128xf32>
    %668 = tpu.matmul %667, %391, %cst_172 {dimension_numbers = #tpu.dot_dimension_numbers<[1], [0], [0], [1], [0, 0, 1, 1], [], []>} : vector<8x32xf32>, vector<32x128xf32>, vector<8x128xf32> -> vector<8x128xf32>
    %669 = arith.addf %668, %398 : vector<8x128xf32>
    %670 = vector.extract_strided_slice %669 {offsets = [0, 0], sizes = [8, 32], strides = [1, 1]} : vector<8x128xf32> to vector<8x32xf32>
    %671 = arith.negf %670 : vector<8x32xf32>
    %672 = math.exp %671 : vector<8x32xf32>
    %cst_173 = arith.constant 1.000000e+00 : f32
    %673 = vector.broadcast %cst_173 : f32 to vector<8x32xf32>
    %674 = arith.addf %673, %672 : vector<8x32xf32>
    %675 = arith.divf %673, %674 : vector<8x32xf32>
    %676 = vector.extract_strided_slice %669 {offsets = [0, 64], sizes = [8, 32], strides = [1, 1]} : vector<8x128xf32> to vector<8x32xf32>
    %677 = math.tanh %676 : vector<8x32xf32>
    %678 = vector.extract_strided_slice %669 {offsets = [0, 96], sizes = [8, 32], strides = [1, 1]} : vector<8x128xf32> to vector<8x32xf32>
    %679 = arith.negf %678 : vector<8x32xf32>
    %680 = math.exp %679 : vector<8x32xf32>
    %cst_174 = arith.constant 1.000000e+00 : f32
    %681 = vector.broadcast %cst_174 : f32 to vector<8x32xf32>
    %682 = arith.addf %681, %680 : vector<8x32xf32>
    %683 = arith.divf %681, %682 : vector<8x32xf32>
    %684 = arith.mulf %675, %677 : vector<8x32xf32>
    %685 = math.tanh %684 : vector<8x32xf32>
    %686 = arith.mulf %683, %685 : vector<8x32xf32>
    %cst_175 = arith.constant dense<0.000000e+00> : vector<8x128xf32>
    %687 = tpu.matmul %686, %392, %cst_175 {dimension_numbers = #tpu.dot_dimension_numbers<[1], [0], [0], [1], [0, 0, 1, 1], [], []>} : vector<8x32xf32>, vector<32x128xf32>, vector<8x128xf32> -> vector<8x128xf32>
    %688 = arith.addf %687, %401 : vector<8x128xf32>
    %689 = arith.index_cast %c3_i32_163 : i32 to index
    %c0_176 = arith.constant 0 : index
    %c0_177 = arith.constant 0 : index
    %690 = vector.load %arg19[%689, %c0_176, %c0_177] : memref<4x8x128xf32, #tpu.memory_space<vmem>>, vector<1x8x128xf32>
    %691 = vector.shape_cast %690 : vector<1x8x128xf32> to vector<8x128xf32>
    %692 = vector.shape_cast %688 : vector<8x128xf32> to vector<1x8x128xf32>
    tpu.vector_store %arg19[%689, %c0_176, %c0_177], %692 {strides = array<i32>} : memref<4x8x128xf32, #tpu.memory_space<vmem>>, vector<1x8x128xf32>,
    %cst_178 = arith.constant dense<0xFF800000> : vector<8xf32>
    %693 = vector.multi_reduction <maximumf>, %688, %cst_178 [1] : vector<8x128xf32> to vector<8xf32>
    %694 = vector.shape_cast %693 : vector<8xf32> to vector<8x1xf32>
    %695 = vector.broadcast %694 : vector<8x1xf32> to vector<8x128xf32>
    %696 = arith.cmpf oeq, %688, %695 : vector<8x128xf32>
    %cst_179 = arith.constant 1.280000e+02 : f32
    %697 = vector.broadcast %cst_179 : f32 to vector<8x128xf32>
    %698 = arith.select %696, %403, %697 : vector<8x128xi1>, vector<8x128xf32>
    %cst_180 = arith.constant dense<0x7F800000> : vector<8xf32>
    %699 = vector.multi_reduction <minimumf>, %698, %cst_180 [1] : vector<8x128xf32> to vector<8xf32>
    %700 = vector.shape_cast %699 : vector<8xf32> to vector<8x1xf32>
    %701 = vector.broadcast %700 : vector<8x1xf32> to vector<8x128xf32>
    %702 = arith.cmpf oeq, %403, %701 : vector<8x128xf32>
    %703 = arith.extui %702 : vector<8x128xi1> to vector<8x128xi32>
    %704 = arith.sitofp %703 : vector<8x128xi32> to vector<8x128xf32>
    %c4_i32_181 = arith.constant 4 : i32
    return
  }
  func.func @transform_0(%arg0: i32, %arg1: memref<4xi32, #tpu.memory_space<smem>>) -> (i32, i32, i32) {
    %c0_i32 = arith.constant 0 : i32
    %c0_i32_0 = arith.constant 0 : i32
    %c0_i32_1 = arith.constant 0 : i32
    %c0_i32_2 = arith.constant 0 : i32
    return %c0_i32, %c0_i32_0, %c0_i32_1 : i32, i32, i32
  }
  func.func @transform_1(%arg0: i32, %arg1: memref<4xi32, #tpu.memory_space<smem>>) -> (i32, i32) {
    %c0_i32 = arith.constant 0 : i32
    %c0_i32_0 = arith.constant 0 : i32
    %c0_i32_1 = arith.constant 0 : i32
    return %c0_i32, %c0_i32_0 : i32, i32
  }
  func.func @transform_2(%arg0: i32, %arg1: memref<4xi32, #tpu.memory_space<smem>>) -> (i32, i32) {
    %c0_i32 = arith.constant 0 : i32
    %c0_i32_0 = arith.constant 0 : i32
    %c0_i32_1 = arith.constant 0 : i32
    return %c0_i32, %c0_i32_0 : i32, i32
  }
  func.func @transform_3(%arg0: i32, %arg1: memref<4xi32, #tpu.memory_space<smem>>) -> (i32, i32) {
    %c0_i32 = arith.constant 0 : i32
    %c0_i32_0 = arith.constant 0 : i32
    %c0_i32_1 = arith.constant 0 : i32
    return %c0_i32, %c0_i32_0 : i32, i32
  }
  func.func @transform_4(%arg0: i32, %arg1: memref<4xi32, #tpu.memory_space<smem>>) -> (i32, i32) {
    %c0_i32 = arith.constant 0 : i32
    %c0_i32_0 = arith.constant 0 : i32
    %c0_i32_1 = arith.constant 0 : i32
    return %c0_i32, %c0_i32_0 : i32, i32
  }
  func.func @transform_5(%arg0: i32, %arg1: memref<4xi32, #tpu.memory_space<smem>>) -> (i32, i32) {
    %c0_i32 = arith.constant 0 : i32
    %c0_i32_0 = arith.constant 0 : i32
    %c0_i32_1 = arith.constant 0 : i32
    return %c0_i32, %c0_i32_0 : i32, i32
  }
  func.func @transform_6(%arg0: i32, %arg1: memref<4xi32, #tpu.memory_space<smem>>) -> (i32, i32) {
    %c0_i32 = arith.constant 0 : i32
    %c0_i32_0 = arith.constant 0 : i32
    %c0_i32_1 = arith.constant 0 : i32
    return %c0_i32, %c0_i32_0 : i32, i32
  }
  func.func @transform_7(%arg0: i32, %arg1: memref<4xi32, #tpu.memory_space<smem>>) -> (i32, i32, i32) {
    %c0_i32 = arith.constant 0 : i32
    %c0_i32_0 = arith.constant 0 : i32
    %c0_i32_1 = arith.constant 0 : i32
    %c0_i32_2 = arith.constant 0 : i32
    return %c0_i32, %c0_i32_0, %c0_i32_1 : i32, i32, i32
  }
  func.func @transform_8(%arg0: i32, %arg1: memref<4xi32, #tpu.memory_space<smem>>) -> (i32, i32) {
    %c0_i32 = arith.constant 0 : i32
    %c0_i32_0 = arith.constant 0 : i32
    %c0_i32_1 = arith.constant 0 : i32
    return %c0_i32, %c0_i32_0 : i32, i32
  }
  func.func @transform_9(%arg0: i32, %arg1: memref<4xi32, #tpu.memory_space<smem>>) -> (i32, i32) {
    %c0_i32 = arith.constant 0 : i32
    %c0_i32_0 = arith.constant 0 : i32
    %c0_i32_1 = arith.constant 0 : i32
    return %c0_i32, %c0_i32_0 : i32, i32
  }
  func.func @transform_10(%arg0: i32, %arg1: memref<4xi32, #tpu.memory_space<smem>>) -> (i32, i32) {
    %c0_i32 = arith.constant 0 : i32
    %c0_i32_0 = arith.constant 0 : i32
    %c0_i32_1 = arith.constant 0 : i32
    return %c0_i32, %c0_i32_0 : i32, i32
  }
  func.func @transform_11(%arg0: i32, %arg1: memref<4xi32, #tpu.memory_space<smem>>) -> (i32, i32) {
    %c0_i32 = arith.constant 0 : i32
    %c0_i32_0 = arith.constant 0 : i32
    %c0_i32_1 = arith.constant 0 : i32
    return %c0_i32, %c0_i32_0 : i32, i32
  }
  func.func @transform_12(%arg0: i32, %arg1: memref<4xi32, #tpu.memory_space<smem>>) -> (i32, i32) {
    %c0_i32 = arith.constant 0 : i32
    %c0_i32_0 = arith.constant 0 : i32
    %c0_i32_1 = arith.constant 0 : i32
    return %c0_i32, %c0_i32_0 : i32, i32
  }
  func.func @transform_13(%arg0: i32, %arg1: memref<4xi32, #tpu.memory_space<smem>>) -> (i32, i32) {
    %c0_i32 = arith.constant 0 : i32
    %c0_i32_0 = arith.constant 0 : i32
    %c0_i32_1 = arith.constant 0 : i32
    return %c0_i32, %c0_i32_0 : i32, i32
  }
  func.func @transform_14(%arg0: i32, %arg1: memref<4xi32, #tpu.memory_space<smem>>) -> (i32, i32) {
    %c0_i32 = arith.constant 0 : i32
    %c0_i32_0 = arith.constant 0 : i32
    %c0_i32_1 = arith.constant 0 : i32
    return %c0_i32, %c0_i32_0 : i32, i32
  }
  func.func @transform_15(%arg0: i32, %arg1: memref<4xi32, #tpu.memory_space<smem>>) -> (i32, i32, i32) {
    %c0_i32 = arith.constant 0 : i32
    %c0_i32_0 = arith.constant 0 : i32
    %c0_i32_1 = arith.constant 0 : i32
    %c0_i32_2 = arith.constant 0 : i32
    return %c0_i32, %c0_i32_0, %c0_i32_1 : i32, i32, i32
  }
  func.func @transform_16(%arg0: i32, %arg1: memref<4xi32, #tpu.memory_space<smem>>) -> (i32, i32, i32) {
    %c0_i32 = arith.constant 0 : i32
    %c0_i32_0 = arith.constant 0 : i32
    %c0_i32_1 = arith.constant 0 : i32
    %c0_i32_2 = arith.constant 0 : i32
    return %c0_i32, %c0_i32_0, %c0_i32_1 : i32, i32, i32
  }
  func.func @transform_17(%arg0: i32, %arg1: memref<4xi32, #tpu.memory_space<smem>>) -> (i32, i32, i32) {
    %c0_i32 = arith.constant 0 : i32
    %c0_i32_0 = arith.constant 0 : i32
    %c0_i32_1 = arith.constant 0 : i32
    %c0_i32_2 = arith.constant 0 : i32
    return %c0_i32, %c0_i32_0, %c0_i32_1 : i32, i32, i32
  }
}

</mosaic_0001>

<llo_original>
// kernel: _network_forward_device.1
$region0: #{_network_forward_device.1}
  #allocation0 [shape = 'u32[]', space=smem, size = 0x4, offset = 0x4, fixed_abs, tag = 'smem constant byte address 0x4 - core index']
  #allocation1 [shape = 'u32[144,128]{1,0:T(1,128)}', space=vmem, size = 0x12000, scoped, tag = 'internal scratch']
  #allocation2 [shape = 's32[1]{0}', space=sflag, size = 0x4, scoped, tag = 'scoped memory for _network_forward_device.1']
  #allocation3 [shape = 'u8[512]{0}', space=smem, size = 0x200, scoped, tag = 'prefetched SMEM operand 0']
  %s0 = inlined_call_operand.vmem [shape: s32[4], index: 0, kind: input, shape index: {}]
  %s1 = inlined_call_operand.vmem [shape: f32[6,8,32], index: 1, kind: input, shape index: {}]
  %s2 = inlined_call_operand.vmem [shape: f32[32,128], index: 2, kind: input, shape index: {}]
  %s3 = inlined_call_operand.vmem [shape: f32[32,128], index: 3, kind: input, shape index: {}]
  %s4 = inlined_call_operand.vmem [shape: f32[1,128], index: 4, kind: input, shape index: {}]
  %s5 = inlined_call_operand.vmem [shape: f32[32,128], index: 5, kind: input, shape index: {}]
  %s6 = inlined_call_operand.vmem [shape: f32[32,128], index: 6, kind: input, shape index: {}]
  %s7 = inlined_call_operand.vmem [shape: f32[1,128], index: 7, kind: input, shape index: {}]
  %s8 = inlined_call_operand.vmem [shape: s32[4,8,1], index: 8, kind: input, shape index: {}]
  %s9 = inlined_call_operand.vmem [shape: f32[128,32], index: 9, kind: input, shape index: {}]
  %s10 = inlined_call_operand.vmem [shape: f32[32,128], index: 10, kind: input, shape index: {}]
  %s11 = inlined_call_operand.vmem [shape: f32[1,128], index: 11, kind: input, shape index: {}]
  %s12 = inlined_call_operand.vmem [shape: f32[32,128], index: 12, kind: input, shape index: {}]
  %s13 = inlined_call_operand.vmem [shape: f32[1,128], index: 13, kind: input, shape index: {}]
  %s14 = inlined_call_operand.vmem [shape: f32[32,128], index: 14, kind: input, shape index: {}]
  %s15 = inlined_call_operand.vmem [shape: f32[1,128], index: 15, kind: input, shape index: {}]
  %s16 = inlined_call_operand.hbm [shape: f32[2,8,32], index: 16, kind: output, shape index: {0}]
  %s17 = inlined_call_operand.hbm [shape: f32[2,8,32], index: 17, kind: output, shape index: {1}]
  %s18 = inlined_call_operand.vmem [shape: f32[4,8,128], index: 18, kind: output, shape index: {2}]
  %19 = xla_tuple %s16, %s17, %s18
  %s20 = sld [smem:[#allocation0]]
  $region86: #{_network_forward_device.1} parent=0
    _
  %s22 = ssub.s32 1, %s20
  %s23 = scalar_select 0, %s22, %s20
  %s24 = sshll.u32 %s0, 4
  %s25 = int_to_ptr.vmem [resolvable:$true] %s24
  %27 = dma.vmem_to_smem %s25, 16, [#allocation3], [#allocation2]
  %28 = dma.done [#allocation2], 16
  %29 = sfence
  $region1: #{_network_forward_device.1} parent=0
    #allocation4 [shape = 'u8[8192]{0}', space=vmem, size = 0x2000, scoped, tag = 'output window, operand 0, single buffered']
    #allocation5 [shape = 's32[1]{0}', space=sflag, size = 0x4, scoped, tag = 'scoped memory for _network_forward_device.1']
    #allocation6 [shape = 'u8[8192]{0}', space=vmem, size = 0x2000, scoped, tag = 'output window, operand 1, single buffered']
    #allocation7 [shape = 's32[1]{0}', space=sflag, size = 0x4, scoped, tag = 'scoped memory for _network_forward_device.1']
    %30 = vsyncpa [#allocation5], 0
    %31 = vsyncpa [#allocation7], 0
    // Predicated region
    $region2: #{_network_forward_device.1} parent=1 // pred_check
      _
    $region3: #{_network_forward_device.1} parent=1 // pred_check_branch
      %33 = sbr.rel (0) target = $region5
    $region4: #{_network_forward_device.1} parent=1 // pred_region
      _
    $region5: #{_network_forward_device.1} parent=1 // pred_fallthru
      _
    // Predicated region
    $region6: #{_network_forward_device.1} parent=1 // pred_check
      _
    $region7: #{_network_forward_device.1} parent=1 // pred_check_branch
      %35 = sbr.rel (0) target = $region9
    $region8: #{_network_forward_device.1} parent=1 // pred_region
      _
    $region9: #{_network_forward_device.1} parent=1 // pred_fallthru
      _
    // Predicated region
    $region10: #{_network_forward_device.1} parent=1 // pred_check
      _
    $region11: #{_network_forward_device.1} parent=1 // pred_check_branch
      %37 = sbr.rel (0) target = $region13
    $region12: #{_network_forward_device.1} parent=1 // pred_region
      _
    $region13: #{_network_forward_device.1} parent=1 // pred_fallthru
      _
    // Predicated region
    $region14: #{_network_forward_device.1} parent=1 // pred_check
      _
    $region15: #{_network_forward_device.1} parent=1 // pred_check_branch
      %39 = sbr.rel (0) target = $region17
    $region16: #{_network_forward_device.1} parent=1 // pred_region
      _
    $region17: #{_network_forward_device.1} parent=1 // pred_fallthru
      _
    // Predicated region
    $region18: #{_network_forward_device.1} parent=1 // pred_check
      _
    $region19: #{_network_forward_device.1} parent=1 // pred_check_branch
      %41 = sbr.rel (0) target = $region21
    $region20: #{_network_forward_device.1} parent=1 // pred_region
      _
    $region21: #{_network_forward_device.1} parent=1 // pred_fallthru
      _
    // Predicated region
    $region22: #{_network_forward_device.1} parent=1 // pred_check
      _
    $region23: #{_network_forward_device.1} parent=1 // pred_check_branch
      %43 = sbr.rel (0) target = $region25
    $region24: #{_network_forward_device.1} parent=1 // pred_region
      _
    $region25: #{_network_forward_device.1} parent=1 // pred_fallthru
      _
    // Predicated region
    $region26: #{_network_forward_device.1} parent=1 // pred_check
      _
    $region27: #{_network_forward_device.1} parent=1 // pred_check_branch
      %45 = sbr.rel (0) target = $region29
    $region28: #{_network_forward_device.1} parent=1 // pred_region
      _
    $region29: #{_network_forward_device.1} parent=1 // pred_fallthru
      _
    // Predicated region
    $region30: #{_network_forward_device.1} parent=1 // pred_check
      _
    $region31: #{_network_forward_device.1} parent=1 // pred_check_branch
      %47 = sbr.rel (0) target = $region33
    $region32: #{_network_forward_device.1} parent=1 // pred_region
      _
    $region33: #{_network_forward_device.1} parent=1 // pred_fallthru
      _
    // Predicated region
    $region34: #{_network_forward_device.1} parent=1 // pred_check
      _
    $region35: #{_network_forward_device.1} parent=1 // pred_check_branch
      %49 = sbr.rel (0) target = $region37
    $region36: #{_network_forward_device.1} parent=1 // pred_region
      _
    $region37: #{_network_forward_device.1} parent=1 // pred_fallthru
      _
    // Predicated region
    $region38: #{_network_forward_device.1} parent=1 // pred_check
      _
    $region39: #{_network_forward_device.1} parent=1 // pred_check_branch
      %51 = sbr.rel (0) target = $region41
    $region40: #{_network_forward_device.1} parent=1 // pred_region
      _
    $region41: #{_network_forward_device.1} parent=1 // pred_fallthru
      _
    // Predicated region
    $region42: #{_network_forward_device.1} parent=1 // pred_check
      _
    $region43: #{_network_forward_device.1} parent=1 // pred_check_branch
      %53 = sbr.rel (0) target = $region45
    $region44: #{_network_forward_device.1} parent=1 // pred_region
      _
    $region45: #{_network_forward_device.1} parent=1 // pred_fallthru
      _
    // Predicated region
    $region46: #{_network_forward_device.1} parent=1 // pred_check
      _
    $region47: #{_network_forward_device.1} parent=1 // pred_check_branch
      %55 = sbr.rel (0) target = $region49
    $region48: #{_network_forward_device.1} parent=1 // pred_region
      _
    $region49: #{_network_forward_device.1} parent=1 // pred_fallthru
      _
    // Predicated region
    $region50: #{_network_forward_device.1} parent=1 // pred_check
      _
    $region51: #{_network_forward_device.1} parent=1 // pred_check_branch
      %57 = sbr.rel (0) target = $region53
    $region52: #{_network_forward_device.1} parent=1 // pred_region
      _
    $region53: #{_network_forward_device.1} parent=1 // pred_fallthru
      _
    // Predicated region
    $region54: #{_network_forward_device.1} parent=1 // pred_check
      _
    $region55: #{_network_forward_device.1} parent=1 // pred_check_branch
      %59 = sbr.rel (0) target = $region57
    $region56: #{_network_forward_device.1} parent=1 // pred_region
      _
    $region57: #{_network_forward_device.1} parent=1 // pred_fallthru
      _
    // Predicated region
    $region58: #{_network_forward_device.1} parent=1 // pred_check
      _
    $region59: #{_network_forward_device.1} parent=1 // pred_check_branch
      %61 = sbr.rel (0) target = $region61
    $region60: #{_network_forward_device.1} parent=1 // pred_region
      _
    $region61: #{_network_forward_device.1} parent=1 // pred_fallthru
      _
    %v62 = vld [vmem:[%s2] sm:$0xff]
    %v63 = vld [vmem:[%s2 + $0x8] sm:$0xff]
    %v64 = vld [vmem:[%s2 + $0x10] sm:$0xff]
    %v65 = vld [vmem:[%s2 + $0x18] sm:$0xff]
    %v66 = vld [vmem:[%s3] sm:$0xff]
    %v67 = vld [vmem:[%s3 + $0x8] sm:$0xff]
    %v68 = vld [vmem:[%s3 + $0x10] sm:$0xff]
    %v69 = vld [vmem:[%s3 + $0x18] sm:$0xff]
    %v70 = vld [vmem:[%s5] sm:$0xff]
    %v71 = vld [vmem:[%s5 + $0x8] sm:$0xff]
    %v72 = vld [vmem:[%s5 + $0x10] sm:$0xff]
    %v73 = vld [vmem:[%s5 + $0x18] sm:$0xff]
    %v74 = vld [vmem:[%s6] sm:$0xff]
    %v75 = vld [vmem:[%s6 + $0x8] sm:$0xff]
    %v76 = vld [vmem:[%s6 + $0x10] sm:$0xff]
    %v77 = vld [vmem:[%s6 + $0x18] sm:$0xff]
    %v78 = vld [vmem:[%s4] sm:$0x1]
    %v80 = vlaneseq
    %v81 = vshrl.u32 %v80, 7
    %v82 = vsub.s32 0, %v81
    %v83 = vrot.slane %v78, %v82
    %v85 = vld [vmem:[%s7] sm:$0x1]
    %v87 = vlaneseq
    %v88 = vshrl.u32 %v87, 7
    %v89 = vsub.s32 0, %v88
    %v90 = vrot.slane %v85, %v89
    %v92 = vld [vmem:[%s1] sm:$0xff]
    %vm93 = vcmask 261120
    %v95 = vsel %vm93, 0.0, 0
    %97 = vmatprep.subr.mxu0 0.0
    %98 = vmatpush1.msra.mxu0 0.0
    %99 = vmatprep.subr.mxu0 0.0
    %100 = vmatpush1.msra.mxu0 0.0
    %101 = vmatprep.subr.mxu0 0.0
    %102 = vmatpush1.msra.mxu0 0.0
    %103 = vmatprep.subr.mxu0 0.0
    %104 = vmatpush1.msra.mxu0 0.0
    %105 = vmatprep.subr.mxu0 0.0
    %106 = vmatpush1.msra.mxu0 0.0
    %107 = vmatprep.subr.mxu0 0.0
    %108 = vmatpush1.msra.mxu0 0.0
    %109 = vmatprep.subr.mxu0 0.0
    %110 = vmatpush1.msra.mxu0 0.0
    %111 = vmatprep.subr.mxu0 0.0
    %112 = vmatpush1.msra.mxu0 0.0
    %113 = vmatprep.subr.mxu0 0.0
    %114 = vmatpush1.msra.mxu0 0.0
    %115 = vmatprep.subr.mxu0 0.0
    %116 = vmatpush1.msra.mxu0 0.0
    %117 = vmatprep.subr.mxu0 0.0
    %118 = vmatpush1.msra.mxu0 0.0
    %119 = vmatprep.subr.mxu0 0.0
    %120 = vmatpush1.msra.mxu0 0.0
    %121 = vmatprep.subr.mxu0 0.0
    %122 = vmatpush1.msra.mxu0 %v69
    %123 = vmatprep.subr.mxu0 0.0
    %124 = vmatpush1.msra.mxu0 %v68
    %125 = vmatprep.subr.mxu0 0.0
    %126 = vmatpush1.msra.mxu0 %v67
    %127 = vmatprep.subr.mxu0 0.0
    %128 = vmatpush1.msra.mxu0 %v66
    %129 = vmatprep.subr.mxu0 0.0
    %130 = vmatpush2.msra.mxu0 0.0
    %131 = vmatprep.subr.mxu0 0.0
    %132 = vmatpush2.msra.mxu0 0.0
    %133 = vmatprep.subr.mxu0 0.0
    %134 = vmatpush2.msra.mxu0 0.0
    %135 = vmatprep.subr.mxu0 0.0
    %136 = vmatpush2.msra.mxu0 0.0
    %137 = vmatprep.subr.mxu0 0.0
    %138 = vmatpush2.msra.mxu0 0.0
    %139 = vmatprep.subr.mxu0 0.0
    %140 = vmatpush2.msra.mxu0 0.0
    %141 = vmatprep.subr.mxu0 0.0
    %142 = vmatpush2.msra.mxu0 0.0
    %143 = vmatprep.subr.mxu0 0.0
    %144 = vmatpush2.msra.mxu0 0.0
    %145 = vmatprep.subr.mxu0 0.0
    %146 = vmatpush2.msra.mxu0 0.0
    %147 = vmatprep.subr.mxu0 0.0
    %148 = vmatpush2.msra.mxu0 0.0
    %149 = vmatprep.subr.mxu0 0.0
    %150 = vmatpush2.msra.mxu0 0.0
    %151 = vmatprep.subr.mxu0 0.0
    %152 = vmatpush2.msra.mxu0 0.0
    %153 = vmatprep.subr.mxu0 0.0
    %154 = vmatpush2.msra.mxu0 0.0
    %155 = vmatprep.subr.mxu0 0.0
    %156 = vmatpush2.msra.mxu0 0.0
    %157 = vmatprep.subr.mxu0 0.0
    %158 = vmatpush2.msra.mxu0 0.0
    %159 = vmatprep.subr.mxu0 0.0
    %160 = vmatpush2.msra.mxu0 0.0
    %161 = vmatprep.mubr.f32.mxu0 0.0
    %162 = vmatmul.mubr.f32.gmra.mxu0 %v95
    %v163 = vpop.f32.mrf.mxu0
    %v164 = vadd.f32 0.0, %v163
    %v165 = vpop.f32.mrf.mxu0
    %166 = vdwg.mxu0
    %v168 = vsel %vm93, %v92, 0
    %170 = vmatprep.subr.mxu0 0.0
    %171 = vmatpush1.msra.mxu0 0.0
    %172 = vmatprep.subr.mxu0 0.0
    %173 = vmatpush1.msra.mxu0 0.0
    %174 = vmatprep.subr.mxu0 0.0
    %175 = vmatpush1.msra.mxu0 0.0
    %176 = vmatprep.subr.mxu0 0.0
    %177 = vmatpush1.msra.mxu0 0.0
    %178 = vmatprep.subr.mxu0 0.0
    %179 = vmatpush1.msra.mxu0 0.0
    %180 = vmatprep.subr.mxu0 0.0
    %181 = vmatpush1.msra.mxu0 0.0
    %182 = vmatprep.subr.mxu0 0.0
    %183 = vmatpush1.msra.mxu0 0.0
    %184 = vmatprep.subr.mxu0 0.0
    %185 = vmatpush1.msra.mxu0 0.0
    %186 = vmatprep.subr.mxu0 0.0
    %187 = vmatpush1.msra.mxu0 0.0
    %188 = vmatprep.subr.mxu0 0.0
    %189 = vmatpush1.msra.mxu0 0.0
    %190 = vmatprep.subr.mxu0 0.0
    %191 = vmatpush1.msra.mxu0 0.0
    %192 = vmatprep.subr.mxu0 0.0
    %193 = vmatpush1.msra.mxu0 0.0
    %194 = vmatprep.subr.mxu0 0.0
    %195 = vmatpush1.msra.mxu0 %v65
    %196 = vmatprep.subr.mxu0 0.0
    %197 = vmatpush1.msra.mxu0 %v64
    %198 = vmatprep.subr.mxu0 0.0
    %199 = vmatpush1.msra.mxu0 %v63
    %200 = vmatprep.subr.mxu0 0.0
    %201 = vmatpush1.msra.mxu0 %v62
    %202 = vmatprep.subr.mxu0 0.0
    %203 = vmatpush2.msra.mxu0 0.0
    %204 = vmatprep.subr.mxu0 0.0
    %205 = vmatpush2.msra.mxu0 0.0
    %206 = vmatprep.subr.mxu0 0.0
    %207 = vmatpush2.msra.mxu0 0.0
    %208 = vmatprep.subr.mxu0 0.0
    %209 = vmatpush2.msra.mxu0 0.0
    %210 = vmatprep.subr.mxu0 0.0
    %211 = vmatpush2.msra.mxu0 0.0
    %212 = vmatprep.subr.mxu0 0.0
    %213 = vmatpush2.msra.mxu0 0.0
    %214 = vmatprep.subr.mxu0 0.0
    %215 = vmatpush2.msra.mxu0 0.0
    %216 = vmatprep.subr.mxu0 0.0
    %217 = vmatpush2.msra.mxu0 0.0
    %218 = vmatprep.subr.mxu0 0.0
    %219 = vmatpush2.msra.mxu0 0.0
    %220 = vmatprep.subr.mxu0 0.0
    %221 = vmatpush2.msra.mxu0 0.0
    %222 = vmatprep.subr.mxu0 0.0
    %223 = vmatpush2.msra.mxu0 0.0
    %224 = vmatprep.subr.mxu0 0.0
    %225 = vmatpush2.msra.mxu0 0.0
    %226 = vmatprep.subr.mxu0 0.0
    %227 = vmatpush2.msra.mxu0 0.0
    %228 = vmatprep.subr.mxu0 0.0
    %229 = vmatpush2.msra.mxu0 0.0
    %230 = vmatprep.subr.mxu0 0.0
    %231 = vmatpush2.msra.mxu0 0.0
    %232 = vmatprep.subr.mxu0 0.0
    %233 = vmatpush2.msra.mxu0 0.0
    %234 = vmatprep.mubr.f32.mxu0 0.0
    %235 = vmatmul.mubr.f32.gmra.mxu0 %v168
    %v236 = vpop.f32.mrf.mxu0
    %v237 = vadd.f32 %v164, %v236
    %v238 = vpop.f32.mrf.mxu0
    %239 = vdwg.mxu0
    %v240 = vadd.f32 %v237, %v83
    %v241 = vxor.u32 %v240, 2147483648
    %v242 = vmul.f32 %v241, 1.442695
    %v243 = vpow.pop %v242
    %v244 = vadd.f32 %v243, 1.0
    %v245 = vrcp.pop %v244
    %v246 = vmul.f32 1.0, %v245
    %v247 = vtanh.pop %v240
    %v248 = vmul.f32 %v246, 0.0
    %250 = vrot.lane.b32.xlu0 %v247, 64
    %v251 = vpop.permute.xlu0 %250
    %v253 = vmul.f32 %v246, %v251
    %255 = vrot.lane.b32.xlu0 %v253, 32
    %v256 = vpop.permute.xlu0 %255
    %v258 = vadd.f32 %v248, %v256
    %v259 = vtanh.pop %v258
    %261 = vrot.lane.b32.xlu0 %v259, 64
    %v262 = vpop.permute.xlu0 %261
    %v264 = vmul.f32 %v246, %v262
    %265 = vmatprep.subr.mxu0 0.0
    %266 = vmatpush1.msra.mxu0 0.0
    %267 = vmatprep.subr.mxu0 0.0
    %268 = vmatpush1.msra.mxu0 0.0
    %269 = vmatprep.subr.mxu0 0.0
    %270 = vmatpush1.msra.mxu0 0.0
    %271 = vmatprep.subr.mxu0 0.0
    %272 = vmatpush1.msra.mxu0 0.0
    %273 = vmatprep.subr.mxu0 0.0
    %274 = vmatpush1.msra.mxu0 0.0
    %275 = vmatprep.subr.mxu0 0.0
    %276 = vmatpush1.msra.mxu0 0.0
    %277 = vmatprep.subr.mxu0 0.0
    %278 = vmatpush1.msra.mxu0 0.0
    %279 = vmatprep.subr.mxu0 0.0
    %280 = vmatpush1.msra.mxu0 0.0
    %281 = vmatprep.subr.mxu0 0.0
    %282 = vmatpush1.msra.mxu0 0.0
    %283 = vmatprep.subr.mxu0 0.0
    %284 = vmatpush1.msra.mxu0 0.0
    %285 = vmatprep.subr.mxu0 0.0
    %286 = vmatpush1.msra.mxu0 0.0
    %287 = vmatprep.subr.mxu0 0.0
    %288 = vmatpush1.msra.mxu0 0.0
    %289 = vmatprep.subr.mxu0 0.0
    %290 = vmatpush1.msra.mxu0 %v77
    %291 = vmatprep.subr.mxu0 0.0
    %292 = vmatpush1.msra.mxu0 %v76
    %293 = vmatprep.subr.mxu0 0.0
    %294 = vmatpush1.msra.mxu0 %v75
    %295 = vmatprep.subr.mxu0 0.0
    %296 = vmatpush1.msra.mxu0 %v74
    %297 = vmatprep.subr.mxu0 0.0
    %298 = vmatpush2.msra.mxu0 0.0
    %299 = vmatprep.subr.mxu0 0.0
    %300 = vmatpush2.msra.mxu0 0.0
    %301 = vmatprep.subr.mxu0 0.0
    %302 = vmatpush2.msra.mxu0 0.0
    %303 = vmatprep.subr.mxu0 0.0
    %304 = vmatpush2.msra.mxu0 0.0
    %305 = vmatprep.subr.mxu0 0.0
    %306 = vmatpush2.msra.mxu0 0.0
    %307 = vmatprep.subr.mxu0 0.0
    %308 = vmatpush2.msra.mxu0 0.0
    %309 = vmatprep.subr.mxu0 0.0
    %310 = vmatpush2.msra.mxu0 0.0
    %311 = vmatprep.subr.mxu0 0.0
    %312 = vmatpush2.msra.mxu0 0.0
    %313 = vmatprep.subr.mxu0 0.0
    %314 = vmatpush2.msra.mxu0 0.0
    %315 = vmatprep.subr.mxu0 0.0
    %316 = vmatpush2.msra.mxu0 0.0
    %317 = vmatprep.subr.mxu0 0.0
    %318 = vmatpush2.msra.mxu0 0.0
    %319 = vmatprep.subr.mxu0 0.0
    %320 = vmatpush2.msra.mxu0 0.0
    %321 = vmatprep.subr.mxu0 0.0
    %322 = vmatpush2.msra.mxu0 0.0
    %323 = vmatprep.subr.mxu0 0.0
    %324 = vmatpush2.msra.mxu0 0.0
    %325 = vmatprep.subr.mxu0 0.0
    %326 = vmatpush2.msra.mxu0 0.0
    %327 = vmatprep.subr.mxu0 0.0
    %328 = vmatpush2.msra.mxu0 0.0
    %329 = vmatprep.mubr.f32.mxu0 0.0
    %330 = vmatmul.mubr.f32.gmra.mxu0 %v95
    %v331 = vpop.f32.mrf.mxu0
    %v332 = vadd.f32 0.0, %v331
    %v333 = vpop.f32.mrf.mxu0
    %334 = vdwg.mxu0
    %336 = vrot.lane.b32.xlu0 %v264, 32
    %v337 = vpop.permute.xlu0 %336
    %v338 = vsel %vm93, %v337, 0
    %340 = vmatprep.subr.mxu0 0.0
    %341 = vmatpush1.msra.mxu0 0.0
    %342 = vmatprep.subr.mxu0 0.0
    %343 = vmatpush1.msra.mxu0 0.0
    %344 = vmatprep.subr.mxu0 0.0
    %345 = vmatpush1.msra.mxu0 0.0
    %346 = vmatprep.subr.mxu0 0.0
    %347 = vmatpush1.msra.mxu0 0.0
    %348 = vmatprep.subr.mxu0 0.0
    %349 = vmatpush1.msra.mxu0 0.0
    %350 = vmatprep.subr.mxu0 0.0
    %351 = vmatpush1.msra.mxu0 0.0
    %352 = vmatprep.subr.mxu0 0.0
    %353 = vmatpush1.msra.mxu0 0.0
    %354 = vmatprep.subr.mxu0 0.0
    %355 = vmatpush1.msra.mxu0 0.0
    %356 = vmatprep.subr.mxu0 0.0
    %357 = vmatpush1.msra.mxu0 0.0
    %358 = vmatprep.subr.mxu0 0.0
    %359 = vmatpush1.msra.mxu0 0.0
    %360 = vmatprep.subr.mxu0 0.0
    %361 = vmatpush1.msra.mxu0 0.0
    %362 = vmatprep.subr.mxu0 0.0
    %363 = vmatpush1.msra.mxu0 0.0
    %364 = vmatprep.subr.mxu0 0.0
    %365 = vmatpush1.msra.mxu0 %v73
    %366 = vmatprep.subr.mxu0 0.0
    %367 = vmatpush1.msra.mxu0 %v72
    %368 = vmatprep.subr.mxu0 0.0
    %369 = vmatpush1.msra.mxu0 %v71
    %370 = vmatprep.subr.mxu0 0.0
    %371 = vmatpush1.msra.mxu0 %v70
    %372 = vmatprep.subr.mxu0 0.0
    %373 = vmatpush2.msra.mxu0 0.0
    %374 = vmatprep.subr.mxu0 0.0
    %375 = vmatpush2.msra.mxu0 0.0
    %376 = vmatprep.subr.mxu0 0.0
    %377 = vmatpush2.msra.mxu0 0.0
    %378 = vmatprep.subr.mxu0 0.0
    %379 = vmatpush2.msra.mxu0 0.0
    %380 = vmatprep.subr.mxu0 0.0
    %381 = vmatpush2.msra.mxu0 0.0
    %382 = vmatprep.subr.mxu0 0.0
    %383 = vmatpush2.msra.mxu0 0.0
    %384 = vmatprep.subr.mxu0 0.0
    %385 = vmatpush2.msra.mxu0 0.0
    %386 = vmatprep.subr.mxu0 0.0
    %387 = vmatpush2.msra.mxu0 0.0
    %388 = vmatprep.subr.mxu0 0.0
    %389 = vmatpush2.msra.mxu0 0.0
    %390 = vmatprep.subr.mxu0 0.0
    %391 = vmatpush2.msra.mxu0 0.0
    %392 = vmatprep.subr.mxu0 0.0
    %393 = vmatpush2.msra.mxu0 0.0
    %394 = vmatprep.subr.mxu0 0.0
    %395 = vmatpush2.msra.mxu0 0.0
    %396 = vmatprep.subr.mxu0 0.0
    %397 = vmatpush2.msra.mxu0 0.0
    %398 = vmatprep.subr.mxu0 0.0
    %399 = vmatpush2.msra.mxu0 0.0
    %400 = vmatprep.subr.mxu0 0.0
    %401 = vmatpush2.msra.mxu0 0.0
    %402 = vmatprep.subr.mxu0 0.0
    %403 = vmatpush2.msra.mxu0 0.0
    %404 = vmatprep.mubr.f32.mxu0 0.0
    %405 = vmatmul.mubr.f32.gmra.mxu0 %v338
    %v406 = vpop.f32.mrf.mxu0
    %v407 = vadd.f32 %v332, %v406
    %v408 = vpop.f32.mrf.mxu0
    %409 = vdwg.mxu0
    %v410 = vadd.f32 %v407, %v90
    %v411 = vxor.u32 %v410, 2147483648
    %v412 = vmul.f32 %v411, 1.442695
    %v413 = vpow.pop %v412
    %v414 = vadd.f32 %v413, 1.0
    %v415 = vrcp.pop %v414
    %v416 = vmul.f32 1.0, %v415
    %v417 = vtanh.pop %v410
    %v418 = vmul.f32 %v416, 0.0
    %420 = vrot.lane.b32.xlu0 %v417, 64
    %v421 = vpop.permute.xlu0 %420
    %v423 = vmul.f32 %v416, %v421
    %425 = vrot.lane.b32.xlu0 %v423, 32
    %v426 = vpop.permute.xlu0 %425
    %v428 = vadd.f32 %v418, %v426
    %v429 = vtanh.pop %v428
    %431 = vrot.lane.b32.xlu0 %v429, 64
    %v432 = vpop.permute.xlu0 %431
    %v434 = vmul.f32 %v416, %v432
    %s435 = scalar_lea.vmem %s1, 8
    %v436 = vld [vmem:[%s435] sm:$0xff]
    %437 = vmatprep.subr.mxu0 0.0
    %438 = vmatpush1.msra.mxu0 0.0
    %439 = vmatprep.subr.mxu0 0.0
    %440 = vmatpush1.msra.mxu0 0.0
    %441 = vmatprep.subr.mxu0 0.0
    %442 = vmatpush1.msra.mxu0 0.0
    %443 = vmatprep.subr.mxu0 0.0
    %444 = vmatpush1.msra.mxu0 0.0
    %445 = vmatprep.subr.mxu0 0.0
    %446 = vmatpush1.msra.mxu0 0.0
    %447 = vmatprep.subr.mxu0 0.0
    %448 = vmatpush1.msra.mxu0 0.0
    %449 = vmatprep.subr.mxu0 0.0
    %450 = vmatpush1.msra.mxu0 0.0
    %451 = vmatprep.subr.mxu0 0.0
    %452 = vmatpush1.msra.mxu0 0.0
    %453 = vmatprep.subr.mxu0 0.0
    %454 = vmatpush1.msra.mxu0 0.0
    %455 = vmatprep.subr.mxu0 0.0
    %456 = vmatpush1.msra.mxu0 0.0
    %457 = vmatprep.subr.mxu0 0.0
    %458 = vmatpush1.msra.mxu0 0.0
    %459 = vmatprep.subr.mxu0 0.0
    %460 = vmatpush1.msra.mxu0 0.0
    %461 = vmatprep.subr.mxu0 0.0
    %462 = vmatpush1.msra.mxu0 %v69
    %463 = vmatprep.subr.mxu0 0.0
    %464 = vmatpush1.msra.mxu0 %v68
    %465 = vmatprep.subr.mxu0 0.0
    %466 = vmatpush1.msra.mxu0 %v67
    %467 = vmatprep.subr.mxu0 0.0
    %468 = vmatpush1.msra.mxu0 %v66
    %469 = vmatprep.subr.mxu0 0.0
    %470 = vmatpush2.msra.mxu0 0.0
    %471 = vmatprep.subr.mxu0 0.0
    %472 = vmatpush2.msra.mxu0 0.0
    %473 = vmatprep.subr.mxu0 0.0
    %474 = vmatpush2.msra.mxu0 0.0
    %475 = vmatprep.subr.mxu0 0.0
    %476 = vmatpush2.msra.mxu0 0.0
    %477 = vmatprep.subr.mxu0 0.0
    %478 = vmatpush2.msra.mxu0 0.0
    %479 = vmatprep.subr.mxu0 0.0
    %480 = vmatpush2.msra.mxu0 0.0
    %481 = vmatprep.subr.mxu0 0.0
    %482 = vmatpush2.msra.mxu0 0.0
    %483 = vmatprep.subr.mxu0 0.0
    %484 = vmatpush2.msra.mxu0 0.0
    %485 = vmatprep.subr.mxu0 0.0
    %486 = vmatpush2.msra.mxu0 0.0
    %487 = vmatprep.subr.mxu0 0.0
    %488 = vmatpush2.msra.mxu0 0.0
    %489 = vmatprep.subr.mxu0 0.0
    %490 = vmatpush2.msra.mxu0 0.0
    %491 = vmatprep.subr.mxu0 0.0
    %492 = vmatpush2.msra.mxu0 0.0
    %493 = vmatprep.subr.mxu0 0.0
    %494 = vmatpush2.msra.mxu0 0.0
    %495 = vmatprep.subr.mxu0 0.0
    %496 = vmatpush2.msra.mxu0 0.0
    %497 = vmatprep.subr.mxu0 0.0
    %498 = vmatpush2.msra.mxu0 0.0
    %499 = vmatprep.subr.mxu0 0.0
    %500 = vmatpush2.msra.mxu0 0.0
    %501 = vmatprep.mubr.f32.mxu0 0.0
    %502 = vmatmul.mubr.f32.gmra.mxu0 %v338
    %v503 = vpop.f32.mrf.mxu0
    %v504 = vadd.f32 0.0, %v503
    %v505 = vpop.f32.mrf.mxu0
    %506 = vdwg.mxu0
    %v508 = vsel %vm93, %v436, 0
    %510 = vmatprep.subr.mxu0 0.0
    %511 = vmatpush1.msra.mxu0 0.0
    %512 = vmatprep.subr.mxu0 0.0
    %513 = vmatpush1.msra.mxu0 0.0
    %514 = vmatprep.subr.mxu0 0.0
    %515 = vmatpush1.msra.mxu0 0.0
    %516 = vmatprep.subr.mxu0 0.0
    %517 = vmatpush1.msra.mxu0 0.0
    %518 = vmatprep.subr.mxu0 0.0
    %519 = vmatpush1.msra.mxu0 0.0
    %520 = vmatprep.subr.mxu0 0.0
    %521 = vmatpush1.msra.mxu0 0.0
    %522 = vmatprep.subr.mxu0 0.0
    %523 = vmatpush1.msra.mxu0 0.0
    %524 = vmatprep.subr.mxu0 0.0
    %525 = vmatpush1.msra.mxu0 0.0
    %526 = vmatprep.subr.mxu0 0.0
    %527 = vmatpush1.msra.mxu0 0.0
    %528 = vmatprep.subr.mxu0 0.0
    %529 = vmatpush1.msra.mxu0 0.0
    %530 = vmatprep.subr.mxu0 0.0
    %531 = vmatpush1.msra.mxu0 0.0
    %532 = vmatprep.subr.mxu0 0.0
    %533 = vmatpush1.msra.mxu0 0.0
    %534 = vmatprep.subr.mxu0 0.0
    %535 = vmatpush1.msra.mxu0 %v65
    %536 = vmatprep.subr.mxu0 0.0
    %537 = vmatpush1.msra.mxu0 %v64
    %538 = vmatprep.subr.mxu0 0.0
    %539 = vmatpush1.msra.mxu0 %v63
    %540 = vmatprep.subr.mxu0 0.0
    %541 = vmatpush1.msra.mxu0 %v62
    %542 = vmatprep.subr.mxu0 0.0
    %543 = vmatpush2.msra.mxu0 0.0
    %544 = vmatprep.subr.mxu0 0.0
    %545 = vmatpush2.msra.mxu0 0.0
    %546 = vmatprep.subr.mxu0 0.0
    %547 = vmatpush2.msra.mxu0 0.0
    %548 = vmatprep.subr.mxu0 0.0
    %549 = vmatpush2.msra.mxu0 0.0
    %550 = vmatprep.subr.mxu0 0.0
    %551 = vmatpush2.msra.mxu0 0.0
    %552 = vmatprep.subr.mxu0 0.0
    %553 = vmatpush2.msra.mxu0 0.0
    %554 = vmatprep.subr.mxu0 0.0
    %555 = vmatpush2.msra.mxu0 0.0
    %556 = vmatprep.subr.mxu0 0.0
    %557 = vmatpush2.msra.mxu0 0.0
    %558 = vmatprep.subr.mxu0 0.0
    %559 = vmatpush2.msra.mxu0 0.0
    %560 = vmatprep.subr.mxu0 0.0
    %561 = vmatpush2.msra.mxu0 0.0
    %562 = vmatprep.subr.mxu0 0.0
    %563 = vmatpush2.msra.mxu0 0.0
    %564 = vmatprep.subr.mxu0 0.0
    %565 = vmatpush2.msra.mxu0 0.0
    %566 = vmatprep.subr.mxu0 0.0
    %567 = vmatpush2.msra.mxu0 0.0
    %568 = vmatprep.subr.mxu0 0.0
    %569 = vmatpush2.msra.mxu0 0.0
    %570 = vmatprep.subr.mxu0 0.0
    %571 = vmatpush2.msra.mxu0 0.0
    %572 = vmatprep.subr.mxu0 0.0
    %573 = vmatpush2.msra.mxu0 0.0
    %574 = vmatprep.mubr.f32.mxu0 0.0
    %575 = vmatmul.mubr.f32.gmra.mxu0 %v508
    %v576 = vpop.f32.mrf.mxu0
    %v577 = vadd.f32 %v504, %v576
    %v578 = vpop.f32.mrf.mxu0
    %579 = vdwg.mxu0
    %v580 = vadd.f32 %v577, %v83
    %v581 = vxor.u32 %v580, 2147483648
    %v582 = vmul.f32 %v581, 1.442695
    %v583 = vpow.pop %v582
    %v584 = vadd.f32 %v583, 1.0
    %v585 = vrcp.pop %v584
    %v586 = vmul.f32 1.0, %v585
    %v587 = vtanh.pop %v580
    %v588 = vmul.f32 %v586, %v258
    %590 = vrot.lane.b32.xlu0 %v587, 64
    %v591 = vpop.permute.xlu0 %590
    %v593 = vmul.f32 %v586, %v591
    %595 = vrot.lane.b32.xlu0 %v593, 32
    %v596 = vpop.permute.xlu0 %595
    %v598 = vadd.f32 %v588, %v596
    %v599 = vtanh.pop %v598
    %601 = vrot.lane.b32.xlu0 %v599, 64
    %v602 = vpop.permute.xlu0 %601
    %v604 = vmul.f32 %v586, %v602
    %606 = vrot.lane.b32.xlu0 %v434, 32
    %v607 = vpop.permute.xlu0 %606
    %v608 = vsel %vm93, %v607, 0
    %610 = vmatprep.subr.mxu0 0.0
    %611 = vmatpush1.msra.mxu0 0.0
    %612 = vmatprep.subr.mxu0 0.0
    %613 = vmatpush1.msra.mxu0 0.0
    %614 = vmatprep.subr.mxu0 0.0
    %615 = vmatpush1.msra.mxu0 0.0
    %616 = vmatprep.subr.mxu0 0.0
    %617 = vmatpush1.msra.mxu0 0.0
    %618 = vmatprep.subr.mxu0 0.0
    %619 = vmatpush1.msra.mxu0 0.0
    %620 = vmatprep.subr.mxu0 0.0
    %621 = vmatpush1.msra.mxu0 0.0
    %622 = vmatprep.subr.mxu0 0.0
    %623 = vmatpush1.msra.mxu0 0.0
    %624 = vmatprep.subr.mxu0 0.0
    %625 = vmatpush1.msra.mxu0 0.0
    %626 = vmatprep.subr.mxu0 0.0
    %627 = vmatpush1.msra.mxu0 0.0
    %628 = vmatprep.subr.mxu0 0.0
    %629 = vmatpush1.msra.mxu0 0.0
    %630 = vmatprep.subr.mxu0 0.0
    %631 = vmatpush1.msra.mxu0 0.0
    %632 = vmatprep.subr.mxu0 0.0
    %633 = vmatpush1.msra.mxu0 0.0
    %634 = vmatprep.subr.mxu0 0.0
    %635 = vmatpush1.msra.mxu0 %v77
    %636 = vmatprep.subr.mxu0 0.0
    %637 = vmatpush1.msra.mxu0 %v76
    %638 = vmatprep.subr.mxu0 0.0
    %639 = vmatpush1.msra.mxu0 %v75
    %640 = vmatprep.subr.mxu0 0.0
    %641 = vmatpush1.msra.mxu0 %v74
    %642 = vmatprep.subr.mxu0 0.0
    %643 = vmatpush2.msra.mxu0 0.0
    %644 = vmatprep.subr.mxu0 0.0
    %645 = vmatpush2.msra.mxu0 0.0
    %646 = vmatprep.subr.mxu0 0.0
    %647 = vmatpush2.msra.mxu0 0.0
    %648 = vmatprep.subr.mxu0 0.0
    %649 = vmatpush2.msra.mxu0 0.0
    %650 = vmatprep.subr.mxu0 0.0
    %651 = vmatpush2.msra.mxu0 0.0
    %652 = vmatprep.subr.mxu0 0.0
    %653 = vmatpush2.msra.mxu0 0.0
    %654 = vmatprep.subr.mxu0 0.0
    %655 = vmatpush2.msra.mxu0 0.0
    %656 = vmatprep.subr.mxu0 0.0
    %657 = vmatpush2.msra.mxu0 0.0
    %658 = vmatprep.subr.mxu0 0.0
    %659 = vmatpush2.msra.mxu0 0.0
    %660 = vmatprep.subr.mxu0 0.0
    %661 = vmatpush2.msra.mxu0 0.0
    %662 = vmatprep.subr.mxu0 0.0
    %663 = vmatpush2.msra.mxu0 0.0
    %664 = vmatprep.subr.mxu0 0.0
    %665 = vmatpush2.msra.mxu0 0.0
    %666 = vmatprep.subr.mxu0 0.0
    %667 = vmatpush2.msra.mxu0 0.0
    %668 = vmatprep.subr.mxu0 0.0
    %669 = vmatpush2.msra.mxu0 0.0
    %670 = vmatprep.subr.mxu0 0.0
    %671 = vmatpush2.msra.mxu0 0.0
    %672 = vmatprep.subr.mxu0 0.0
    %673 = vmatpush2.msra.mxu0 0.0
    %674 = vmatprep.mubr.f32.mxu0 0.0
    %675 = vmatmul.mubr.f32.gmra.mxu0 %v608
    %v676 = vpop.f32.mrf.mxu0
    %v677 = vadd.f32 0.0, %v676
    %v678 = vpop.f32.mrf.mxu0
    %679 = vdwg.mxu0
    %681 = vrot.lane.b32.xlu0 %v604, 32
    %v682 = vpop.permute.xlu0 %681
    %v683 = vsel %vm93, %v682, 0
    %685 = vmatprep.subr.mxu0 0.0
    %686 = vmatpush1.msra.mxu0 0.0
    %687 = vmatprep.subr.mxu0 0.0
    %688 = vmatpush1.msra.mxu0 0.0
    %689 = vmatprep.subr.mxu0 0.0
    %690 = vmatpush1.msra.mxu0 0.0
    %691 = vmatprep.subr.mxu0 0.0
    %692 = vmatpush1.msra.mxu0 0.0
    %693 = vmatprep.subr.mxu0 0.0
    %694 = vmatpush1.msra.mxu0 0.0
    %695 = vmatprep.subr.mxu0 0.0
    %696 = vmatpush1.msra.mxu0 0.0
    %697 = vmatprep.subr.mxu0 0.0
    %698 = vmatpush1.msra.mxu0 0.0
    %699 = vmatprep.subr.mxu0 0.0
    %700 = vmatpush1.msra.mxu0 0.0
    %701 = vmatprep.subr.mxu0 0.0
    %702 = vmatpush1.msra.mxu0 0.0
    %703 = vmatprep.subr.mxu0 0.0
    %704 = vmatpush1.msra.mxu0 0.0
    %705 = vmatprep.subr.mxu0 0.0
    %706 = vmatpush1.msra.mxu0 0.0
    %707 = vmatprep.subr.mxu0 0.0
    %708 = vmatpush1.msra.mxu0 0.0
    %709 = vmatprep.subr.mxu0 0.0
    %710 = vmatpush1.msra.mxu0 %v73
    %711 = vmatprep.subr.mxu0 0.0
    %712 = vmatpush1.msra.mxu0 %v72
    %713 = vmatprep.subr.mxu0 0.0
    %714 = vmatpush1.msra.mxu0 %v71
    %715 = vmatprep.subr.mxu0 0.0
    %716 = vmatpush1.msra.mxu0 %v70
    %717 = vmatprep.subr.mxu0 0.0
    %718 = vmatpush2.msra.mxu0 0.0
    %719 = vmatprep.subr.mxu0 0.0
    %720 = vmatpush2.msra.mxu0 0.0
    %721 = vmatprep.subr.mxu0 0.0
    %722 = vmatpush2.msra.mxu0 0.0
    %723 = vmatprep.subr.mxu0 0.0
    %724 = vmatpush2.msra.mxu0 0.0
    %725 = vmatprep.subr.mxu0 0.0
    %726 = vmatpush2.msra.mxu0 0.0
    %727 = vmatprep.subr.mxu0 0.0
    %728 = vmatpush2.msra.mxu0 0.0
    %729 = vmatprep.subr.mxu0 0.0
    %730 = vmatpush2.msra.mxu0 0.0
    %731 = vmatprep.subr.mxu0 0.0
    %732 = vmatpush2.msra.mxu0 0.0
    %733 = vmatprep.subr.mxu0 0.0
    %734 = vmatpush2.msra.mxu0 0.0
    %735 = vmatprep.subr.mxu0 0.0
    %736 = vmatpush2.msra.mxu0 0.0
    %737 = vmatprep.subr.mxu0 0.0
    %738 = vmatpush2.msra.mxu0 0.0
    %739 = vmatprep.subr.mxu0 0.0
    %740 = vmatpush2.msra.mxu0 0.0
    %741 = vmatprep.subr.mxu0 0.0
    %742 = vmatpush2.msra.mxu0 0.0
    %743 = vmatprep.subr.mxu0 0.0
    %744 = vmatpush2.msra.mxu0 0.0
    %745 = vmatprep.subr.mxu0 0.0
    %746 = vmatpush2.msra.mxu0 0.0
    %747 = vmatprep.subr.mxu0 0.0
    %748 = vmatpush2.msra.mxu0 0.0
    %749 = vmatprep.mubr.f32.mxu0 0.0
    %750 = vmatmul.mubr.f32.gmra.mxu0 %v683
    %v751 = vpop.f32.mrf.mxu0
    %v752 = vadd.f32 %v677, %v751
    %v753 = vpop.f32.mrf.mxu0
    %754 = vdwg.mxu0
    %v755 = vadd.f32 %v752, %v90
    %v756 = vxor.u32 %v755, 2147483648
    %v757 = vmul.f32 %v756, 1.442695
    %v758 = vpow.pop %v757
    %v759 = vadd.f32 %v758, 1.0
    %v760 = vrcp.pop %v759
    %v761 = vmul.f32 1.0, %v760
    %v762 = vtanh.pop %v755
    %v763 = vmul.f32 %v761, %v428
    %765 = vrot.lane.b32.xlu0 %v762, 64
    %v766 = vpop.permute.xlu0 %765
    %v768 = vmul.f32 %v761, %v766
    %770 = vrot.lane.b32.xlu0 %v768, 32
    %v771 = vpop.permute.xlu0 %770
    %v773 = vadd.f32 %v763, %v771
    %v774 = vtanh.pop %v773
    %776 = vrot.lane.b32.xlu0 %v774, 64
    %v777 = vpop.permute.xlu0 %776
    %v779 = vmul.f32 %v761, %v777
    %s780 = scalar_lea.vmem %s1, 16
    %v781 = vld [vmem:[%s780] sm:$0xff]
    %782 = vmatprep.subr.mxu0 0.0
    %783 = vmatpush1.msra.mxu0 0.0
    %784 = vmatprep.subr.mxu0 0.0
    %785 = vmatpush1.msra.mxu0 0.0
    %786 = vmatprep.subr.mxu0 0.0
    %787 = vmatpush1.msra.mxu0 0.0
    %788 = vmatprep.subr.mxu0 0.0
    %789 = vmatpush1.msra.mxu0 0.0
    %790 = vmatprep.subr.mxu0 0.0
    %791 = vmatpush1.msra.mxu0 0.0
    %792 = vmatprep.subr.mxu0 0.0
    %793 = vmatpush1.msra.mxu0 0.0
    %794 = vmatprep.subr.mxu0 0.0
    %795 = vmatpush1.msra.mxu0 0.0
    %796 = vmatprep.subr.mxu0 0.0
    %797 = vmatpush1.msra.mxu0 0.0
    %798 = vmatprep.subr.mxu0 0.0
    %799 = vmatpush1.msra.mxu0 0.0
    %800 = vmatprep.subr.mxu0 0.0
    %801 = vmatpush1.msra.mxu0 0.0
    %802 = vmatprep.subr.mxu0 0.0
    %803 = vmatpush1.msra.mxu0 0.0
    %804 = vmatprep.subr.mxu0 0.0
    %805 = vmatpush1.msra.mxu0 0.0
    %806 = vmatprep.subr.mxu0 0.0
    %807 = vmatpush1.msra.mxu0 %v69
    %808 = vmatprep.subr.mxu0 0.0
    %809 = vmatpush1.msra.mxu0 %v68
    %810 = vmatprep.subr.mxu0 0.0
    %811 = vmatpush1.msra.mxu0 %v67
    %812 = vmatprep.subr.mxu0 0.0
    %813 = vmatpush1.msra.mxu0 %v66
    %814 = vmatprep.subr.mxu0 0.0
    %815 = vmatpush2.msra.mxu0 0.0
    %816 = vmatprep.subr.mxu0 0.0
    %817 = vmatpush2.msra.mxu0 0.0
    %818 = vmatprep.subr.mxu0 0.0
    %819 = vmatpush2.msra.mxu0 0.0
    %820 = vmatprep.subr.mxu0 0.0
    %821 = vmatpush2.msra.mxu0 0.0
    %822 = vmatprep.subr.mxu0 0.0
    %823 = vmatpush2.msra.mxu0 0.0
    %824 = vmatprep.subr.mxu0 0.0
    %825 = vmatpush2.msra.mxu0 0.0
    %826 = vmatprep.subr.mxu0 0.0
    %827 = vmatpush2.msra.mxu0 0.0
    %828 = vmatprep.subr.mxu0 0.0
    %829 = vmatpush2.msra.mxu0 0.0
    %830 = vmatprep.subr.mxu0 0.0
    %831 = vmatpush2.msra.mxu0 0.0
    %832 = vmatprep.subr.mxu0 0.0
    %833 = vmatpush2.msra.mxu0 0.0
    %834 = vmatprep.subr.mxu0 0.0
    %835 = vmatpush2.msra.mxu0 0.0
    %836 = vmatprep.subr.mxu0 0.0
    %837 = vmatpush2.msra.mxu0 0.0
    %838 = vmatprep.subr.mxu0 0.0
    %839 = vmatpush2.msra.mxu0 0.0
    %840 = vmatprep.subr.mxu0 0.0
    %841 = vmatpush2.msra.mxu0 0.0
    %842 = vmatprep.subr.mxu0 0.0
    %843 = vmatpush2.msra.mxu0 0.0
    %844 = vmatprep.subr.mxu0 0.0
    %845 = vmatpush2.msra.mxu0 0.0
    %846 = vmatprep.mubr.f32.mxu0 0.0
    %847 = vmatmul.mubr.f32.gmra.mxu0 %v683
    %v848 = vpop.f32.mrf.mxu0
    %v849 = vadd.f32 0.0, %v848
    %v850 = vpop.f32.mrf.mxu0
    %851 = vdwg.mxu0
    %v853 = vsel %vm93, %v781, 0
    %855 = vmatprep.subr.mxu0 0.0
    %856 = vmatpush1.msra.mxu0 0.0
    %857 = vmatprep.subr.mxu0 0.0
    %858 = vmatpush1.msra.mxu0 0.0
    %859 = vmatprep.subr.mxu0 0.0
    %860 = vmatpush1.msra.mxu0 0.0
    %861 = vmatprep.subr.mxu0 0.0
    %862 = vmatpush1.msra.mxu0 0.0
    %863 = vmatprep.subr.mxu0 0.0
    %864 = vmatpush1.msra.mxu0 0.0
    %865 = vmatprep.subr.mxu0 0.0
    %866 = vmatpush1.msra.mxu0 0.0
    %867 = vmatprep.subr.mxu0 0.0
    %868 = vmatpush1.msra.mxu0 0.0
    %869 = vmatprep.subr.mxu0 0.0
    %870 = vmatpush1.msra.mxu0 0.0
    %871 = vmatprep.subr.mxu0 0.0
    %872 = vmatpush1.msra.mxu0 0.0
    %873 = vmatprep.subr.mxu0 0.0
    %874 = vmatpush1.msra.mxu0 0.0
    %875 = vmatprep.subr.mxu0 0.0
    %876 = vmatpush1.msra.mxu0 0.0
    %877 = vmatprep.subr.mxu0 0.0
    %878 = vmatpush1.msra.mxu0 0.0
    %879 = vmatprep.subr.mxu0 0.0
    %880 = vmatpush1.msra.mxu0 %v65
    %881 = vmatprep.subr.mxu0 0.0
    %882 = vmatpush1.msra.mxu0 %v64
    %883 = vmatprep.subr.mxu0 0.0
    %884 = vmatpush1.msra.mxu0 %v63
    %885 = vmatprep.subr.mxu0 0.0
    %886 = vmatpush1.msra.mxu0 %v62
    %887 = vmatprep.subr.mxu0 0.0
    %888 = vmatpush2.msra.mxu0 0.0
    %889 = vmatprep.subr.mxu0 0.0
    %890 = vmatpush2.msra.mxu0 0.0
    %891 = vmatprep.subr.mxu0 0.0
    %892 = vmatpush2.msra.mxu0 0.0
    %893 = vmatprep.subr.mxu0 0.0
    %894 = vmatpush2.msra.mxu0 0.0
    %895 = vmatprep.subr.mxu0 0.0
    %896 = vmatpush2.msra.mxu0 0.0
    %897 = vmatprep.subr.mxu0 0.0
    %898 = vmatpush2.msra.mxu0 0.0
    %899 = vmatprep.subr.mxu0 0.0
    %900 = vmatpush2.msra.mxu0 0.0
    %901 = vmatprep.subr.mxu0 0.0
    %902 = vmatpush2.msra.mxu0 0.0
    %903 = vmatprep.subr.mxu0 0.0
    %904 = vmatpush2.msra.mxu0 0.0
    %905 = vmatprep.subr.mxu0 0.0
    %906 = vmatpush2.msra.mxu0 0.0
    %907 = vmatprep.subr.mxu0 0.0
    %908 = vmatpush2.msra.mxu0 0.0
    %909 = vmatprep.subr.mxu0 0.0
    %910 = vmatpush2.msra.mxu0 0.0
    %911 = vmatprep.subr.mxu0 0.0
    %912 = vmatpush2.msra.mxu0 0.0
    %913 = vmatprep.subr.mxu0 0.0
    %914 = vmatpush2.msra.mxu0 0.0
    %915 = vmatprep.subr.mxu0 0.0
    %916 = vmatpush2.msra.mxu0 0.0
    %917 = vmatprep.subr.mxu0 0.0
    %918 = vmatpush2.msra.mxu0 0.0
    %919 = vmatprep.mubr.f32.mxu0 0.0
    %920 = vmatmul.mubr.f32.gmra.mxu0 %v853
    %v921 = vpop.f32.mrf.mxu0
    %v922 = vadd.f32 %v849, %v921
    %v923 = vpop.f32.mrf.mxu0
    %924 = vdwg.mxu0
    %v925 = vadd.f32 %v922, %v83
    %v926 = vxor.u32 %v925, 2147483648
    %v927 = vmul.f32 %v926, 1.442695
    %v928 = vpow.pop %v927
    %v929 = vadd.f32 %v928, 1.0
    %v930 = vrcp.pop %v929
    %v931 = vmul.f32 1.0, %v930
    %v932 = vtanh.pop %v925
    %v933 = vmul.f32 %v931, %v598
    %935 = vrot.lane.b32.xlu0 %v932, 64
    %v936 = vpop.permute.xlu0 %935
    %v938 = vmul.f32 %v931, %v936
    %940 = vrot.lane.b32.xlu0 %v938, 32
    %v941 = vpop.permute.xlu0 %940
    %v943 = vadd.f32 %v933, %v941
    %v944 = vtanh.pop %v943
    %946 = vrot.lane.b32.xlu0 %v944, 64
    %v947 = vpop.permute.xlu0 %946
    %v949 = vmul.f32 %v931, %v947
    %951 = vrot.lane.b32.xlu0 %v779, 32
    %v952 = vpop.permute.xlu0 %951
    %v953 = vsel %vm93, %v952, 0
    %955 = vmatprep.subr.mxu0 0.0
    %956 = vmatpush1.msra.mxu0 0.0
    %957 = vmatprep.subr.mxu0 0.0
    %958 = vmatpush1.msra.mxu0 0.0
    %959 = vmatprep.subr.mxu0 0.0
    %960 = vmatpush1.msra.mxu0 0.0
    %961 = vmatprep.subr.mxu0 0.0
    %962 = vmatpush1.msra.mxu0 0.0
    %963 = vmatprep.subr.mxu0 0.0
    %964 = vmatpush1.msra.mxu0 0.0
    %965 = vmatprep.subr.mxu0 0.0
    %966 = vmatpush1.msra.mxu0 0.0
    %967 = vmatprep.subr.mxu0 0.0
    %968 = vmatpush1.msra.mxu0 0.0
    %969 = vmatprep.subr.mxu0 0.0
    %970 = vmatpush1.msra.mxu0 0.0
    %971 = vmatprep.subr.mxu0 0.0
    %972 = vmatpush1.msra.mxu0 0.0
    %973 = vmatprep.subr.mxu0 0.0
    %974 = vmatpush1.msra.mxu0 0.0
    %975 = vmatprep.subr.mxu0 0.0
    %976 = vmatpush1.msra.mxu0 0.0
    %977 = vmatprep.subr.mxu0 0.0
    %978 = vmatpush1.msra.mxu0 0.0
    %979 = vmatprep.subr.mxu0 0.0
    %980 = vmatpush1.msra.mxu0 %v77
    %981 = vmatprep.subr.mxu0 0.0
    %982 = vmatpush1.msra.mxu0 %v76
    %983 = vmatprep.subr.mxu0 0.0
    %984 = vmatpush1.msra.mxu0 %v75
    %985 = vmatprep.subr.mxu0 0.0
    %986 = vmatpush1.msra.mxu0 %v74
    %987 = vmatprep.subr.mxu0 0.0
    %988 = vmatpush2.msra.mxu0 0.0
    %989 = vmatprep.subr.mxu0 0.0
    %990 = vmatpush2.msra.mxu0 0.0
    %991 = vmatprep.subr.mxu0 0.0
    %992 = vmatpush2.msra.mxu0 0.0
    %993 = vmatprep.subr.mxu0 0.0
    %994 = vmatpush2.msra.mxu0 0.0
    %995 = vmatprep.subr.mxu0 0.0
    %996 = vmatpush2.msra.mxu0 0.0
    %997 = vmatprep.subr.mxu0 0.0
    %998 = vmatpush2.msra.mxu0 0.0
    %999 = vmatprep.subr.mxu0 0.0
    %1000 = vmatpush2.msra.mxu0 0.0
    %1001 = vmatprep.subr.mxu0 0.0
    %1002 = vmatpush2.msra.mxu0 0.0
    %1003 = vmatprep.subr.mxu0 0.0
    %1004 = vmatpush2.msra.mxu0 0.0
    %1005 = vmatprep.subr.mxu0 0.0
    %1006 = vmatpush2.msra.mxu0 0.0
    %1007 = vmatprep.subr.mxu0 0.0
    %1008 = vmatpush2.msra.mxu0 0.0
    %1009 = vmatprep.subr.mxu0 0.0
    %1010 = vmatpush2.msra.mxu0 0.0
    %1011 = vmatprep.subr.mxu0 0.0
    %1012 = vmatpush2.msra.mxu0 0.0
    %1013 = vmatprep.subr.mxu0 0.0
    %1014 = vmatpush2.msra.mxu0 0.0
    %1015 = vmatprep.subr.mxu0 0.0
    %1016 = vmatpush2.msra.mxu0 0.0
    %1017 = vmatprep.subr.mxu0 0.0
    %1018 = vmatpush2.msra.mxu0 0.0
    %1019 = vmatprep.mubr.f32.mxu0 0.0
    %1020 = vmatmul.mubr.f32.gmra.mxu0 %v953
    %v1021 = vpop.f32.mrf.mxu0
    %v1022 = vadd.f32 0.0, %v1021
    %v1023 = vpop.f32.mrf.mxu0
    %1024 = vdwg.mxu0
    %1026 = vrot.lane.b32.xlu0 %v949, 32
    %v1027 = vpop.permute.xlu0 %1026
    %v1028 = vsel %vm93, %v1027, 0
    %1030 = vmatprep.subr.mxu0 0.0
    %1031 = vmatpush1.msra.mxu0 0.0
    %1032 = vmatprep.subr.mxu0 0.0
    %1033 = vmatpush1.msra.mxu0 0.0
    %1034 = vmatprep.subr.mxu0 0.0
    %1035 = vmatpush1.msra.mxu0 0.0
    %1036 = vmatprep.subr.mxu0 0.0
    %1037 = vmatpush1.msra.mxu0 0.0
    %1038 = vmatprep.subr.mxu0 0.0
    %1039 = vmatpush1.msra.mxu0 0.0
    %1040 = vmatprep.subr.mxu0 0.0
    %1041 = vmatpush1.msra.mxu0 0.0
    %1042 = vmatprep.subr.mxu0 0.0
    %1043 = vmatpush1.msra.mxu0 0.0
    %1044 = vmatprep.subr.mxu0 0.0
    %1045 = vmatpush1.msra.mxu0 0.0
    %1046 = vmatprep.subr.mxu0 0.0
    %1047 = vmatpush1.msra.mxu0 0.0
    %1048 = vmatprep.subr.mxu0 0.0
    %1049 = vmatpush1.msra.mxu0 0.0
    %1050 = vmatprep.subr.mxu0 0.0
    %1051 = vmatpush1.msra.mxu0 0.0
    %1052 = vmatprep.subr.mxu0 0.0
    %1053 = vmatpush1.msra.mxu0 0.0
    %1054 = vmatprep.subr.mxu0 0.0
    %1055 = vmatpush1.msra.mxu0 %v73
    %1056 = vmatprep.subr.mxu0 0.0
    %1057 = vmatpush1.msra.mxu0 %v72
    %1058 = vmatprep.subr.mxu0 0.0
    %1059 = vmatpush1.msra.mxu0 %v71
    %1060 = vmatprep.subr.mxu0 0.0
    %1061 = vmatpush1.msra.mxu0 %v70
    %1062 = vmatprep.subr.mxu0 0.0
    %1063 = vmatpush2.msra.mxu0 0.0
    %1064 = vmatprep.subr.mxu0 0.0
    %1065 = vmatpush2.msra.mxu0 0.0
    %1066 = vmatprep.subr.mxu0 0.0
    %1067 = vmatpush2.msra.mxu0 0.0
    %1068 = vmatprep.subr.mxu0 0.0
    %1069 = vmatpush2.msra.mxu0 0.0
    %1070 = vmatprep.subr.mxu0 0.0
    %1071 = vmatpush2.msra.mxu0 0.0
    %1072 = vmatprep.subr.mxu0 0.0
    %1073 = vmatpush2.msra.mxu0 0.0
    %1074 = vmatprep.subr.mxu0 0.0
    %1075 = vmatpush2.msra.mxu0 0.0
    %1076 = vmatprep.subr.mxu0 0.0
    %1077 = vmatpush2.msra.mxu0 0.0
    %1078 = vmatprep.subr.mxu0 0.0
    %1079 = vmatpush2.msra.mxu0 0.0
    %1080 = vmatprep.subr.mxu0 0.0
    %1081 = vmatpush2.msra.mxu0 0.0
    %1082 = vmatprep.subr.mxu0 0.0
    %1083 = vmatpush2.msra.mxu0 0.0
    %1084 = vmatprep.subr.mxu0 0.0
    %1085 = vmatpush2.msra.mxu0 0.0
    %1086 = vmatprep.subr.mxu0 0.0
    %1087 = vmatpush2.msra.mxu0 0.0
    %1088 = vmatprep.subr.mxu0 0.0
    %1089 = vmatpush2.msra.mxu0 0.0
    %1090 = vmatprep.subr.mxu0 0.0
    %1091 = vmatpush2.msra.mxu0 0.0
    %1092 = vmatprep.subr.mxu0 0.0
    %1093 = vmatpush2.msra.mxu0 0.0
    %1094 = vmatprep.mubr.f32.mxu0 0.0
    %1095 = vmatmul.mubr.f32.gmra.mxu0 %v1028
    %v1096 = vpop.f32.mrf.mxu0
    %v1097 = vadd.f32 %v1022, %v1096
    %v1098 = vpop.f32.mrf.mxu0
    %1099 = vdwg.mxu0
    %v1100 = vadd.f32 %v1097, %v90
    %v1101 = vxor.u32 %v1100, 2147483648
    %v1102 = vmul.f32 %v1101, 1.442695
    %v1103 = vpow.pop %v1102
    %v1104 = vadd.f32 %v1103, 1.0
    %v1105 = vrcp.pop %v1104
    %v1106 = vmul.f32 1.0, %v1105
    %v1107 = vtanh.pop %v1100
    %v1108 = vmul.f32 %v1106, %v773
    %1110 = vrot.lane.b32.xlu0 %v1107, 64
    %v1111 = vpop.permute.xlu0 %1110
    %v1113 = vmul.f32 %v1106, %v1111
    %1115 = vrot.lane.b32.xlu0 %v1113, 32
    %v1116 = vpop.permute.xlu0 %1115
    %v1118 = vadd.f32 %v1108, %v1116
    %v1119 = vtanh.pop %v1118
    %1121 = vrot.lane.b32.xlu0 %v1119, 64
    %v1122 = vpop.permute.xlu0 %1121
    %v1124 = vmul.f32 %v1106, %v1122
    %s1125 = scalar_lea.vmem %s1, 24
    %v1126 = vld [vmem:[%s1125] sm:$0xff]
    %1127 = vmatprep.subr.mxu0 0.0
    %1128 = vmatpush1.msra.mxu0 0.0
    %1129 = vmatprep.subr.mxu0 0.0
    %1130 = vmatpush1.msra.mxu0 0.0
    %1131 = vmatprep.subr.mxu0 0.0
    %1132 = vmatpush1.msra.mxu0 0.0
    %1133 = vmatprep.subr.mxu0 0.0
    %1134 = vmatpush1.msra.mxu0 0.0
    %1135 = vmatprep.subr.mxu0 0.0
    %1136 = vmatpush1.msra.mxu0 0.0
    %1137 = vmatprep.subr.mxu0 0.0
    %1138 = vmatpush1.msra.mxu0 0.0
    %1139 = vmatprep.subr.mxu0 0.0
    %1140 = vmatpush1.msra.mxu0 0.0
    %1141 = vmatprep.subr.mxu0 0.0
    %1142 = vmatpush1.msra.mxu0 0.0
    %1143 = vmatprep.subr.mxu0 0.0
    %1144 = vmatpush1.msra.mxu0 0.0
    %1145 = vmatprep.subr.mxu0 0.0
    %1146 = vmatpush1.msra.mxu0 0.0
    %1147 = vmatprep.subr.mxu0 0.0
    %1148 = vmatpush1.msra.mxu0 0.0
    %1149 = vmatprep.subr.mxu0 0.0
    %1150 = vmatpush1.msra.mxu0 0.0
    %1151 = vmatprep.subr.mxu0 0.0
    %1152 = vmatpush1.msra.mxu0 %v69
    %1153 = vmatprep.subr.mxu0 0.0
    %1154 = vmatpush1.msra.mxu0 %v68
    %1155 = vmatprep.subr.mxu0 0.0
    %1156 = vmatpush1.msra.mxu0 %v67
    %1157 = vmatprep.subr.mxu0 0.0
    %1158 = vmatpush1.msra.mxu0 %v66
    %1159 = vmatprep.subr.mxu0 0.0
    %1160 = vmatpush2.msra.mxu0 0.0
    %1161 = vmatprep.subr.mxu0 0.0
    %1162 = vmatpush2.msra.mxu0 0.0
    %1163 = vmatprep.subr.mxu0 0.0
    %1164 = vmatpush2.msra.mxu0 0.0
    %1165 = vmatprep.subr.mxu0 0.0
    %1166 = vmatpush2.msra.mxu0 0.0
    %1167 = vmatprep.subr.mxu0 0.0
    %1168 = vmatpush2.msra.mxu0 0.0
    %1169 = vmatprep.subr.mxu0 0.0
    %1170 = vmatpush2.msra.mxu0 0.0
    %1171 = vmatprep.subr.mxu0 0.0
    %1172 = vmatpush2.msra.mxu0 0.0
    %1173 = vmatprep.subr.mxu0 0.0
    %1174 = vmatpush2.msra.mxu0 0.0
    %1175 = vmatprep.subr.mxu0 0.0
    %1176 = vmatpush2.msra.mxu0 0.0
    %1177 = vmatprep.subr.mxu0 0.0
    %1178 = vmatpush2.msra.mxu0 0.0
    %1179 = vmatprep.subr.mxu0 0.0
    %1180 = vmatpush2.msra.mxu0 0.0
    %1181 = vmatprep.subr.mxu0 0.0
    %1182 = vmatpush2.msra.mxu0 0.0
    %1183 = vmatprep.subr.mxu0 0.0
    %1184 = vmatpush2.msra.mxu0 0.0
    %1185 = vmatprep.subr.mxu0 0.0
    %1186 = vmatpush2.msra.mxu0 0.0
    %1187 = vmatprep.subr.mxu0 0.0
    %1188 = vmatpush2.msra.mxu0 0.0
    %1189 = vmatprep.subr.mxu0 0.0
    %1190 = vmatpush2.msra.mxu0 0.0
    %1191 = vmatprep.mubr.f32.mxu0 0.0
    %1192 = vmatmul.mubr.f32.gmra.mxu0 %v1028
    %v1193 = vpop.f32.mrf.mxu0
    %v1194 = vadd.f32 0.0, %v1193
    %v1195 = vpop.f32.mrf.mxu0
    %1196 = vdwg.mxu0
    %v1198 = vsel %vm93, %v1126, 0
    %1200 = vmatprep.subr.mxu0 0.0
    %1201 = vmatpush1.msra.mxu0 0.0
    %1202 = vmatprep.subr.mxu0 0.0
    %1203 = vmatpush1.msra.mxu0 0.0
    %1204 = vmatprep.subr.mxu0 0.0
    %1205 = vmatpush1.msra.mxu0 0.0
    %1206 = vmatprep.subr.mxu0 0.0
    %1207 = vmatpush1.msra.mxu0 0.0
    %1208 = vmatprep.subr.mxu0 0.0
    %1209 = vmatpush1.msra.mxu0 0.0
    %1210 = vmatprep.subr.mxu0 0.0
    %1211 = vmatpush1.msra.mxu0 0.0
    %1212 = vmatprep.subr.mxu0 0.0
    %1213 = vmatpush1.msra.mxu0 0.0
    %1214 = vmatprep.subr.mxu0 0.0
    %1215 = vmatpush1.msra.mxu0 0.0
    %1216 = vmatprep.subr.mxu0 0.0
    %1217 = vmatpush1.msra.mxu0 0.0
    %1218 = vmatprep.subr.mxu0 0.0
    %1219 = vmatpush1.msra.mxu0 0.0
    %1220 = vmatprep.subr.mxu0 0.0
    %1221 = vmatpush1.msra.mxu0 0.0
    %1222 = vmatprep.subr.mxu0 0.0
    %1223 = vmatpush1.msra.mxu0 0.0
    %1224 = vmatprep.subr.mxu0 0.0
    %1225 = vmatpush1.msra.mxu0 %v65
    %1226 = vmatprep.subr.mxu0 0.0
    %1227 = vmatpush1.msra.mxu0 %v64
    %1228 = vmatprep.subr.mxu0 0.0
    %1229 = vmatpush1.msra.mxu0 %v63
    %1230 = vmatprep.subr.mxu0 0.0
    %1231 = vmatpush1.msra.mxu0 %v62
    %1232 = vmatprep.subr.mxu0 0.0
    %1233 = vmatpush2.msra.mxu0 0.0
    %1234 = vmatprep.subr.mxu0 0.0
    %1235 = vmatpush2.msra.mxu0 0.0
    %1236 = vmatprep.subr.mxu0 0.0
    %1237 = vmatpush2.msra.mxu0 0.0
    %1238 = vmatprep.subr.mxu0 0.0
    %1239 = vmatpush2.msra.mxu0 0.0
    %1240 = vmatprep.subr.mxu0 0.0
    %1241 = vmatpush2.msra.mxu0 0.0
    %1242 = vmatprep.subr.mxu0 0.0
    %1243 = vmatpush2.msra.mxu0 0.0
    %1244 = vmatprep.subr.mxu0 0.0
    %1245 = vmatpush2.msra.mxu0 0.0
    %1246 = vmatprep.subr.mxu0 0.0
    %1247 = vmatpush2.msra.mxu0 0.0
    %1248 = vmatprep.subr.mxu0 0.0
    %1249 = vmatpush2.msra.mxu0 0.0
    %1250 = vmatprep.subr.mxu0 0.0
    %1251 = vmatpush2.msra.mxu0 0.0
    %1252 = vmatprep.subr.mxu0 0.0
    %1253 = vmatpush2.msra.mxu0 0.0
    %1254 = vmatprep.subr.mxu0 0.0
    %1255 = vmatpush2.msra.mxu0 0.0
    %1256 = vmatprep.subr.mxu0 0.0
    %1257 = vmatpush2.msra.mxu0 0.0
    %1258 = vmatprep.subr.mxu0 0.0
    %1259 = vmatpush2.msra.mxu0 0.0
    %1260 = vmatprep.subr.mxu0 0.0
    %1261 = vmatpush2.msra.mxu0 0.0
    %1262 = vmatprep.subr.mxu0 0.0
    %1263 = vmatpush2.msra.mxu0 0.0
    %1264 = vmatprep.mubr.f32.mxu0 0.0
    %1265 = vmatmul.mubr.f32.gmra.mxu0 %v1198
    %v1266 = vpop.f32.mrf.mxu0
    %v1267 = vadd.f32 %v1194, %v1266
    %v1268 = vpop.f32.mrf.mxu0
    %1269 = vdwg.mxu0
    %v1270 = vadd.f32 %v1267, %v83
    %v1271 = vxor.u32 %v1270, 2147483648
    %v1272 = vmul.f32 %v1271, 1.442695
    %v1273 = vpow.pop %v1272
    %v1274 = vadd.f32 %v1273, 1.0
    %v1275 = vrcp.pop %v1274
    %v1276 = vmul.f32 1.0, %v1275
    %v1277 = vtanh.pop %v1270
    %v1278 = vmul.f32 %v1276, %v943
    %1280 = vrot.lane.b32.xlu0 %v1277, 64
    %v1281 = vpop.permute.xlu0 %1280
    %v1283 = vmul.f32 %v1276, %v1281
    %1285 = vrot.lane.b32.xlu0 %v1283, 32
    %v1286 = vpop.permute.xlu0 %1285
    %v1288 = vadd.f32 %v1278, %v1286
    %v1289 = vtanh.pop %v1288
    %1291 = vrot.lane.b32.xlu0 %v1289, 64
    %v1292 = vpop.permute.xlu0 %1291
    %v1294 = vmul.f32 %v1276, %v1292
    %1296 = vrot.lane.b32.xlu0 %v1124, 32
    %v1297 = vpop.permute.xlu0 %1296
    %v1298 = vsel %vm93, %v1297, 0
    %1300 = vmatprep.subr.mxu0 0.0
    %1301 = vmatpush1.msra.mxu0 0.0
    %1302 = vmatprep.subr.mxu0 0.0
    %1303 = vmatpush1.msra.mxu0 0.0
    %1304 = vmatprep.subr.mxu0 0.0
    %1305 = vmatpush1.msra.mxu0 0.0
    %1306 = vmatprep.subr.mxu0 0.0
    %1307 = vmatpush1.msra.mxu0 0.0
    %1308 = vmatprep.subr.mxu0 0.0
    %1309 = vmatpush1.msra.mxu0 0.0
    %1310 = vmatprep.subr.mxu0 0.0
    %1311 = vmatpush1.msra.mxu0 0.0
    %1312 = vmatprep.subr.mxu0 0.0
    %1313 = vmatpush1.msra.mxu0 0.0
    %1314 = vmatprep.subr.mxu0 0.0
    %1315 = vmatpush1.msra.mxu0 0.0
    %1316 = vmatprep.subr.mxu0 0.0
    %1317 = vmatpush1.msra.mxu0 0.0
    %1318 = vmatprep.subr.mxu0 0.0
    %1319 = vmatpush1.msra.mxu0 0.0
    %1320 = vmatprep.subr.mxu0 0.0
    %1321 = vmatpush1.msra.mxu0 0.0
    %1322 = vmatprep.subr.mxu0 0.0
    %1323 = vmatpush1.msra.mxu0 0.0
    %1324 = vmatprep.subr.mxu0 0.0
    %1325 = vmatpush1.msra.mxu0 %v77
    %1326 = vmatprep.subr.mxu0 0.0
    %1327 = vmatpush1.msra.mxu0 %v76
    %1328 = vmatprep.subr.mxu0 0.0
    %1329 = vmatpush1.msra.mxu0 %v75
    %1330 = vmatprep.subr.mxu0 0.0
    %1331 = vmatpush1.msra.mxu0 %v74
    %1332 = vmatprep.subr.mxu0 0.0
    %1333 = vmatpush2.msra.mxu0 0.0
    %1334 = vmatprep.subr.mxu0 0.0
    %1335 = vmatpush2.msra.mxu0 0.0
    %1336 = vmatprep.subr.mxu0 0.0
    %1337 = vmatpush2.msra.mxu0 0.0
    %1338 = vmatprep.subr.mxu0 0.0
    %1339 = vmatpush2.msra.mxu0 0.0
    %1340 = vmatprep.subr.mxu0 0.0
    %1341 = vmatpush2.msra.mxu0 0.0
    %1342 = vmatprep.subr.mxu0 0.0
    %1343 = vmatpush2.msra.mxu0 0.0
    %1344 = vmatprep.subr.mxu0 0.0
    %1345 = vmatpush2.msra.mxu0 0.0
    %1346 = vmatprep.subr.mxu0 0.0
    %1347 = vmatpush2.msra.mxu0 0.0
    %1348 = vmatprep.subr.mxu0 0.0
    %1349 = vmatpush2.msra.mxu0 0.0
    %1350 = vmatprep.subr.mxu0 0.0
    %1351 = vmatpush2.msra.mxu0 0.0
    %1352 = vmatprep.subr.mxu0 0.0
    %1353 = vmatpush2.msra.mxu0 0.0
    %1354 = vmatprep.subr.mxu0 0.0
    %1355 = vmatpush2.msra.mxu0 0.0
    %1356 = vmatprep.subr.mxu0 0.0
    %1357 = vmatpush2.msra.mxu0 0.0
    %1358 = vmatprep.subr.mxu0 0.0
    %1359 = vmatpush2.msra.mxu0 0.0
    %1360 = vmatprep.subr.mxu0 0.0
    %1361 = vmatpush2.msra.mxu0 0.0
    %1362 = vmatprep.subr.mxu0 0.0
    %1363 = vmatpush2.msra.mxu0 0.0
    %1364 = vmatprep.mubr.f32.mxu0 0.0
    %1365 = vmatmul.mubr.f32.gmra.mxu0 %v1298
    %v1366 = vpop.f32.mrf.mxu0
    %v1367 = vadd.f32 0.0, %v1366
    %v1368 = vpop.f32.mrf.mxu0
    %1369 = vdwg.mxu0
    %1371 = vrot.lane.b32.xlu0 %v1294, 32
    %v1372 = vpop.permute.xlu0 %1371
    %v1373 = vsel %vm93, %v1372, 0
    %1375 = vmatprep.subr.mxu0 0.0
    %1376 = vmatpush1.msra.mxu0 0.0
    %1377 = vmatprep.subr.mxu0 0.0
    %1378 = vmatpush1.msra.mxu0 0.0
    %1379 = vmatprep.subr.mxu0 0.0
    %1380 = vmatpush1.msra.mxu0 0.0
    %1381 = vmatprep.subr.mxu0 0.0
    %1382 = vmatpush1.msra.mxu0 0.0
    %1383 = vmatprep.subr.mxu0 0.0
    %1384 = vmatpush1.msra.mxu0 0.0
    %1385 = vmatprep.subr.mxu0 0.0
    %1386 = vmatpush1.msra.mxu0 0.0
    %1387 = vmatprep.subr.mxu0 0.0
    %1388 = vmatpush1.msra.mxu0 0.0
    %1389 = vmatprep.subr.mxu0 0.0
    %1390 = vmatpush1.msra.mxu0 0.0
    %1391 = vmatprep.subr.mxu0 0.0
    %1392 = vmatpush1.msra.mxu0 0.0
    %1393 = vmatprep.subr.mxu0 0.0
    %1394 = vmatpush1.msra.mxu0 0.0
    %1395 = vmatprep.subr.mxu0 0.0
    %1396 = vmatpush1.msra.mxu0 0.0
    %1397 = vmatprep.subr.mxu0 0.0
    %1398 = vmatpush1.msra.mxu0 0.0
    %1399 = vmatprep.subr.mxu0 0.0
    %1400 = vmatpush1.msra.mxu0 %v73
    %1401 = vmatprep.subr.mxu0 0.0
    %1402 = vmatpush1.msra.mxu0 %v72
    %1403 = vmatprep.subr.mxu0 0.0
    %1404 = vmatpush1.msra.mxu0 %v71
    %1405 = vmatprep.subr.mxu0 0.0
    %1406 = vmatpush1.msra.mxu0 %v70
    %1407 = vmatprep.subr.mxu0 0.0
    %1408 = vmatpush2.msra.mxu0 0.0
    %1409 = vmatprep.subr.mxu0 0.0
    %1410 = vmatpush2.msra.mxu0 0.0
    %1411 = vmatprep.subr.mxu0 0.0
    %1412 = vmatpush2.msra.mxu0 0.0
    %1413 = vmatprep.subr.mxu0 0.0
    %1414 = vmatpush2.msra.mxu0 0.0
    %1415 = vmatprep.subr.mxu0 0.0
    %1416 = vmatpush2.msra.mxu0 0.0
    %1417 = vmatprep.subr.mxu0 0.0
    %1418 = vmatpush2.msra.mxu0 0.0
    %1419 = vmatprep.subr.mxu0 0.0
    %1420 = vmatpush2.msra.mxu0 0.0
    %1421 = vmatprep.subr.mxu0 0.0
    %1422 = vmatpush2.msra.mxu0 0.0
    %1423 = vmatprep.subr.mxu0 0.0
    %1424 = vmatpush2.msra.mxu0 0.0
    %1425 = vmatprep.subr.mxu0 0.0
    %1426 = vmatpush2.msra.mxu0 0.0
    %1427 = vmatprep.subr.mxu0 0.0
    %1428 = vmatpush2.msra.mxu0 0.0
    %1429 = vmatprep.subr.mxu0 0.0
    %1430 = vmatpush2.msra.mxu0 0.0
    %1431 = vmatprep.subr.mxu0 0.0
    %1432 = vmatpush2.msra.mxu0 0.0
    %1433 = vmatprep.subr.mxu0 0.0
    %1434 = vmatpush2.msra.mxu0 0.0
    %1435 = vmatprep.subr.mxu0 0.0
    %1436 = vmatpush2.msra.mxu0 0.0
    %1437 = vmatprep.subr.mxu0 0.0
    %1438 = vmatpush2.msra.mxu0 0.0
    %1439 = vmatprep.mubr.f32.mxu0 0.0
    %1440 = vmatmul.mubr.f32.gmra.mxu0 %v1373
    %v1441 = vpop.f32.mrf.mxu0
    %v1442 = vadd.f32 %v1367, %v1441
    %v1443 = vpop.f32.mrf.mxu0
    %1444 = vdwg.mxu0
    %v1445 = vadd.f32 %v1442, %v90
    %v1446 = vxor.u32 %v1445, 2147483648
    %v1447 = vmul.f32 %v1446, 1.442695
    %v1448 = vpow.pop %v1447
    %v1449 = vadd.f32 %v1448, 1.0
    %v1450 = vrcp.pop %v1449
    %v1451 = vmul.f32 1.0, %v1450
    %v1452 = vtanh.pop %v1445
    %v1453 = vmul.f32 %v1451, %v1118
    %1455 = vrot.lane.b32.xlu0 %v1452, 64
    %v1456 = vpop.permute.xlu0 %1455
    %v1458 = vmul.f32 %v1451, %v1456
    %1460 = vrot.lane.b32.xlu0 %v1458, 32
    %v1461 = vpop.permute.xlu0 %1460
    %v1463 = vadd.f32 %v1453, %v1461
    %v1464 = vtanh.pop %v1463
    %1466 = vrot.lane.b32.xlu0 %v1464, 64
    %v1467 = vpop.permute.xlu0 %1466
    %v1469 = vmul.f32 %v1451, %v1467
    %s1470 = scalar_lea.vmem %s1, 32
    %v1471 = vld [vmem:[%s1470] sm:$0xff]
    %1472 = vmatprep.subr.mxu0 0.0
    %1473 = vmatpush1.msra.mxu0 0.0
    %1474 = vmatprep.subr.mxu0 0.0
    %1475 = vmatpush1.msra.mxu0 0.0
    %1476 = vmatprep.subr.mxu0 0.0
    %1477 = vmatpush1.msra.mxu0 0.0
    %1478 = vmatprep.subr.mxu0 0.0
    %1479 = vmatpush1.msra.mxu0 0.0
    %1480 = vmatprep.subr.mxu0 0.0
    %1481 = vmatpush1.msra.mxu0 0.0
    %1482 = vmatprep.subr.mxu0 0.0
    %1483 = vmatpush1.msra.mxu0 0.0
    %1484 = vmatprep.subr.mxu0 0.0
    %1485 = vmatpush1.msra.mxu0 0.0
    %1486 = vmatprep.subr.mxu0 0.0
    %1487 = vmatpush1.msra.mxu0 0.0
    %1488 = vmatprep.subr.mxu0 0.0
    %1489 = vmatpush1.msra.mxu0 0.0
    %1490 = vmatprep.subr.mxu0 0.0
    %1491 = vmatpush1.msra.mxu0 0.0
    %1492 = vmatprep.subr.mxu0 0.0
    %1493 = vmatpush1.msra.mxu0 0.0
    %1494 = vmatprep.subr.mxu0 0.0
    %1495 = vmatpush1.msra.mxu0 0.0
    %1496 = vmatprep.subr.mxu0 0.0
    %1497 = vmatpush1.msra.mxu0 %v69
    %1498 = vmatprep.subr.mxu0 0.0
    %1499 = vmatpush1.msra.mxu0 %v68
    %1500 = vmatprep.subr.mxu0 0.0
    %1501 = vmatpush1.msra.mxu0 %v67
    %1502 = vmatprep.subr.mxu0 0.0
    %1503 = vmatpush1.msra.mxu0 %v66
    %1504 = vmatprep.subr.mxu0 0.0
    %1505 = vmatpush2.msra.mxu0 0.0
    %1506 = vmatprep.subr.mxu0 0.0
    %1507 = vmatpush2.msra.mxu0 0.0
    %1508 = vmatprep.subr.mxu0 0.0
    %1509 = vmatpush2.msra.mxu0 0.0
    %1510 = vmatprep.subr.mxu0 0.0
    %1511 = vmatpush2.msra.mxu0 0.0
    %1512 = vmatprep.subr.mxu0 0.0
    %1513 = vmatpush2.msra.mxu0 0.0
    %1514 = vmatprep.subr.mxu0 0.0
    %1515 = vmatpush2.msra.mxu0 0.0
    %1516 = vmatprep.subr.mxu0 0.0
    %1517 = vmatpush2.msra.mxu0 0.0
    %1518 = vmatprep.subr.mxu0 0.0
    %1519 = vmatpush2.msra.mxu0 0.0
    %1520 = vmatprep.subr.mxu0 0.0
    %1521 = vmatpush2.msra.mxu0 0.0
    %1522 = vmatprep.subr.mxu0 0.0
    %1523 = vmatpush2.msra.mxu0 0.0
    %1524 = vmatprep.subr.mxu0 0.0
    %1525 = vmatpush2.msra.mxu0 0.0
    %1526 = vmatprep.subr.mxu0 0.0
    %1527 = vmatpush2.msra.mxu0 0.0
    %1528 = vmatprep.subr.mxu0 0.0
    %1529 = vmatpush2.msra.mxu0 0.0
    %1530 = vmatprep.subr.mxu0 0.0
    %1531 = vmatpush2.msra.mxu0 0.0
    %1532 = vmatprep.subr.mxu0 0.0
    %1533 = vmatpush2.msra.mxu0 0.0
    %1534 = vmatprep.subr.mxu0 0.0
    %1535 = vmatpush2.msra.mxu0 0.0
    %1536 = vmatprep.mubr.f32.mxu0 0.0
    %1537 = vmatmul.mubr.f32.gmra.mxu0 %v1373
    %v1538 = vpop.f32.mrf.mxu0
    %v1539 = vadd.f32 0.0, %v1538
    %v1540 = vpop.f32.mrf.mxu0
    %1541 = vdwg.mxu0
    %v1543 = vsel %vm93, %v1471, 0
    %1545 = vmatprep.subr.mxu0 0.0
    %1546 = vmatpush1.msra.mxu0 0.0
    %1547 = vmatprep.subr.mxu0 0.0
    %1548 = vmatpush1.msra.mxu0 0.0
    %1549 = vmatprep.subr.mxu0 0.0
    %1550 = vmatpush1.msra.mxu0 0.0
    %1551 = vmatprep.subr.mxu0 0.0
    %1552 = vmatpush1.msra.mxu0 0.0
    %1553 = vmatprep.subr.mxu0 0.0
    %1554 = vmatpush1.msra.mxu0 0.0
    %1555 = vmatprep.subr.mxu0 0.0
    %1556 = vmatpush1.msra.mxu0 0.0
    %1557 = vmatprep.subr.mxu0 0.0
    %1558 = vmatpush1.msra.mxu0 0.0
    %1559 = vmatprep.subr.mxu0 0.0
    %1560 = vmatpush1.msra.mxu0 0.0
    %1561 = vmatprep.subr.mxu0 0.0
    %1562 = vmatpush1.msra.mxu0 0.0
    %1563 = vmatprep.subr.mxu0 0.0
    %1564 = vmatpush1.msra.mxu0 0.0
    %1565 = vmatprep.subr.mxu0 0.0
    %1566 = vmatpush1.msra.mxu0 0.0
    %1567 = vmatprep.subr.mxu0 0.0
    %1568 = vmatpush1.msra.mxu0 0.0
    %1569 = vmatprep.subr.mxu0 0.0
    %1570 = vmatpush1.msra.mxu0 %v65
    %1571 = vmatprep.subr.mxu0 0.0
    %1572 = vmatpush1.msra.mxu0 %v64
    %1573 = vmatprep.subr.mxu0 0.0
    %1574 = vmatpush1.msra.mxu0 %v63
    %1575 = vmatprep.subr.mxu0 0.0
    %1576 = vmatpush1.msra.mxu0 %v62
    %1577 = vmatprep.subr.mxu0 0.0
    %1578 = vmatpush2.msra.mxu0 0.0
    %1579 = vmatprep.subr.mxu0 0.0
    %1580 = vmatpush2.msra.mxu0 0.0
    %1581 = vmatprep.subr.mxu0 0.0
    %1582 = vmatpush2.msra.mxu0 0.0
    %1583 = vmatprep.subr.mxu0 0.0
    %1584 = vmatpush2.msra.mxu0 0.0
    %1585 = vmatprep.subr.mxu0 0.0
    %1586 = vmatpush2.msra.mxu0 0.0
    %1587 = vmatprep.subr.mxu0 0.0
    %1588 = vmatpush2.msra.mxu0 0.0
    %1589 = vmatprep.subr.mxu0 0.0
    %1590 = vmatpush2.msra.mxu0 0.0
    %1591 = vmatprep.subr.mxu0 0.0
    %1592 = vmatpush2.msra.mxu0 0.0
    %1593 = vmatprep.subr.mxu0 0.0
    %1594 = vmatpush2.msra.mxu0 0.0
    %1595 = vmatprep.subr.mxu0 0.0
    %1596 = vmatpush2.msra.mxu0 0.0
    %1597 = vmatprep.subr.mxu0 0.0
    %1598 = vmatpush2.msra.mxu0 0.0
    %1599 = vmatprep.subr.mxu0 0.0
    %1600 = vmatpush2.msra.mxu0 0.0
    %1601 = vmatprep.subr.mxu0 0.0
    %1602 = vmatpush2.msra.mxu0 0.0
    %1603 = vmatprep.subr.mxu0 0.0
    %1604 = vmatpush2.msra.mxu0 0.0
    %1605 = vmatprep.subr.mxu0 0.0
    %1606 = vmatpush2.msra.mxu0 0.0
    %1607 = vmatprep.subr.mxu0 0.0
    %1608 = vmatpush2.msra.mxu0 0.0
    %1609 = vmatprep.mubr.f32.mxu0 0.0
    %1610 = vmatmul.mubr.f32.gmra.mxu0 %v1543
    %v1611 = vpop.f32.mrf.mxu0
    %v1612 = vadd.f32 %v1539, %v1611
    %v1613 = vpop.f32.mrf.mxu0
    %1614 = vdwg.mxu0
    %v1615 = vadd.f32 %v1612, %v83
    %v1616 = vxor.u32 %v1615, 2147483648
    %v1617 = vmul.f32 %v1616, 1.442695
    %v1618 = vpow.pop %v1617
    %v1619 = vadd.f32 %v1618, 1.0
    %v1620 = vrcp.pop %v1619
    %v1621 = vmul.f32 1.0, %v1620
    %v1622 = vtanh.pop %v1615
    %v1623 = vmul.f32 %v1621, %v1288
    %1625 = vrot.lane.b32.xlu0 %v1622, 64
    %v1626 = vpop.permute.xlu0 %1625
    %v1628 = vmul.f32 %v1621, %v1626
    %1630 = vrot.lane.b32.xlu0 %v1628, 32
    %v1631 = vpop.permute.xlu0 %1630
    %v1633 = vadd.f32 %v1623, %v1631
    %v1634 = vtanh.pop %v1633
    %1636 = vrot.lane.b32.xlu0 %v1634, 64
    %v1637 = vpop.permute.xlu0 %1636
    %v1639 = vmul.f32 %v1621, %v1637
    %1641 = vrot.lane.b32.xlu0 %v1469, 32
    %v1642 = vpop.permute.xlu0 %1641
    %v1643 = vsel %vm93, %v1642, 0
    %1645 = vmatprep.subr.mxu0 0.0
    %1646 = vmatpush1.msra.mxu0 0.0
    %1647 = vmatprep.subr.mxu0 0.0
    %1648 = vmatpush1.msra.mxu0 0.0
    %1649 = vmatprep.subr.mxu0 0.0
    %1650 = vmatpush1.msra.mxu0 0.0
    %1651 = vmatprep.subr.mxu0 0.0
    %1652 = vmatpush1.msra.mxu0 0.0
    %1653 = vmatprep.subr.mxu0 0.0
    %1654 = vmatpush1.msra.mxu0 0.0
    %1655 = vmatprep.subr.mxu0 0.0
    %1656 = vmatpush1.msra.mxu0 0.0
    %1657 = vmatprep.subr.mxu0 0.0
    %1658 = vmatpush1.msra.mxu0 0.0
    %1659 = vmatprep.subr.mxu0 0.0
    %1660 = vmatpush1.msra.mxu0 0.0
    %1661 = vmatprep.subr.mxu0 0.0
    %1662 = vmatpush1.msra.mxu0 0.0
    %1663 = vmatprep.subr.mxu0 0.0
    %1664 = vmatpush1.msra.mxu0 0.0
    %1665 = vmatprep.subr.mxu0 0.0
    %1666 = vmatpush1.msra.mxu0 0.0
    %1667 = vmatprep.subr.mxu0 0.0
    %1668 = vmatpush1.msra.mxu0 0.0
    %1669 = vmatprep.subr.mxu0 0.0
    %1670 = vmatpush1.msra.mxu0 %v77
    %1671 = vmatprep.subr.mxu0 0.0
    %1672 = vmatpush1.msra.mxu0 %v76
    %1673 = vmatprep.subr.mxu0 0.0
    %1674 = vmatpush1.msra.mxu0 %v75
    %1675 = vmatprep.subr.mxu0 0.0
    %1676 = vmatpush1.msra.mxu0 %v74
    %1677 = vmatprep.subr.mxu0 0.0
    %1678 = vmatpush2.msra.mxu0 0.0
    %1679 = vmatprep.subr.mxu0 0.0
    %1680 = vmatpush2.msra.mxu0 0.0
    %1681 = vmatprep.subr.mxu0 0.0
    %1682 = vmatpush2.msra.mxu0 0.0
    %1683 = vmatprep.subr.mxu0 0.0
    %1684 = vmatpush2.msra.mxu0 0.0
    %1685 = vmatprep.subr.mxu0 0.0
    %1686 = vmatpush2.msra.mxu0 0.0
    %1687 = vmatprep.subr.mxu0 0.0
    %1688 = vmatpush2.msra.mxu0 0.0
    %1689 = vmatprep.subr.mxu0 0.0
    %1690 = vmatpush2.msra.mxu0 0.0
    %1691 = vmatprep.subr.mxu0 0.0
    %1692 = vmatpush2.msra.mxu0 0.0
    %1693 = vmatprep.subr.mxu0 0.0
    %1694 = vmatpush2.msra.mxu0 0.0
    %1695 = vmatprep.subr.mxu0 0.0
    %1696 = vmatpush2.msra.mxu0 0.0
    %1697 = vmatprep.subr.mxu0 0.0
    %1698 = vmatpush2.msra.mxu0 0.0
    %1699 = vmatprep.subr.mxu0 0.0
    %1700 = vmatpush2.msra.mxu0 0.0
    %1701 = vmatprep.subr.mxu0 0.0
    %1702 = vmatpush2.msra.mxu0 0.0
    %1703 = vmatprep.subr.mxu0 0.0
    %1704 = vmatpush2.msra.mxu0 0.0
    %1705 = vmatprep.subr.mxu0 0.0
    %1706 = vmatpush2.msra.mxu0 0.0
    %1707 = vmatprep.subr.mxu0 0.0
    %1708 = vmatpush2.msra.mxu0 0.0
    %1709 = vmatprep.mubr.f32.mxu0 0.0
    %1710 = vmatmul.mubr.f32.gmra.mxu0 %v1643
    %v1711 = vpop.f32.mrf.mxu0
    %v1712 = vadd.f32 0.0, %v1711
    %v1713 = vpop.f32.mrf.mxu0
    %1714 = vdwg.mxu0
    %1716 = vrot.lane.b32.xlu0 %v1639, 32
    %v1717 = vpop.permute.xlu0 %1716
    %v1718 = vsel %vm93, %v1717, 0
    %1720 = vmatprep.subr.mxu0 0.0
    %1721 = vmatpush1.msra.mxu0 0.0
    %1722 = vmatprep.subr.mxu0 0.0
    %1723 = vmatpush1.msra.mxu0 0.0
    %1724 = vmatprep.subr.mxu0 0.0
    %1725 = vmatpush1.msra.mxu0 0.0
    %1726 = vmatprep.subr.mxu0 0.0
    %1727 = vmatpush1.msra.mxu0 0.0
    %1728 = vmatprep.subr.mxu0 0.0
    %1729 = vmatpush1.msra.mxu0 0.0
    %1730 = vmatprep.subr.mxu0 0.0
    %1731 = vmatpush1.msra.mxu0 0.0
    %1732 = vmatprep.subr.mxu0 0.0
    %1733 = vmatpush1.msra.mxu0 0.0
    %1734 = vmatprep.subr.mxu0 0.0
    %1735 = vmatpush1.msra.mxu0 0.0
    %1736 = vmatprep.subr.mxu0 0.0
    %1737 = vmatpush1.msra.mxu0 0.0
    %1738 = vmatprep.subr.mxu0 0.0
    %1739 = vmatpush1.msra.mxu0 0.0
    %1740 = vmatprep.subr.mxu0 0.0
    %1741 = vmatpush1.msra.mxu0 0.0
    %1742 = vmatprep.subr.mxu0 0.0
    %1743 = vmatpush1.msra.mxu0 0.0
    %1744 = vmatprep.subr.mxu0 0.0
    %1745 = vmatpush1.msra.mxu0 %v73
    %1746 = vmatprep.subr.mxu0 0.0
    %1747 = vmatpush1.msra.mxu0 %v72
    %1748 = vmatprep.subr.mxu0 0.0
    %1749 = vmatpush1.msra.mxu0 %v71
    %1750 = vmatprep.subr.mxu0 0.0
    %1751 = vmatpush1.msra.mxu0 %v70
    %1752 = vmatprep.subr.mxu0 0.0
    %1753 = vmatpush2.msra.mxu0 0.0
    %1754 = vmatprep.subr.mxu0 0.0
    %1755 = vmatpush2.msra.mxu0 0.0
    %1756 = vmatprep.subr.mxu0 0.0
    %1757 = vmatpush2.msra.mxu0 0.0
    %1758 = vmatprep.subr.mxu0 0.0
    %1759 = vmatpush2.msra.mxu0 0.0
    %1760 = vmatprep.subr.mxu0 0.0
    %1761 = vmatpush2.msra.mxu0 0.0
    %1762 = vmatprep.subr.mxu0 0.0
    %1763 = vmatpush2.msra.mxu0 0.0
    %1764 = vmatprep.subr.mxu0 0.0
    %1765 = vmatpush2.msra.mxu0 0.0
    %1766 = vmatprep.subr.mxu0 0.0
    %1767 = vmatpush2.msra.mxu0 0.0
    %1768 = vmatprep.subr.mxu0 0.0
    %1769 = vmatpush2.msra.mxu0 0.0
    %1770 = vmatprep.subr.mxu0 0.0
    %1771 = vmatpush2.msra.mxu0 0.0
    %1772 = vmatprep.subr.mxu0 0.0
    %1773 = vmatpush2.msra.mxu0 0.0
    %1774 = vmatprep.subr.mxu0 0.0
    %1775 = vmatpush2.msra.mxu0 0.0
    %1776 = vmatprep.subr.mxu0 0.0
    %1777 = vmatpush2.msra.mxu0 0.0
    %1778 = vmatprep.subr.mxu0 0.0
    %1779 = vmatpush2.msra.mxu0 0.0
    %1780 = vmatprep.subr.mxu0 0.0
    %1781 = vmatpush2.msra.mxu0 0.0
    %1782 = vmatprep.subr.mxu0 0.0
    %1783 = vmatpush2.msra.mxu0 0.0
    %1784 = vmatprep.mubr.f32.mxu0 0.0
    %1785 = vmatmul.mubr.f32.gmra.mxu0 %v1718
    %v1786 = vpop.f32.mrf.mxu0
    %v1787 = vadd.f32 %v1712, %v1786
    %v1788 = vpop.f32.mrf.mxu0
    %1789 = vdwg.mxu0
    %v1790 = vadd.f32 %v1787, %v90
    %v1791 = vxor.u32 %v1790, 2147483648
    %v1792 = vmul.f32 %v1791, 1.442695
    %v1793 = vpow.pop %v1792
    %v1794 = vadd.f32 %v1793, 1.0
    %v1795 = vrcp.pop %v1794
    %v1796 = vmul.f32 1.0, %v1795
    %v1797 = vtanh.pop %v1790
    %v1798 = vmul.f32 %v1796, %v1463
    %1800 = vrot.lane.b32.xlu0 %v1797, 64
    %v1801 = vpop.permute.xlu0 %1800
    %v1803 = vmul.f32 %v1796, %v1801
    %1805 = vrot.lane.b32.xlu0 %v1803, 32
    %v1806 = vpop.permute.xlu0 %1805
    %v1808 = vadd.f32 %v1798, %v1806
    %v1809 = vtanh.pop %v1808
    %1811 = vrot.lane.b32.xlu0 %v1809, 64
    %v1812 = vpop.permute.xlu0 %1811
    %v1814 = vmul.f32 %v1796, %v1812
    %s1815 = scalar_lea.vmem %s1, 40
    %v1816 = vld [vmem:[%s1815] sm:$0xff]
    %1817 = vmatprep.subr.mxu0 0.0
    %1818 = vmatpush1.msra.mxu0 0.0
    %1819 = vmatprep.subr.mxu0 0.0
    %1820 = vmatpush1.msra.mxu0 0.0
    %1821 = vmatprep.subr.mxu0 0.0
    %1822 = vmatpush1.msra.mxu0 0.0
    %1823 = vmatprep.subr.mxu0 0.0
    %1824 = vmatpush1.msra.mxu0 0.0
    %1825 = vmatprep.subr.mxu0 0.0
    %1826 = vmatpush1.msra.mxu0 0.0
    %1827 = vmatprep.subr.mxu0 0.0
    %1828 = vmatpush1.msra.mxu0 0.0
    %1829 = vmatprep.subr.mxu0 0.0
    %1830 = vmatpush1.msra.mxu0 0.0
    %1831 = vmatprep.subr.mxu0 0.0
    %1832 = vmatpush1.msra.mxu0 0.0
    %1833 = vmatprep.subr.mxu0 0.0
    %1834 = vmatpush1.msra.mxu0 0.0
    %1835 = vmatprep.subr.mxu0 0.0
    %1836 = vmatpush1.msra.mxu0 0.0
    %1837 = vmatprep.subr.mxu0 0.0
    %1838 = vmatpush1.msra.mxu0 0.0
    %1839 = vmatprep.subr.mxu0 0.0
    %1840 = vmatpush1.msra.mxu0 0.0
    %1841 = vmatprep.subr.mxu0 0.0
    %1842 = vmatpush1.msra.mxu0 %v69
    %1843 = vmatprep.subr.mxu0 0.0
    %1844 = vmatpush1.msra.mxu0 %v68
    %1845 = vmatprep.subr.mxu0 0.0
    %1846 = vmatpush1.msra.mxu0 %v67
    %1847 = vmatprep.subr.mxu0 0.0
    %1848 = vmatpush1.msra.mxu0 %v66
    %1849 = vmatprep.subr.mxu0 0.0
    %1850 = vmatpush2.msra.mxu0 0.0
    %1851 = vmatprep.subr.mxu0 0.0
    %1852 = vmatpush2.msra.mxu0 0.0
    %1853 = vmatprep.subr.mxu0 0.0
    %1854 = vmatpush2.msra.mxu0 0.0
    %1855 = vmatprep.subr.mxu0 0.0
    %1856 = vmatpush2.msra.mxu0 0.0
    %1857 = vmatprep.subr.mxu0 0.0
    %1858 = vmatpush2.msra.mxu0 0.0
    %1859 = vmatprep.subr.mxu0 0.0
    %1860 = vmatpush2.msra.mxu0 0.0
    %1861 = vmatprep.subr.mxu0 0.0
    %1862 = vmatpush2.msra.mxu0 0.0
    %1863 = vmatprep.subr.mxu0 0.0
    %1864 = vmatpush2.msra.mxu0 0.0
    %1865 = vmatprep.subr.mxu0 0.0
    %1866 = vmatpush2.msra.mxu0 0.0
    %1867 = vmatprep.subr.mxu0 0.0
    %1868 = vmatpush2.msra.mxu0 0.0
    %1869 = vmatprep.subr.mxu0 0.0
    %1870 = vmatpush2.msra.mxu0 0.0
    %1871 = vmatprep.subr.mxu0 0.0
    %1872 = vmatpush2.msra.mxu0 0.0
    %1873 = vmatprep.subr.mxu0 0.0
    %1874 = vmatpush2.msra.mxu0 0.0
    %1875 = vmatprep.subr.mxu0 0.0
    %1876 = vmatpush2.msra.mxu0 0.0
    %1877 = vmatprep.subr.mxu0 0.0
    %1878 = vmatpush2.msra.mxu0 0.0
    %1879 = vmatprep.subr.mxu0 0.0
    %1880 = vmatpush2.msra.mxu0 0.0
    %1881 = vmatprep.mubr.f32.mxu0 0.0
    %1882 = vmatmul.mubr.f32.gmra.mxu0 %v1718
    %v1883 = vpop.f32.mrf.mxu0
    %v1884 = vadd.f32 0.0, %v1883
    %v1885 = vpop.f32.mrf.mxu0
    %1886 = vdwg.mxu0
    %v1888 = vsel %vm93, %v1816, 0
    %1890 = vmatprep.subr.mxu0 0.0
    %1891 = vmatpush1.msra.mxu0 0.0
    %1892 = vmatprep.subr.mxu0 0.0
    %1893 = vmatpush1.msra.mxu0 0.0
    %1894 = vmatprep.subr.mxu0 0.0
    %1895 = vmatpush1.msra.mxu0 0.0
    %1896 = vmatprep.subr.mxu0 0.0
    %1897 = vmatpush1.msra.mxu0 0.0
    %1898 = vmatprep.subr.mxu0 0.0
    %1899 = vmatpush1.msra.mxu0 0.0
    %1900 = vmatprep.subr.mxu0 0.0
    %1901 = vmatpush1.msra.mxu0 0.0
    %1902 = vmatprep.subr.mxu0 0.0
    %1903 = vmatpush1.msra.mxu0 0.0
    %1904 = vmatprep.subr.mxu0 0.0
    %1905 = vmatpush1.msra.mxu0 0.0
    %1906 = vmatprep.subr.mxu0 0.0
    %1907 = vmatpush1.msra.mxu0 0.0
    %1908 = vmatprep.subr.mxu0 0.0
    %1909 = vmatpush1.msra.mxu0 0.0
    %1910 = vmatprep.subr.mxu0 0.0
    %1911 = vmatpush1.msra.mxu0 0.0
    %1912 = vmatprep.subr.mxu0 0.0
    %1913 = vmatpush1.msra.mxu0 0.0
    %1914 = vmatprep.subr.mxu0 0.0
    %1915 = vmatpush1.msra.mxu0 %v65
    %1916 = vmatprep.subr.mxu0 0.0
    %1917 = vmatpush1.msra.mxu0 %v64
    %1918 = vmatprep.subr.mxu0 0.0
    %1919 = vmatpush1.msra.mxu0 %v63
    %1920 = vmatprep.subr.mxu0 0.0
    %1921 = vmatpush1.msra.mxu0 %v62
    %1922 = vmatprep.subr.mxu0 0.0
    %1923 = vmatpush2.msra.mxu0 0.0
    %1924 = vmatprep.subr.mxu0 0.0
    %1925 = vmatpush2.msra.mxu0 0.0
    %1926 = vmatprep.subr.mxu0 0.0
    %1927 = vmatpush2.msra.mxu0 0.0
    %1928 = vmatprep.subr.mxu0 0.0
    %1929 = vmatpush2.msra.mxu0 0.0
    %1930 = vmatprep.subr.mxu0 0.0
    %1931 = vmatpush2.msra.mxu0 0.0
    %1932 = vmatprep.subr.mxu0 0.0
    %1933 = vmatpush2.msra.mxu0 0.0
    %1934 = vmatprep.subr.mxu0 0.0
    %1935 = vmatpush2.msra.mxu0 0.0
    %1936 = vmatprep.subr.mxu0 0.0
    %1937 = vmatpush2.msra.mxu0 0.0
    %1938 = vmatprep.subr.mxu0 0.0
    %1939 = vmatpush2.msra.mxu0 0.0
    %1940 = vmatprep.subr.mxu0 0.0
    %1941 = vmatpush2.msra.mxu0 0.0
    %1942 = vmatprep.subr.mxu0 0.0
    %1943 = vmatpush2.msra.mxu0 0.0
    %1944 = vmatprep.subr.mxu0 0.0
    %1945 = vmatpush2.msra.mxu0 0.0
    %1946 = vmatprep.subr.mxu0 0.0
    %1947 = vmatpush2.msra.mxu0 0.0
    %1948 = vmatprep.subr.mxu0 0.0
    %1949 = vmatpush2.msra.mxu0 0.0
    %1950 = vmatprep.subr.mxu0 0.0
    %1951 = vmatpush2.msra.mxu0 0.0
    %1952 = vmatprep.subr.mxu0 0.0
    %1953 = vmatpush2.msra.mxu0 0.0
    %1954 = vmatprep.mubr.f32.mxu0 0.0
    %1955 = vmatmul.mubr.f32.gmra.mxu0 %v1888
    %v1956 = vpop.f32.mrf.mxu0
    %v1957 = vadd.f32 %v1884, %v1956
    %v1958 = vpop.f32.mrf.mxu0
    %1959 = vdwg.mxu0
    %v1960 = vadd.f32 %v1957, %v83
    %v1961 = vxor.u32 %v1960, 2147483648
    %v1962 = vmul.f32 %v1961, 1.442695
    %v1963 = vpow.pop %v1962
    %v1964 = vadd.f32 %v1963, 1.0
    %v1965 = vrcp.pop %v1964
    %v1966 = vmul.f32 1.0, %v1965
    %v1967 = vtanh.pop %v1960
    %v1968 = vmul.f32 %v1966, %v1633
    %1970 = vrot.lane.b32.xlu0 %v1967, 64
    %v1971 = vpop.permute.xlu0 %1970
    %v1973 = vmul.f32 %v1966, %v1971
    %1975 = vrot.lane.b32.xlu0 %v1973, 32
    %v1976 = vpop.permute.xlu0 %1975
    %v1978 = vadd.f32 %v1968, %v1976
    %v1979 = vtanh.pop %v1978
    %1981 = vrot.lane.b32.xlu0 %v1979, 64
    %v1982 = vpop.permute.xlu0 %1981
    %v1984 = vmul.f32 %v1966, %v1982
    %1986 = vrot.lane.b32.xlu0 %v1814, 32
    %v1987 = vpop.permute.xlu0 %1986
    %v1988 = vsel %vm93, %v1987, 0
    %1990 = vmatprep.subr.mxu0 0.0
    %1991 = vmatpush1.msra.mxu0 0.0
    %1992 = vmatprep.subr.mxu0 0.0
    %1993 = vmatpush1.msra.mxu0 0.0
    %1994 = vmatprep.subr.mxu0 0.0
    %1995 = vmatpush1.msra.mxu0 0.0
    %1996 = vmatprep.subr.mxu0 0.0
    %1997 = vmatpush1.msra.mxu0 0.0
    %1998 = vmatprep.subr.mxu0 0.0
    %1999 = vmatpush1.msra.mxu0 0.0
    %2000 = vmatprep.subr.mxu0 0.0
    %2001 = vmatpush1.msra.mxu0 0.0
    %2002 = vmatprep.subr.mxu0 0.0
    %2003 = vmatpush1.msra.mxu0 0.0
    %2004 = vmatprep.subr.mxu0 0.0
    %2005 = vmatpush1.msra.mxu0 0.0
    %2006 = vmatprep.subr.mxu0 0.0
    %2007 = vmatpush1.msra.mxu0 0.0
    %2008 = vmatprep.subr.mxu0 0.0
    %2009 = vmatpush1.msra.mxu0 0.0
    %2010 = vmatprep.subr.mxu0 0.0
    %2011 = vmatpush1.msra.mxu0 0.0
    %2012 = vmatprep.subr.mxu0 0.0
    %2013 = vmatpush1.msra.mxu0 0.0
    %2014 = vmatprep.subr.mxu0 0.0
    %2015 = vmatpush1.msra.mxu0 %v77
    %2016 = vmatprep.subr.mxu0 0.0
    %2017 = vmatpush1.msra.mxu0 %v76
    %2018 = vmatprep.subr.mxu0 0.0
    %2019 = vmatpush1.msra.mxu0 %v75
    %2020 = vmatprep.subr.mxu0 0.0
    %2021 = vmatpush1.msra.mxu0 %v74
    %2022 = vmatprep.subr.mxu0 0.0
    %2023 = vmatpush2.msra.mxu0 0.0
    %2024 = vmatprep.subr.mxu0 0.0
    %2025 = vmatpush2.msra.mxu0 0.0
    %2026 = vmatprep.subr.mxu0 0.0
    %2027 = vmatpush2.msra.mxu0 0.0
    %2028 = vmatprep.subr.mxu0 0.0
    %2029 = vmatpush2.msra.mxu0 0.0
    %2030 = vmatprep.subr.mxu0 0.0
    %2031 = vmatpush2.msra.mxu0 0.0
    %2032 = vmatprep.subr.mxu0 0.0
    %2033 = vmatpush2.msra.mxu0 0.0
    %2034 = vmatprep.subr.mxu0 0.0
    %2035 = vmatpush2.msra.mxu0 0.0
    %2036 = vmatprep.subr.mxu0 0.0
    %2037 = vmatpush2.msra.mxu0 0.0
    %2038 = vmatprep.subr.mxu0 0.0
    %2039 = vmatpush2.msra.mxu0 0.0
    %2040 = vmatprep.subr.mxu0 0.0
    %2041 = vmatpush2.msra.mxu0 0.0
    %2042 = vmatprep.subr.mxu0 0.0
    %2043 = vmatpush2.msra.mxu0 0.0
    %2044 = vmatprep.subr.mxu0 0.0
    %2045 = vmatpush2.msra.mxu0 0.0
    %2046 = vmatprep.subr.mxu0 0.0
    %2047 = vmatpush2.msra.mxu0 0.0
    %2048 = vmatprep.subr.mxu0 0.0
    %2049 = vmatpush2.msra.mxu0 0.0
    %2050 = vmatprep.subr.mxu0 0.0
    %2051 = vmatpush2.msra.mxu0 0.0
    %2052 = vmatprep.subr.mxu0 0.0
    %2053 = vmatpush2.msra.mxu0 0.0
    %2054 = vmatprep.mubr.f32.mxu0 0.0
    %2055 = vmatmul.mubr.f32.gmra.mxu0 %v1988
    %v2056 = vpop.f32.mrf.mxu0
    %v2057 = vadd.f32 0.0, %v2056
    %v2058 = vpop.f32.mrf.mxu0
    %2059 = vdwg.mxu0
    %2061 = vrot.lane.b32.xlu0 %v1984, 32
    %v2062 = vpop.permute.xlu0 %2061
    %v2063 = vsel %vm93, %v2062, 0
    %2065 = vmatprep.subr.mxu0 0.0
    %2066 = vmatpush1.msra.mxu0 0.0
    %2067 = vmatprep.subr.mxu0 0.0
    %2068 = vmatpush1.msra.mxu0 0.0
    %2069 = vmatprep.subr.mxu0 0.0
    %2070 = vmatpush1.msra.mxu0 0.0
    %2071 = vmatprep.subr.mxu0 0.0
    %2072 = vmatpush1.msra.mxu0 0.0
    %2073 = vmatprep.subr.mxu0 0.0
    %2074 = vmatpush1.msra.mxu0 0.0
    %2075 = vmatprep.subr.mxu0 0.0
    %2076 = vmatpush1.msra.mxu0 0.0
    %2077 = vmatprep.subr.mxu0 0.0
    %2078 = vmatpush1.msra.mxu0 0.0
    %2079 = vmatprep.subr.mxu0 0.0
    %2080 = vmatpush1.msra.mxu0 0.0
    %2081 = vmatprep.subr.mxu0 0.0
    %2082 = vmatpush1.msra.mxu0 0.0
    %2083 = vmatprep.subr.mxu0 0.0
    %2084 = vmatpush1.msra.mxu0 0.0
    %2085 = vmatprep.subr.mxu0 0.0
    %2086 = vmatpush1.msra.mxu0 0.0
    %2087 = vmatprep.subr.mxu0 0.0
    %2088 = vmatpush1.msra.mxu0 0.0
    %2089 = vmatprep.subr.mxu0 0.0
    %2090 = vmatpush1.msra.mxu0 %v73
    %2091 = vmatprep.subr.mxu0 0.0
    %2092 = vmatpush1.msra.mxu0 %v72
    %2093 = vmatprep.subr.mxu0 0.0
    %2094 = vmatpush1.msra.mxu0 %v71
    %2095 = vmatprep.subr.mxu0 0.0
    %2096 = vmatpush1.msra.mxu0 %v70
    %2097 = vmatprep.subr.mxu0 0.0
    %2098 = vmatpush2.msra.mxu0 0.0
    %2099 = vmatprep.subr.mxu0 0.0
    %2100 = vmatpush2.msra.mxu0 0.0
    %2101 = vmatprep.subr.mxu0 0.0
    %2102 = vmatpush2.msra.mxu0 0.0
    %2103 = vmatprep.subr.mxu0 0.0
    %2104 = vmatpush2.msra.mxu0 0.0
    %2105 = vmatprep.subr.mxu0 0.0
    %2106 = vmatpush2.msra.mxu0 0.0
    %2107 = vmatprep.subr.mxu0 0.0
    %2108 = vmatpush2.msra.mxu0 0.0
    %2109 = vmatprep.subr.mxu0 0.0
    %2110 = vmatpush2.msra.mxu0 0.0
    %2111 = vmatprep.subr.mxu0 0.0
    %2112 = vmatpush2.msra.mxu0 0.0
    %2113 = vmatprep.subr.mxu0 0.0
    %2114 = vmatpush2.msra.mxu0 0.0
    %2115 = vmatprep.subr.mxu0 0.0
    %2116 = vmatpush2.msra.mxu0 0.0
    %2117 = vmatprep.subr.mxu0 0.0
    %2118 = vmatpush2.msra.mxu0 0.0
    %2119 = vmatprep.subr.mxu0 0.0
    %2120 = vmatpush2.msra.mxu0 0.0
    %2121 = vmatprep.subr.mxu0 0.0
    %2122 = vmatpush2.msra.mxu0 0.0
    %2123 = vmatprep.subr.mxu0 0.0
    %2124 = vmatpush2.msra.mxu0 0.0
    %2125 = vmatprep.subr.mxu0 0.0
    %2126 = vmatpush2.msra.mxu0 0.0
    %2127 = vmatprep.subr.mxu0 0.0
    %2128 = vmatpush2.msra.mxu0 0.0
    %2129 = vmatprep.mubr.f32.mxu0 0.0
    %2130 = vmatmul.mubr.f32.gmra.mxu0 %v2063
    %v2131 = vpop.f32.mrf.mxu0
    %v2132 = vadd.f32 %v2057, %v2131
    %v2133 = vpop.f32.mrf.mxu0
    %2134 = vdwg.mxu0
    %v2135 = vadd.f32 %v2132, %v90
    %v2136 = vxor.u32 %v2135, 2147483648
    %v2137 = vmul.f32 %v2136, 1.442695
    %v2138 = vpow.pop %v2137
    %v2139 = vadd.f32 %v2138, 1.0
    %v2140 = vrcp.pop %v2139
    %v2141 = vmul.f32 1.0, %v2140
    %v2142 = vtanh.pop %v2135
    %v2143 = vmul.f32 %v2141, %v1808
    %2145 = vrot.lane.b32.xlu0 %v2142, 64
    %v2146 = vpop.permute.xlu0 %2145
    %v2148 = vmul.f32 %v2141, %v2146
    %2150 = vrot.lane.b32.xlu0 %v2148, 32
    %v2151 = vpop.permute.xlu0 %2150
    %v2153 = vadd.f32 %v2143, %v2151
    %v2154 = vtanh.pop %v2153
    %2156 = vrot.lane.b32.xlu0 %v2154, 64
    %v2157 = vpop.permute.xlu0 %2156
    %v2159 = vmul.f32 %v2141, %v2157
    %2161 = vst.msk [vmem:[#allocation4] sm:$0xff] %vm93, %v2062
    %2163 = vrot.lane.b32.xlu0 %v2159, 32
    %v2164 = vpop.permute.xlu0 %2163
    %s2166 = scalar_lea.vmem [#allocation4], 8
    %2167 = vst.msk [vmem:[%s2166] sm:$0xff] %vm93, %v2164
    %2169 = vrot.lane.b32.xlu0 %v1978, 96
    %v2170 = vpop.permute.xlu0 %2169
    %2172 = vst.msk [vmem:[#allocation6] sm:$0xff] %vm93, %v2170
    %2174 = vrot.lane.b32.xlu0 %v2153, 96
    %v2175 = vpop.permute.xlu0 %2174
    %s2177 = scalar_lea.vmem [#allocation6], 8
    %2178 = vst.msk [vmem:[%s2177] sm:$0xff] %vm93, %v2175
    %v2179 = vld [vmem:[%s9] sm:$0xff]
    %v2180 = vld [vmem:[%s9 + $0x8] sm:$0xff]
    %v2181 = vld [vmem:[%s9 + $0x10] sm:$0xff]
    %v2182 = vld [vmem:[%s9 + $0x18] sm:$0xff]
    %v2183 = vld [vmem:[%s9 + $0x20] sm:$0xff]
    %v2184 = vld [vmem:[%s9 + $0x28] sm:$0xff]
    %v2185 = vld [vmem:[%s9 + $0x30] sm:$0xff]
    %v2186 = vld [vmem:[%s9 + $0x38] sm:$0xff]
    %v2187 = vld [vmem:[%s9 + $0x40] sm:$0xff]
    %v2188 = vld [vmem:[%s9 + $0x48] sm:$0xff]
    %v2189 = vld [vmem:[%s9 + $0x50] sm:$0xff]
    %v2190 = vld [vmem:[%s9 + $0x58] sm:$0xff]
    %v2191 = vld [vmem:[%s9 + $0x60] sm:$0xff]
    %v2192 = vld [vmem:[%s9 + $0x68] sm:$0xff]
    %v2193 = vld [vmem:[%s9 + $0x70] sm:$0xff]
    %v2194 = vld [vmem:[%s9 + $0x78] sm:$0xff]
    %v2195 = vld [vmem:[%s10] sm:$0xff]
    %v2196 = vld [vmem:[%s10 + $0x8] sm:$0xff]
    %v2197 = vld [vmem:[%s10 + $0x10] sm:$0xff]
    %v2198 = vld [vmem:[%s10 + $0x18] sm:$0xff]
    %v2199 = vld [vmem:[%s12] sm:$0xff]
    %v2200 = vld [vmem:[%s12 + $0x8] sm:$0xff]
    %v2201 = vld [vmem:[%s12 + $0x10] sm:$0xff]
    %v2202 = vld [vmem:[%s12 + $0x18] sm:$0xff]
    %v2203 = vld [vmem:[%s14] sm:$0xff]
    %v2204 = vld [vmem:[%s14 + $0x8] sm:$0xff]
    %v2205 = vld [vmem:[%s14 + $0x10] sm:$0xff]
    %v2206 = vld [vmem:[%s14 + $0x18] sm:$0xff]
    %v2207 = vld [vmem:[%s11] sm:$0x1]
    %v2209 = vlaneseq
    %v2210 = vshrl.u32 %v2209, 7
    %v2211 = vsub.s32 0, %v2210
    %v2212 = vrot.slane %v2207, %v2211
    %v2214 = vld [vmem:[%s13] sm:$0x1]
    %v2216 = vlaneseq
    %v2217 = vshrl.u32 %v2216, 7
    %v2218 = vsub.s32 0, %v2217
    %v2219 = vrot.slane %v2214, %v2218
    %v2221 = vld [vmem:[%s15] sm:$0x1]
    %v2223 = vlaneseq
    %v2224 = vshrl.u32 %v2223, 7
    %v2225 = vsub.s32 0, %v2224
    %v2226 = vrot.slane %v2221, %v2225
    %v2228 = vlaneseq
    %v2229 = vand.u32 %v2228, 127
    %v2230 = vcvt.s32.f32 %v2229
    %v2231 = vld [vmem:[%s8] sm:$0xff]
    %2232 = vset.pattern.permute.xlu0 0
    %2233 = vperm.xlu0 %2232, %v2231
    %v2234 = vpop.permute.xlu0 %2233
    %vm2235 = vcmp.eq.s32.totalorder %v2229, %v2234
    %v2236 = vsel %vm2235, 1, 0
    %v2237 = vcvt.s32.f32 %v2236
    %s2238 = sld [smem:[#allocation3]]
    %p2239 = scmp.eq.s32.totalorder %s2238, 1
    %s2240 = scalar_select %p2239, 1, 0
    %s2241 = scvt.s32.f32 %s2240
    %v2242 = vstv %s2241
    %v2243 = vmul.f32 %v2242, %v2237
    %s2244 = ssub.f32 1.0, %s2241
    %v2245 = vstv %s2244
    %v2246 = vmul.f32 %v2245, 0.0
    %v2247 = vadd.f32 %v2243, %v2246
    %2248 = vmatprep.subr.mxu0 0.0
    %2249 = vmatpush1.msra.mxu0 %v2194
    %2250 = vmatprep.subr.mxu0 0.0
    %2251 = vmatpush1.msra.mxu0 %v2193
    %2252 = vmatprep.subr.mxu0 0.0
    %2253 = vmatpush1.msra.mxu0 %v2192
    %2254 = vmatprep.subr.mxu0 0.0
    %2255 = vmatpush1.msra.mxu0 %v2191
    %2256 = vmatprep.subr.mxu0 0.0
    %2257 = vmatpush1.msra.mxu0 %v2190
    %2258 = vmatprep.subr.mxu0 0.0
    %2259 = vmatpush1.msra.mxu0 %v2189
    %2260 = vmatprep.subr.mxu0 0.0
    %2261 = vmatpush1.msra.mxu0 %v2188
    %2262 = vmatprep.subr.mxu0 0.0
    %2263 = vmatpush1.msra.mxu0 %v2187
    %2264 = vmatprep.subr.mxu0 0.0
    %2265 = vmatpush1.msra.mxu0 %v2186
    %2266 = vmatprep.subr.mxu0 0.0
    %2267 = vmatpush1.msra.mxu0 %v2185
    %2268 = vmatprep.subr.mxu0 0.0
    %2269 = vmatpush1.msra.mxu0 %v2184
    %2270 = vmatprep.subr.mxu0 0.0
    %2271 = vmatpush1.msra.mxu0 %v2183
    %2272 = vmatprep.subr.mxu0 0.0
    %2273 = vmatpush1.msra.mxu0 %v2182
    %2274 = vmatprep.subr.mxu0 0.0
    %2275 = vmatpush1.msra.mxu0 %v2181
    %2276 = vmatprep.subr.mxu0 0.0
    %2277 = vmatpush1.msra.mxu0 %v2180
    %2278 = vmatprep.subr.mxu0 0.0
    %2279 = vmatpush1.msra.mxu0 %v2179
    %2280 = vmatprep.subr.mxu0 0.0
    %2281 = vmatpush2.msra.mxu0 0.0
    %2282 = vmatprep.subr.mxu0 0.0
    %2283 = vmatpush2.msra.mxu0 0.0
    %2284 = vmatprep.subr.mxu0 0.0
    %2285 = vmatpush2.msra.mxu0 0.0
    %2286 = vmatprep.subr.mxu0 0.0
    %2287 = vmatpush2.msra.mxu0 0.0
    %2288 = vmatprep.subr.mxu0 0.0
    %2289 = vmatpush2.msra.mxu0 0.0
    %2290 = vmatprep.subr.mxu0 0.0
    %2291 = vmatpush2.msra.mxu0 0.0
    %2292 = vmatprep.subr.mxu0 0.0
    %2293 = vmatpush2.msra.mxu0 0.0
    %2294 = vmatprep.subr.mxu0 0.0
    %2295 = vmatpush2.msra.mxu0 0.0
    %2296 = vmatprep.subr.mxu0 0.0
    %2297 = vmatpush2.msra.mxu0 0.0
    %2298 = vmatprep.subr.mxu0 0.0
    %2299 = vmatpush2.msra.mxu0 0.0
    %2300 = vmatprep.subr.mxu0 0.0
    %2301 = vmatpush2.msra.mxu0 0.0
    %2302 = vmatprep.subr.mxu0 0.0
    %2303 = vmatpush2.msra.mxu0 0.0
    %2304 = vmatprep.subr.mxu0 0.0
    %2305 = vmatpush2.msra.mxu0 0.0
    %2306 = vmatprep.subr.mxu0 0.0
    %2307 = vmatpush2.msra.mxu0 0.0
    %2308 = vmatprep.subr.mxu0 0.0
    %2309 = vmatpush2.msra.mxu0 0.0
    %2310 = vmatprep.subr.mxu0 0.0
    %2311 = vmatpush2.msra.mxu0 0.0
    %2312 = vmatprep.mubr.f32.mxu0 0.0
    %2313 = vmatmul.mubr.f32.gmra.mxu0 %v2247
    %v2314 = vpop.f32.mrf.mxu0
    %v2315 = vadd.f32 0.0, %v2314
    %v2316 = vpop.f32.mrf.mxu0
    %2317 = vdwg.mxu0
    %v2319 = vsel %vm93, %v2315, 0
    %2321 = vmatprep.subr.mxu0 0.0
    %2322 = vmatpush1.msra.mxu0 0.0
    %2323 = vmatprep.subr.mxu0 0.0
    %2324 = vmatpush1.msra.mxu0 0.0
    %2325 = vmatprep.subr.mxu0 0.0
    %2326 = vmatpush1.msra.mxu0 0.0
    %2327 = vmatprep.subr.mxu0 0.0
    %2328 = vmatpush1.msra.mxu0 0.0
    %2329 = vmatprep.subr.mxu0 0.0
    %2330 = vmatpush1.msra.mxu0 0.0
    %2331 = vmatprep.subr.mxu0 0.0
    %2332 = vmatpush1.msra.mxu0 0.0
    %2333 = vmatprep.subr.mxu0 0.0
    %2334 = vmatpush1.msra.mxu0 0.0
    %2335 = vmatprep.subr.mxu0 0.0
    %2336 = vmatpush1.msra.mxu0 0.0
    %2337 = vmatprep.subr.mxu0 0.0
    %2338 = vmatpush1.msra.mxu0 0.0
    %2339 = vmatprep.subr.mxu0 0.0
    %2340 = vmatpush1.msra.mxu0 0.0
    %2341 = vmatprep.subr.mxu0 0.0
    %2342 = vmatpush1.msra.mxu0 0.0
    %2343 = vmatprep.subr.mxu0 0.0
    %2344 = vmatpush1.msra.mxu0 0.0
    %2345 = vmatprep.subr.mxu0 0.0
    %2346 = vmatpush1.msra.mxu0 %v2198
    %2347 = vmatprep.subr.mxu0 0.0
    %2348 = vmatpush1.msra.mxu0 %v2197
    %2349 = vmatprep.subr.mxu0 0.0
    %2350 = vmatpush1.msra.mxu0 %v2196
    %2351 = vmatprep.subr.mxu0 0.0
    %2352 = vmatpush1.msra.mxu0 %v2195
    %2353 = vmatprep.subr.mxu0 0.0
    %2354 = vmatpush2.msra.mxu0 0.0
    %2355 = vmatprep.subr.mxu0 0.0
    %2356 = vmatpush2.msra.mxu0 0.0
    %2357 = vmatprep.subr.mxu0 0.0
    %2358 = vmatpush2.msra.mxu0 0.0
    %2359 = vmatprep.subr.mxu0 0.0
    %2360 = vmatpush2.msra.mxu0 0.0
    %2361 = vmatprep.subr.mxu0 0.0
    %2362 = vmatpush2.msra.mxu0 0.0
    %2363 = vmatprep.subr.mxu0 0.0
    %2364 = vmatpush2.msra.mxu0 0.0
    %2365 = vmatprep.subr.mxu0 0.0
    %2366 = vmatpush2.msra.mxu0 0.0
    %2367 = vmatprep.subr.mxu0 0.0
    %2368 = vmatpush2.msra.mxu0 0.0
    %2369 = vmatprep.subr.mxu0 0.0
    %2370 = vmatpush2.msra.mxu0 0.0
    %2371 = vmatprep.subr.mxu0 0.0
    %2372 = vmatpush2.msra.mxu0 0.0
    %2373 = vmatprep.subr.mxu0 0.0
    %2374 = vmatpush2.msra.mxu0 0.0
    %2375 = vmatprep.subr.mxu0 0.0
    %2376 = vmatpush2.msra.mxu0 0.0
    %2377 = vmatprep.subr.mxu0 0.0
    %2378 = vmatpush2.msra.mxu0 0.0
    %2379 = vmatprep.subr.mxu0 0.0
    %2380 = vmatpush2.msra.mxu0 0.0
    %2381 = vmatprep.subr.mxu0 0.0
    %2382 = vmatpush2.msra.mxu0 0.0
    %2383 = vmatprep.subr.mxu0 0.0
    %2384 = vmatpush2.msra.mxu0 0.0
    %2385 = vmatprep.mubr.f32.mxu0 0.0
    %2386 = vmatmul.mubr.f32.gmra.mxu0 %v2319
    %v2387 = vpop.f32.mrf.mxu0
    %v2388 = vadd.f32 %v2212, %v2387
    %v2389 = vpop.f32.mrf.mxu0
    %2390 = vdwg.mxu0
    %v2391 = vxor.u32 %v2388, 2147483648
    %v2392 = vmul.f32 %v2391, 1.442695
    %v2393 = vpow.pop %v2392
    %v2394 = vadd.f32 %v2393, 1.0
    %v2395 = vrcp.pop %v2394
    %v2396 = vmul.f32 1.0, %v2395
    %v2397 = vtanh.pop %v2388
    %2399 = vrot.lane.b32.xlu0 %v2397, 64
    %v2400 = vpop.permute.xlu0 %2399
    %v2402 = vmul.f32 %v2396, %v2400
    %v2403 = vtanh.pop %v2402
    %2405 = vrot.lane.b32.xlu0 %v2403, 96
    %v2406 = vpop.permute.xlu0 %2405
    %v2408 = vmul.f32 %v2396, %v2406
    %2410 = vrot.lane.b32.xlu0 %v2408, 32
    %v2411 = vpop.permute.xlu0 %2410
    %v2412 = vsel %vm93, %v2411, 0
    %2414 = vmatprep.subr.mxu0 0.0
    %2415 = vmatpush1.msra.mxu0 0.0
    %2416 = vmatprep.subr.mxu0 0.0
    %2417 = vmatpush1.msra.mxu0 0.0
    %2418 = vmatprep.subr.mxu0 0.0
    %2419 = vmatpush1.msra.mxu0 0.0
    %2420 = vmatprep.subr.mxu0 0.0
    %2421 = vmatpush1.msra.mxu0 0.0
    %2422 = vmatprep.subr.mxu0 0.0
    %2423 = vmatpush1.msra.mxu0 0.0
    %2424 = vmatprep.subr.mxu0 0.0
    %2425 = vmatpush1.msra.mxu0 0.0
    %2426 = vmatprep.subr.mxu0 0.0
    %2427 = vmatpush1.msra.mxu0 0.0
    %2428 = vmatprep.subr.mxu0 0.0
    %2429 = vmatpush1.msra.mxu0 0.0
    %2430 = vmatprep.subr.mxu0 0.0
    %2431 = vmatpush1.msra.mxu0 0.0
    %2432 = vmatprep.subr.mxu0 0.0
    %2433 = vmatpush1.msra.mxu0 0.0
    %2434 = vmatprep.subr.mxu0 0.0
    %2435 = vmatpush1.msra.mxu0 0.0
    %2436 = vmatprep.subr.mxu0 0.0
    %2437 = vmatpush1.msra.mxu0 0.0
    %2438 = vmatprep.subr.mxu0 0.0
    %2439 = vmatpush1.msra.mxu0 %v2202
    %2440 = vmatprep.subr.mxu0 0.0
    %2441 = vmatpush1.msra.mxu0 %v2201
    %2442 = vmatprep.subr.mxu0 0.0
    %2443 = vmatpush1.msra.mxu0 %v2200
    %2444 = vmatprep.subr.mxu0 0.0
    %2445 = vmatpush1.msra.mxu0 %v2199
    %2446 = vmatprep.subr.mxu0 0.0
    %2447 = vmatpush2.msra.mxu0 0.0
    %2448 = vmatprep.subr.mxu0 0.0
    %2449 = vmatpush2.msra.mxu0 0.0
    %2450 = vmatprep.subr.mxu0 0.0
    %2451 = vmatpush2.msra.mxu0 0.0
    %2452 = vmatprep.subr.mxu0 0.0
    %2453 = vmatpush2.msra.mxu0 0.0
    %2454 = vmatprep.subr.mxu0 0.0
    %2455 = vmatpush2.msra.mxu0 0.0
    %2456 = vmatprep.subr.mxu0 0.0
    %2457 = vmatpush2.msra.mxu0 0.0
    %2458 = vmatprep.subr.mxu0 0.0
    %2459 = vmatpush2.msra.mxu0 0.0
    %2460 = vmatprep.subr.mxu0 0.0
    %2461 = vmatpush2.msra.mxu0 0.0
    %2462 = vmatprep.subr.mxu0 0.0
    %2463 = vmatpush2.msra.mxu0 0.0
    %2464 = vmatprep.subr.mxu0 0.0
    %2465 = vmatpush2.msra.mxu0 0.0
    %2466 = vmatprep.subr.mxu0 0.0
    %2467 = vmatpush2.msra.mxu0 0.0
    %2468 = vmatprep.subr.mxu0 0.0
    %2469 = vmatpush2.msra.mxu0 0.0
    %2470 = vmatprep.subr.mxu0 0.0
    %2471 = vmatpush2.msra.mxu0 0.0
    %2472 = vmatprep.subr.mxu0 0.0
    %2473 = vmatpush2.msra.mxu0 0.0
    %2474 = vmatprep.subr.mxu0 0.0
    %2475 = vmatpush2.msra.mxu0 0.0
    %2476 = vmatprep.subr.mxu0 0.0
    %2477 = vmatpush2.msra.mxu0 0.0
    %2478 = vmatprep.mubr.f32.mxu0 0.0
    %2479 = vmatmul.mubr.f32.gmra.mxu0 %v2412
    %v2480 = vpop.f32.mrf.mxu0
    %v2481 = vadd.f32 %v2219, %v2480
    %v2482 = vpop.f32.mrf.mxu0
    %2483 = vdwg.mxu0
    %v2484 = vxor.u32 %v2481, 2147483648
    %v2485 = vmul.f32 %v2484, 1.442695
    %v2486 = vpow.pop %v2485
    %v2487 = vadd.f32 %v2486, 1.0
    %v2488 = vrcp.pop %v2487
    %v2489 = vmul.f32 1.0, %v2488
    %v2490 = vtanh.pop %v2481
    %2492 = vrot.lane.b32.xlu0 %v2490, 64
    %v2493 = vpop.permute.xlu0 %2492
    %v2495 = vmul.f32 %v2489, %v2493
    %v2496 = vtanh.pop %v2495
    %2498 = vrot.lane.b32.xlu0 %v2496, 96
    %v2499 = vpop.permute.xlu0 %2498
    %v2501 = vmul.f32 %v2489, %v2499
    %2503 = vrot.lane.b32.xlu0 %v2501, 32
    %v2504 = vpop.permute.xlu0 %2503
    %v2505 = vsel %vm93, %v2504, 0
    %2507 = vmatprep.subr.mxu0 0.0
    %2508 = vmatpush1.msra.mxu0 0.0
    %2509 = vmatprep.subr.mxu0 0.0
    %2510 = vmatpush1.msra.mxu0 0.0
    %2511 = vmatprep.subr.mxu0 0.0
    %2512 = vmatpush1.msra.mxu0 0.0
    %2513 = vmatprep.subr.mxu0 0.0
    %2514 = vmatpush1.msra.mxu0 0.0
    %2515 = vmatprep.subr.mxu0 0.0
    %2516 = vmatpush1.msra.mxu0 0.0
    %2517 = vmatprep.subr.mxu0 0.0
    %2518 = vmatpush1.msra.mxu0 0.0
    %2519 = vmatprep.subr.mxu0 0.0
    %2520 = vmatpush1.msra.mxu0 0.0
    %2521 = vmatprep.subr.mxu0 0.0
    %2522 = vmatpush1.msra.mxu0 0.0
    %2523 = vmatprep.subr.mxu0 0.0
    %2524 = vmatpush1.msra.mxu0 0.0
    %2525 = vmatprep.subr.mxu0 0.0
    %2526 = vmatpush1.msra.mxu0 0.0
    %2527 = vmatprep.subr.mxu0 0.0
    %2528 = vmatpush1.msra.mxu0 0.0
    %2529 = vmatprep.subr.mxu0 0.0
    %2530 = vmatpush1.msra.mxu0 0.0
    %2531 = vmatprep.subr.mxu0 0.0
    %2532 = vmatpush1.msra.mxu0 %v2206
    %2533 = vmatprep.subr.mxu0 0.0
    %2534 = vmatpush1.msra.mxu0 %v2205
    %2535 = vmatprep.subr.mxu0 0.0
    %2536 = vmatpush1.msra.mxu0 %v2204
    %2537 = vmatprep.subr.mxu0 0.0
    %2538 = vmatpush1.msra.mxu0 %v2203
    %2539 = vmatprep.subr.mxu0 0.0
    %2540 = vmatpush2.msra.mxu0 0.0
    %2541 = vmatprep.subr.mxu0 0.0
    %2542 = vmatpush2.msra.mxu0 0.0
    %2543 = vmatprep.subr.mxu0 0.0
    %2544 = vmatpush2.msra.mxu0 0.0
    %2545 = vmatprep.subr.mxu0 0.0
    %2546 = vmatpush2.msra.mxu0 0.0
    %2547 = vmatprep.subr.mxu0 0.0
    %2548 = vmatpush2.msra.mxu0 0.0
    %2549 = vmatprep.subr.mxu0 0.0
    %2550 = vmatpush2.msra.mxu0 0.0
    %2551 = vmatprep.subr.mxu0 0.0
    %2552 = vmatpush2.msra.mxu0 0.0
    %2553 = vmatprep.subr.mxu0 0.0
    %2554 = vmatpush2.msra.mxu0 0.0
    %2555 = vmatprep.subr.mxu0 0.0
    %2556 = vmatpush2.msra.mxu0 0.0
    %2557 = vmatprep.subr.mxu0 0.0
    %2558 = vmatpush2.msra.mxu0 0.0
    %2559 = vmatprep.subr.mxu0 0.0
    %2560 = vmatpush2.msra.mxu0 0.0
    %2561 = vmatprep.subr.mxu0 0.0
    %2562 = vmatpush2.msra.mxu0 0.0
    %2563 = vmatprep.subr.mxu0 0.0
    %2564 = vmatpush2.msra.mxu0 0.0
    %2565 = vmatprep.subr.mxu0 0.0
    %2566 = vmatpush2.msra.mxu0 0.0
    %2567 = vmatprep.subr.mxu0 0.0
    %2568 = vmatpush2.msra.mxu0 0.0
    %2569 = vmatprep.subr.mxu0 0.0
    %2570 = vmatpush2.msra.mxu0 0.0
    %2571 = vmatprep.mubr.f32.mxu0 0.0
    %2572 = vmatmul.mubr.f32.gmra.mxu0 %v2505
    %v2573 = vpop.f32.mrf.mxu0
    %v2574 = vadd.f32 %v2226, %v2573
    %v2575 = vpop.f32.mrf.mxu0
    %2576 = vdwg.mxu0
    %2577 = vst [vmem:[%s18] sm:$0xff] %v2574
    %2578 = vmax.xlane.f32.xlu0 %v2574
    %v2579 = vpop.xlane.xlu0 %2578
    %vm2580 = vcmp.eq.f32.partialorder %v2574, %v2579
    %v2581 = vsel %vm2580, %v2230, 128.0
    %2582 = vmin.xlane.f32.xlu0 %v2581
    %v2583 = vpop.xlane.xlu0 %2582
    %vm2584 = vcmp.eq.f32.partialorder %v2230, %v2583
    %v2585 = vsel %vm2584, 1, 0
    %v2586 = vcvt.s32.f32 %v2585
    %s2587 = scalar_lea.vmem %s8, 8
    %v2588 = vld [vmem:[%s2587] sm:$0xff]
    %2589 = vset.pattern.permute.xlu0 0
    %2590 = vperm.xlu0 %2589, %v2588
    %v2591 = vpop.permute.xlu0 %2590
    %vm2592 = vcmp.eq.s32.totalorder %v2229, %v2591
    %v2593 = vsel %vm2592, 1, 0
    %v2594 = vcvt.s32.f32 %v2593
    %s2595 = sld [smem:[#allocation3 + $0x1]]
    %p2596 = scmp.eq.s32.totalorder %s2595, 1
    %s2597 = scalar_select %p2596, 1, 0
    %s2598 = scvt.s32.f32 %s2597
    %v2599 = vstv %s2598
    %v2600 = vmul.f32 %v2599, %v2594
    %s2601 = ssub.f32 1.0, %s2598
    %v2602 = vstv %s2601
    %v2603 = vmul.f32 %v2602, %v2586
    %v2604 = vadd.f32 %v2600, %v2603
    %2605 = vmatprep.subr.mxu0 0.0
    %2606 = vmatpush1.msra.mxu0 %v2194
    %2607 = vmatprep.subr.mxu0 0.0
    %2608 = vmatpush1.msra.mxu0 %v2193
    %2609 = vmatprep.subr.mxu0 0.0
    %2610 = vmatpush1.msra.mxu0 %v2192
    %2611 = vmatprep.subr.mxu0 0.0
    %2612 = vmatpush1.msra.mxu0 %v2191
    %2613 = vmatprep.subr.mxu0 0.0
    %2614 = vmatpush1.msra.mxu0 %v2190
    %2615 = vmatprep.subr.mxu0 0.0
    %2616 = vmatpush1.msra.mxu0 %v2189
    %2617 = vmatprep.subr.mxu0 0.0
    %2618 = vmatpush1.msra.mxu0 %v2188
    %2619 = vmatprep.subr.mxu0 0.0
    %2620 = vmatpush1.msra.mxu0 %v2187
    %2621 = vmatprep.subr.mxu0 0.0
    %2622 = vmatpush1.msra.mxu0 %v2186
    %2623 = vmatprep.subr.mxu0 0.0
    %2624 = vmatpush1.msra.mxu0 %v2185
    %2625 = vmatprep.subr.mxu0 0.0
    %2626 = vmatpush1.msra.mxu0 %v2184
    %2627 = vmatprep.subr.mxu0 0.0
    %2628 = vmatpush1.msra.mxu0 %v2183
    %2629 = vmatprep.subr.mxu0 0.0
    %2630 = vmatpush1.msra.mxu0 %v2182
    %2631 = vmatprep.subr.mxu0 0.0
    %2632 = vmatpush1.msra.mxu0 %v2181
    %2633 = vmatprep.subr.mxu0 0.0
    %2634 = vmatpush1.msra.mxu0 %v2180
    %2635 = vmatprep.subr.mxu0 0.0
    %2636 = vmatpush1.msra.mxu0 %v2179
    %2637 = vmatprep.subr.mxu0 0.0
    %2638 = vmatpush2.msra.mxu0 0.0
    %2639 = vmatprep.subr.mxu0 0.0
    %2640 = vmatpush2.msra.mxu0 0.0
    %2641 = vmatprep.subr.mxu0 0.0
    %2642 = vmatpush2.msra.mxu0 0.0
    %2643 = vmatprep.subr.mxu0 0.0
    %2644 = vmatpush2.msra.mxu0 0.0
    %2645 = vmatprep.subr.mxu0 0.0
    %2646 = vmatpush2.msra.mxu0 0.0
    %2647 = vmatprep.subr.mxu0 0.0
    %2648 = vmatpush2.msra.mxu0 0.0
    %2649 = vmatprep.subr.mxu0 0.0
    %2650 = vmatpush2.msra.mxu0 0.0
    %2651 = vmatprep.subr.mxu0 0.0
    %2652 = vmatpush2.msra.mxu0 0.0
    %2653 = vmatprep.subr.mxu0 0.0
    %2654 = vmatpush2.msra.mxu0 0.0
    %2655 = vmatprep.subr.mxu0 0.0
    %2656 = vmatpush2.msra.mxu0 0.0
    %2657 = vmatprep.subr.mxu0 0.0
    %2658 = vmatpush2.msra.mxu0 0.0
    %2659 = vmatprep.subr.mxu0 0.0
    %2660 = vmatpush2.msra.mxu0 0.0
    %2661 = vmatprep.subr.mxu0 0.0
    %2662 = vmatpush2.msra.mxu0 0.0
    %2663 = vmatprep.subr.mxu0 0.0
    %2664 = vmatpush2.msra.mxu0 0.0
    %2665 = vmatprep.subr.mxu0 0.0
    %2666 = vmatpush2.msra.mxu0 0.0
    %2667 = vmatprep.subr.mxu0 0.0
    %2668 = vmatpush2.msra.mxu0 0.0
    %2669 = vmatprep.mubr.f32.mxu0 0.0
    %2670 = vmatmul.mubr.f32.gmra.mxu0 %v2604
    %v2671 = vpop.f32.mrf.mxu0
    %v2672 = vadd.f32 0.0, %v2671
    %v2673 = vpop.f32.mrf.mxu0
    %2674 = vdwg.mxu0
    %v2676 = vsel %vm93, %v2672, 0
    %2678 = vmatprep.subr.mxu0 0.0
    %2679 = vmatpush1.msra.mxu0 0.0
    %2680 = vmatprep.subr.mxu0 0.0
    %2681 = vmatpush1.msra.mxu0 0.0
    %2682 = vmatprep.subr.mxu0 0.0
    %2683 = vmatpush1.msra.mxu0 0.0
    %2684 = vmatprep.subr.mxu0 0.0
    %2685 = vmatpush1.msra.mxu0 0.0
    %2686 = vmatprep.subr.mxu0 0.0
    %2687 = vmatpush1.msra.mxu0 0.0
    %2688 = vmatprep.subr.mxu0 0.0
    %2689 = vmatpush1.msra.mxu0 0.0
    %2690 = vmatprep.subr.mxu0 0.0
    %2691 = vmatpush1.msra.mxu0 0.0
    %2692 = vmatprep.subr.mxu0 0.0
    %2693 = vmatpush1.msra.mxu0 0.0
    %2694 = vmatprep.subr.mxu0 0.0
    %2695 = vmatpush1.msra.mxu0 0.0
    %2696 = vmatprep.subr.mxu0 0.0
    %2697 = vmatpush1.msra.mxu0 0.0
    %2698 = vmatprep.subr.mxu0 0.0
    %2699 = vmatpush1.msra.mxu0 0.0
    %2700 = vmatprep.subr.mxu0 0.0
    %2701 = vmatpush1.msra.mxu0 0.0
    %2702 = vmatprep.subr.mxu0 0.0
    %2703 = vmatpush1.msra.mxu0 %v2198
    %2704 = vmatprep.subr.mxu0 0.0
    %2705 = vmatpush1.msra.mxu0 %v2197
    %2706 = vmatprep.subr.mxu0 0.0
    %2707 = vmatpush1.msra.mxu0 %v2196
    %2708 = vmatprep.subr.mxu0 0.0
    %2709 = vmatpush1.msra.mxu0 %v2195
    %2710 = vmatprep.subr.mxu0 0.0
    %2711 = vmatpush2.msra.mxu0 0.0
    %2712 = vmatprep.subr.mxu0 0.0
    %2713 = vmatpush2.msra.mxu0 0.0
    %2714 = vmatprep.subr.mxu0 0.0
    %2715 = vmatpush2.msra.mxu0 0.0
    %2716 = vmatprep.subr.mxu0 0.0
    %2717 = vmatpush2.msra.mxu0 0.0
    %2718 = vmatprep.subr.mxu0 0.0
    %2719 = vmatpush2.msra.mxu0 0.0
    %2720 = vmatprep.subr.mxu0 0.0
    %2721 = vmatpush2.msra.mxu0 0.0
    %2722 = vmatprep.subr.mxu0 0.0
    %2723 = vmatpush2.msra.mxu0 0.0
    %2724 = vmatprep.subr.mxu0 0.0
    %2725 = vmatpush2.msra.mxu0 0.0
    %2726 = vmatprep.subr.mxu0 0.0
    %2727 = vmatpush2.msra.mxu0 0.0
    %2728 = vmatprep.subr.mxu0 0.0
    %2729 = vmatpush2.msra.mxu0 0.0
    %2730 = vmatprep.subr.mxu0 0.0
    %2731 = vmatpush2.msra.mxu0 0.0
    %2732 = vmatprep.subr.mxu0 0.0
    %2733 = vmatpush2.msra.mxu0 0.0
    %2734 = vmatprep.subr.mxu0 0.0
    %2735 = vmatpush2.msra.mxu0 0.0
    %2736 = vmatprep.subr.mxu0 0.0
    %2737 = vmatpush2.msra.mxu0 0.0
    %2738 = vmatprep.subr.mxu0 0.0
    %2739 = vmatpush2.msra.mxu0 0.0
    %2740 = vmatprep.subr.mxu0 0.0
    %2741 = vmatpush2.msra.mxu0 0.0
    %2742 = vmatprep.mubr.f32.mxu0 0.0
    %2743 = vmatmul.mubr.f32.gmra.mxu0 %v2676
    %v2744 = vpop.f32.mrf.mxu0
    %v2745 = vadd.f32 %v2212, %v2744
    %v2746 = vpop.f32.mrf.mxu0
    %2747 = vdwg.mxu0
    %v2748 = vxor.u32 %v2745, 2147483648
    %v2749 = vmul.f32 %v2748, 1.442695
    %v2750 = vpow.pop %v2749
    %v2751 = vadd.f32 %v2750, 1.0
    %v2752 = vrcp.pop %v2751
    %v2753 = vmul.f32 1.0, %v2752
    %v2754 = vtanh.pop %v2745
    %2756 = vrot.lane.b32.xlu0 %v2754, 64
    %v2757 = vpop.permute.xlu0 %2756
    %v2759 = vmul.f32 %v2753, %v2757
    %v2760 = vtanh.pop %v2759
    %2762 = vrot.lane.b32.xlu0 %v2760, 96
    %v2763 = vpop.permute.xlu0 %2762
    %v2765 = vmul.f32 %v2753, %v2763
    %2767 = vrot.lane.b32.xlu0 %v2765, 32
    %v2768 = vpop.permute.xlu0 %2767
    %v2769 = vsel %vm93, %v2768, 0
    %2771 = vmatprep.subr.mxu0 0.0
    %2772 = vmatpush1.msra.mxu0 0.0
    %2773 = vmatprep.subr.mxu0 0.0
    %2774 = vmatpush1.msra.mxu0 0.0
    %2775 = vmatprep.subr.mxu0 0.0
    %2776 = vmatpush1.msra.mxu0 0.0
    %2777 = vmatprep.subr.mxu0 0.0
    %2778 = vmatpush1.msra.mxu0 0.0
    %2779 = vmatprep.subr.mxu0 0.0
    %2780 = vmatpush1.msra.mxu0 0.0
    %2781 = vmatprep.subr.mxu0 0.0
    %2782 = vmatpush1.msra.mxu0 0.0
    %2783 = vmatprep.subr.mxu0 0.0
    %2784 = vmatpush1.msra.mxu0 0.0
    %2785 = vmatprep.subr.mxu0 0.0
    %2786 = vmatpush1.msra.mxu0 0.0
    %2787 = vmatprep.subr.mxu0 0.0
    %2788 = vmatpush1.msra.mxu0 0.0
    %2789 = vmatprep.subr.mxu0 0.0
    %2790 = vmatpush1.msra.mxu0 0.0
    %2791 = vmatprep.subr.mxu0 0.0
    %2792 = vmatpush1.msra.mxu0 0.0
    %2793 = vmatprep.subr.mxu0 0.0
    %2794 = vmatpush1.msra.mxu0 0.0
    %2795 = vmatprep.subr.mxu0 0.0
    %2796 = vmatpush1.msra.mxu0 %v2202
    %2797 = vmatprep.subr.mxu0 0.0
    %2798 = vmatpush1.msra.mxu0 %v2201
    %2799 = vmatprep.subr.mxu0 0.0
    %2800 = vmatpush1.msra.mxu0 %v2200
    %2801 = vmatprep.subr.mxu0 0.0
    %2802 = vmatpush1.msra.mxu0 %v2199
    %2803 = vmatprep.subr.mxu0 0.0
    %2804 = vmatpush2.msra.mxu0 0.0
    %2805 = vmatprep.subr.mxu0 0.0
    %2806 = vmatpush2.msra.mxu0 0.0
    %2807 = vmatprep.subr.mxu0 0.0
    %2808 = vmatpush2.msra.mxu0 0.0
    %2809 = vmatprep.subr.mxu0 0.0
    %2810 = vmatpush2.msra.mxu0 0.0
    %2811 = vmatprep.subr.mxu0 0.0
    %2812 = vmatpush2.msra.mxu0 0.0
    %2813 = vmatprep.subr.mxu0 0.0
    %2814 = vmatpush2.msra.mxu0 0.0
    %2815 = vmatprep.subr.mxu0 0.0
    %2816 = vmatpush2.msra.mxu0 0.0
    %2817 = vmatprep.subr.mxu0 0.0
    %2818 = vmatpush2.msra.mxu0 0.0
    %2819 = vmatprep.subr.mxu0 0.0
    %2820 = vmatpush2.msra.mxu0 0.0
    %2821 = vmatprep.subr.mxu0 0.0
    %2822 = vmatpush2.msra.mxu0 0.0
    %2823 = vmatprep.subr.mxu0 0.0
    %2824 = vmatpush2.msra.mxu0 0.0
    %2825 = vmatprep.subr.mxu0 0.0
    %2826 = vmatpush2.msra.mxu0 0.0
    %2827 = vmatprep.subr.mxu0 0.0
    %2828 = vmatpush2.msra.mxu0 0.0
    %2829 = vmatprep.subr.mxu0 0.0
    %2830 = vmatpush2.msra.mxu0 0.0
    %2831 = vmatprep.subr.mxu0 0.0
    %2832 = vmatpush2.msra.mxu0 0.0
    %2833 = vmatprep.subr.mxu0 0.0
    %2834 = vmatpush2.msra.mxu0 0.0
    %2835 = vmatprep.mubr.f32.mxu0 0.0
    %2836 = vmatmul.mubr.f32.gmra.mxu0 %v2769
    %v2837 = vpop.f32.mrf.mxu0
    %v2838 = vadd.f32 %v2219, %v2837
    %v2839 = vpop.f32.mrf.mxu0
    %2840 = vdwg.mxu0
    %v2841 = vxor.u32 %v2838, 2147483648
    %v2842 = vmul.f32 %v2841, 1.442695
    %v2843 = vpow.pop %v2842
    %v2844 = vadd.f32 %v2843, 1.0
    %v2845 = vrcp.pop %v2844
    %v2846 = vmul.f32 1.0, %v2845
    %v2847 = vtanh.pop %v2838
    %2849 = vrot.lane.b32.xlu0 %v2847, 64
    %v2850 = vpop.permute.xlu0 %2849
    %v2852 = vmul.f32 %v2846, %v2850
    %v2853 = vtanh.pop %v2852
    %2855 = vrot.lane.b32.xlu0 %v2853, 96
    %v2856 = vpop.permute.xlu0 %2855
    %v2858 = vmul.f32 %v2846, %v2856
    %2860 = vrot.lane.b32.xlu0 %v2858, 32
    %v2861 = vpop.permute.xlu0 %2860
    %v2862 = vsel %vm93, %v2861, 0
    %2864 = vmatprep.subr.mxu0 0.0
    %2865 = vmatpush1.msra.mxu0 0.0
    %2866 = vmatprep.subr.mxu0 0.0
    %2867 = vmatpush1.msra.mxu0 0.0
    %2868 = vmatprep.subr.mxu0 0.0
    %2869 = vmatpush1.msra.mxu0 0.0
    %2870 = vmatprep.subr.mxu0 0.0
    %2871 = vmatpush1.msra.mxu0 0.0
    %2872 = vmatprep.subr.mxu0 0.0
    %2873 = vmatpush1.msra.mxu0 0.0
    %2874 = vmatprep.subr.mxu0 0.0
    %2875 = vmatpush1.msra.mxu0 0.0
    %2876 = vmatprep.subr.mxu0 0.0
    %2877 = vmatpush1.msra.mxu0 0.0
    %2878 = vmatprep.subr.mxu0 0.0
    %2879 = vmatpush1.msra.mxu0 0.0
    %2880 = vmatprep.subr.mxu0 0.0
    %2881 = vmatpush1.msra.mxu0 0.0
    %2882 = vmatprep.subr.mxu0 0.0
    %2883 = vmatpush1.msra.mxu0 0.0
    %2884 = vmatprep.subr.mxu0 0.0
    %2885 = vmatpush1.msra.mxu0 0.0
    %2886 = vmatprep.subr.mxu0 0.0
    %2887 = vmatpush1.msra.mxu0 0.0
    %2888 = vmatprep.subr.mxu0 0.0
    %2889 = vmatpush1.msra.mxu0 %v2206
    %2890 = vmatprep.subr.mxu0 0.0
    %2891 = vmatpush1.msra.mxu0 %v2205
    %2892 = vmatprep.subr.mxu0 0.0
    %2893 = vmatpush1.msra.mxu0 %v2204
    %2894 = vmatprep.subr.mxu0 0.0
    %2895 = vmatpush1.msra.mxu0 %v2203
    %2896 = vmatprep.subr.mxu0 0.0
    %2897 = vmatpush2.msra.mxu0 0.0
    %2898 = vmatprep.subr.mxu0 0.0
    %2899 = vmatpush2.msra.mxu0 0.0
    %2900 = vmatprep.subr.mxu0 0.0
    %2901 = vmatpush2.msra.mxu0 0.0
    %2902 = vmatprep.subr.mxu0 0.0
    %2903 = vmatpush2.msra.mxu0 0.0
    %2904 = vmatprep.subr.mxu0 0.0
    %2905 = vmatpush2.msra.mxu0 0.0
    %2906 = vmatprep.subr.mxu0 0.0
    %2907 = vmatpush2.msra.mxu0 0.0
    %2908 = vmatprep.subr.mxu0 0.0
    %2909 = vmatpush2.msra.mxu0 0.0
    %2910 = vmatprep.subr.mxu0 0.0
    %2911 = vmatpush2.msra.mxu0 0.0
    %2912 = vmatprep.subr.mxu0 0.0
    %2913 = vmatpush2.msra.mxu0 0.0
    %2914 = vmatprep.subr.mxu0 0.0
    %2915 = vmatpush2.msra.mxu0 0.0
    %2916 = vmatprep.subr.mxu0 0.0
    %2917 = vmatpush2.msra.mxu0 0.0
    %2918 = vmatprep.subr.mxu0 0.0
    %2919 = vmatpush2.msra.mxu0 0.0
    %2920 = vmatprep.subr.mxu0 0.0
    %2921 = vmatpush2.msra.mxu0 0.0
    %2922 = vmatprep.subr.mxu0 0.0
    %2923 = vmatpush2.msra.mxu0 0.0
    %2924 = vmatprep.subr.mxu0 0.0
    %2925 = vmatpush2.msra.mxu0 0.0
    %2926 = vmatprep.subr.mxu0 0.0
    %2927 = vmatpush2.msra.mxu0 0.0
    %2928 = vmatprep.mubr.f32.mxu0 0.0
    %2929 = vmatmul.mubr.f32.gmra.mxu0 %v2862
    %v2930 = vpop.f32.mrf.mxu0
    %v2931 = vadd.f32 %v2226, %v2930
    %v2932 = vpop.f32.mrf.mxu0
    %2933 = vdwg.mxu0
    %s2934 = scalar_lea.vmem %s18, 8
    %2935 = vst [vmem:[%s2934] sm:$0xff] %v2931
    %2936 = vmax.xlane.f32.xlu0 %v2931
    %v2937 = vpop.xlane.xlu0 %2936
    %vm2938 = vcmp.eq.f32.partialorder %v2931, %v2937
    %v2939 = vsel %vm2938, %v2230, 128.0
    %2940 = vmin.xlane.f32.xlu0 %v2939
    %v2941 = vpop.xlane.xlu0 %2940
    %vm2942 = vcmp.eq.f32.partialorder %v2230, %v2941
    %v2943 = vsel %vm2942, 1, 0
    %v2944 = vcvt.s32.f32 %v2943
    %s2945 = scalar_lea.vmem %s8, 16
    %v2946 = vld [vmem:[%s2945] sm:$0xff]
    %2947 = vset.pattern.permute.xlu0 0
    %2948 = vperm.xlu0 %2947, %v2946
    %v2949 = vpop.permute.xlu0 %2948
    %vm2950 = vcmp.eq.s32.totalorder %v2229, %v2949
    %v2951 = vsel %vm2950, 1, 0
    %v2952 = vcvt.s32.f32 %v2951
    %s2953 = sld [smem:[#allocation3 + $0x2]]
    %p2954 = scmp.eq.s32.totalorder %s2953, 1
    %s2955 = scalar_select %p2954, 1, 0
    %s2956 = scvt.s32.f32 %s2955
    %v2957 = vstv %s2956
    %v2958 = vmul.f32 %v2957, %v2952
    %s2959 = ssub.f32 1.0, %s2956
    %v2960 = vstv %s2959
    %v2961 = vmul.f32 %v2960, %v2944
    %v2962 = vadd.f32 %v2958, %v2961
    %2963 = vmatprep.subr.mxu0 0.0
    %2964 = vmatpush1.msra.mxu0 %v2194
    %2965 = vmatprep.subr.mxu0 0.0
    %2966 = vmatpush1.msra.mxu0 %v2193
    %2967 = vmatprep.subr.mxu0 0.0
    %2968 = vmatpush1.msra.mxu0 %v2192
    %2969 = vmatprep.subr.mxu0 0.0
    %2970 = vmatpush1.msra.mxu0 %v2191
    %2971 = vmatprep.subr.mxu0 0.0
    %2972 = vmatpush1.msra.mxu0 %v2190
    %2973 = vmatprep.subr.mxu0 0.0
    %2974 = vmatpush1.msra.mxu0 %v2189
    %2975 = vmatprep.subr.mxu0 0.0
    %2976 = vmatpush1.msra.mxu0 %v2188
    %2977 = vmatprep.subr.mxu0 0.0
    %2978 = vmatpush1.msra.mxu0 %v2187
    %2979 = vmatprep.subr.mxu0 0.0
    %2980 = vmatpush1.msra.mxu0 %v2186
    %2981 = vmatprep.subr.mxu0 0.0
    %2982 = vmatpush1.msra.mxu0 %v2185
    %2983 = vmatprep.subr.mxu0 0.0
    %2984 = vmatpush1.msra.mxu0 %v2184
    %2985 = vmatprep.subr.mxu0 0.0
    %2986 = vmatpush1.msra.mxu0 %v2183
    %2987 = vmatprep.subr.mxu0 0.0
    %2988 = vmatpush1.msra.mxu0 %v2182
    %2989 = vmatprep.subr.mxu0 0.0
    %2990 = vmatpush1.msra.mxu0 %v2181
    %2991 = vmatprep.subr.mxu0 0.0
    %2992 = vmatpush1.msra.mxu0 %v2180
    %2993 = vmatprep.subr.mxu0 0.0
    %2994 = vmatpush1.msra.mxu0 %v2179
    %2995 = vmatprep.subr.mxu0 0.0
    %2996 = vmatpush2.msra.mxu0 0.0
    %2997 = vmatprep.subr.mxu0 0.0
    %2998 = vmatpush2.msra.mxu0 0.0
    %2999 = vmatprep.subr.mxu0 0.0
    %3000 = vmatpush2.msra.mxu0 0.0
    %3001 = vmatprep.subr.mxu0 0.0
    %3002 = vmatpush2.msra.mxu0 0.0
    %3003 = vmatprep.subr.mxu0 0.0
    %3004 = vmatpush2.msra.mxu0 0.0
    %3005 = vmatprep.subr.mxu0 0.0
    %3006 = vmatpush2.msra.mxu0 0.0
    %3007 = vmatprep.subr.mxu0 0.0
    %3008 = vmatpush2.msra.mxu0 0.0
    %3009 = vmatprep.subr.mxu0 0.0
    %3010 = vmatpush2.msra.mxu0 0.0
    %3011 = vmatprep.subr.mxu0 0.0
    %3012 = vmatpush2.msra.mxu0 0.0
    %3013 = vmatprep.subr.mxu0 0.0
    %3014 = vmatpush2.msra.mxu0 0.0
    %3015 = vmatprep.subr.mxu0 0.0
    %3016 = vmatpush2.msra.mxu0 0.0
    %3017 = vmatprep.subr.mxu0 0.0
    %3018 = vmatpush2.msra.mxu0 0.0
    %3019 = vmatprep.subr.mxu0 0.0
    %3020 = vmatpush2.msra.mxu0 0.0
    %3021 = vmatprep.subr.mxu0 0.0
    %3022 = vmatpush2.msra.mxu0 0.0
    %3023 = vmatprep.subr.mxu0 0.0
    %3024 = vmatpush2.msra.mxu0 0.0
    %3025 = vmatprep.subr.mxu0 0.0
    %3026 = vmatpush2.msra.mxu0 0.0
    %3027 = vmatprep.mubr.f32.mxu0 0.0
    %3028 = vmatmul.mubr.f32.gmra.mxu0 %v2962
    %v3029 = vpop.f32.mrf.mxu0
    %v3030 = vadd.f32 0.0, %v3029
    %v3031 = vpop.f32.mrf.mxu0
    %3032 = vdwg.mxu0
    %v3034 = vsel %vm93, %v3030, 0
    %3036 = vmatprep.subr.mxu0 0.0
    %3037 = vmatpush1.msra.mxu0 0.0
    %3038 = vmatprep.subr.mxu0 0.0
    %3039 = vmatpush1.msra.mxu0 0.0
    %3040 = vmatprep.subr.mxu0 0.0
    %3041 = vmatpush1.msra.mxu0 0.0
    %3042 = vmatprep.subr.mxu0 0.0
    %3043 = vmatpush1.msra.mxu0 0.0
    %3044 = vmatprep.subr.mxu0 0.0
    %3045 = vmatpush1.msra.mxu0 0.0
    %3046 = vmatprep.subr.mxu0 0.0
    %3047 = vmatpush1.msra.mxu0 0.0
    %3048 = vmatprep.subr.mxu0 0.0
    %3049 = vmatpush1.msra.mxu0 0.0
    %3050 = vmatprep.subr.mxu0 0.0
    %3051 = vmatpush1.msra.mxu0 0.0
    %3052 = vmatprep.subr.mxu0 0.0
    %3053 = vmatpush1.msra.mxu0 0.0
    %3054 = vmatprep.subr.mxu0 0.0
    %3055 = vmatpush1.msra.mxu0 0.0
    %3056 = vmatprep.subr.mxu0 0.0
    %3057 = vmatpush1.msra.mxu0 0.0
    %3058 = vmatprep.subr.mxu0 0.0
    %3059 = vmatpush1.msra.mxu0 0.0
    %3060 = vmatprep.subr.mxu0 0.0
    %3061 = vmatpush1.msra.mxu0 %v2198
    %3062 = vmatprep.subr.mxu0 0.0
    %3063 = vmatpush1.msra.mxu0 %v2197
    %3064 = vmatprep.subr.mxu0 0.0
    %3065 = vmatpush1.msra.mxu0 %v2196
    %3066 = vmatprep.subr.mxu0 0.0
    %3067 = vmatpush1.msra.mxu0 %v2195
    %3068 = vmatprep.subr.mxu0 0.0
    %3069 = vmatpush2.msra.mxu0 0.0
    %3070 = vmatprep.subr.mxu0 0.0
    %3071 = vmatpush2.msra.mxu0 0.0
    %3072 = vmatprep.subr.mxu0 0.0
    %3073 = vmatpush2.msra.mxu0 0.0
    %3074 = vmatprep.subr.mxu0 0.0
    %3075 = vmatpush2.msra.mxu0 0.0
    %3076 = vmatprep.subr.mxu0 0.0
    %3077 = vmatpush2.msra.mxu0 0.0
    %3078 = vmatprep.subr.mxu0 0.0
    %3079 = vmatpush2.msra.mxu0 0.0
    %3080 = vmatprep.subr.mxu0 0.0
    %3081 = vmatpush2.msra.mxu0 0.0
    %3082 = vmatprep.subr.mxu0 0.0
    %3083 = vmatpush2.msra.mxu0 0.0
    %3084 = vmatprep.subr.mxu0 0.0
    %3085 = vmatpush2.msra.mxu0 0.0
    %3086 = vmatprep.subr.mxu0 0.0
    %3087 = vmatpush2.msra.mxu0 0.0
    %3088 = vmatprep.subr.mxu0 0.0
    %3089 = vmatpush2.msra.mxu0 0.0
    %3090 = vmatprep.subr.mxu0 0.0
    %3091 = vmatpush2.msra.mxu0 0.0
    %3092 = vmatprep.subr.mxu0 0.0
    %3093 = vmatpush2.msra.mxu0 0.0
    %3094 = vmatprep.subr.mxu0 0.0
    %3095 = vmatpush2.msra.mxu0 0.0
    %3096 = vmatprep.subr.mxu0 0.0
    %3097 = vmatpush2.msra.mxu0 0.0
    %3098 = vmatprep.subr.mxu0 0.0
    %3099 = vmatpush2.msra.mxu0 0.0
    %3100 = vmatprep.mubr.f32.mxu0 0.0
    %3101 = vmatmul.mubr.f32.gmra.mxu0 %v3034
    %v3102 = vpop.f32.mrf.mxu0
    %v3103 = vadd.f32 %v2212, %v3102
    %v3104 = vpop.f32.mrf.mxu0
    %3105 = vdwg.mxu0
    %v3106 = vxor.u32 %v3103, 2147483648
    %v3107 = vmul.f32 %v3106, 1.442695
    %v3108 = vpow.pop %v3107
    %v3109 = vadd.f32 %v3108, 1.0
    %v3110 = vrcp.pop %v3109
    %v3111 = vmul.f32 1.0, %v3110
    %v3112 = vtanh.pop %v3103
    %3114 = vrot.lane.b32.xlu0 %v3112, 64
    %v3115 = vpop.permute.xlu0 %3114
    %v3117 = vmul.f32 %v3111, %v3115
    %v3118 = vtanh.pop %v3117
    %3120 = vrot.lane.b32.xlu0 %v3118, 96
    %v3121 = vpop.permute.xlu0 %3120
    %v3123 = vmul.f32 %v3111, %v3121
    %3125 = vrot.lane.b32.xlu0 %v3123, 32
    %v3126 = vpop.permute.xlu0 %3125
    %v3127 = vsel %vm93, %v3126, 0
    %3129 = vmatprep.subr.mxu0 0.0
    %3130 = vmatpush1.msra.mxu0 0.0
    %3131 = vmatprep.subr.mxu0 0.0
    %3132 = vmatpush1.msra.mxu0 0.0
    %3133 = vmatprep.subr.mxu0 0.0
    %3134 = vmatpush1.msra.mxu0 0.0
    %3135 = vmatprep.subr.mxu0 0.0
    %3136 = vmatpush1.msra.mxu0 0.0
    %3137 = vmatprep.subr.mxu0 0.0
    %3138 = vmatpush1.msra.mxu0 0.0
    %3139 = vmatprep.subr.mxu0 0.0
    %3140 = vmatpush1.msra.mxu0 0.0
    %3141 = vmatprep.subr.mxu0 0.0
    %3142 = vmatpush1.msra.mxu0 0.0
    %3143 = vmatprep.subr.mxu0 0.0
    %3144 = vmatpush1.msra.mxu0 0.0
    %3145 = vmatprep.subr.mxu0 0.0
    %3146 = vmatpush1.msra.mxu0 0.0
    %3147 = vmatprep.subr.mxu0 0.0
    %3148 = vmatpush1.msra.mxu0 0.0
    %3149 = vmatprep.subr.mxu0 0.0
    %3150 = vmatpush1.msra.mxu0 0.0
    %3151 = vmatprep.subr.mxu0 0.0
    %3152 = vmatpush1.msra.mxu0 0.0
    %3153 = vmatprep.subr.mxu0 0.0
    %3154 = vmatpush1.msra.mxu0 %v2202
    %3155 = vmatprep.subr.mxu0 0.0
    %3156 = vmatpush1.msra.mxu0 %v2201
    %3157 = vmatprep.subr.mxu0 0.0
    %3158 = vmatpush1.msra.mxu0 %v2200
    %3159 = vmatprep.subr.mxu0 0.0
    %3160 = vmatpush1.msra.mxu0 %v2199
    %3161 = vmatprep.subr.mxu0 0.0
    %3162 = vmatpush2.msra.mxu0 0.0
    %3163 = vmatprep.subr.mxu0 0.0
    %3164 = vmatpush2.msra.mxu0 0.0
    %3165 = vmatprep.subr.mxu0 0.0
    %3166 = vmatpush2.msra.mxu0 0.0
    %3167 = vmatprep.subr.mxu0 0.0
    %3168 = vmatpush2.msra.mxu0 0.0
    %3169 = vmatprep.subr.mxu0 0.0
    %3170 = vmatpush2.msra.mxu0 0.0
    %3171 = vmatprep.subr.mxu0 0.0
    %3172 = vmatpush2.msra.mxu0 0.0
    %3173 = vmatprep.subr.mxu0 0.0
    %3174 = vmatpush2.msra.mxu0 0.0
    %3175 = vmatprep.subr.mxu0 0.0
    %3176 = vmatpush2.msra.mxu0 0.0
    %3177 = vmatprep.subr.mxu0 0.0
    %3178 = vmatpush2.msra.mxu0 0.0
    %3179 = vmatprep.subr.mxu0 0.0
    %3180 = vmatpush2.msra.mxu0 0.0
    %3181 = vmatprep.subr.mxu0 0.0
    %3182 = vmatpush2.msra.mxu0 0.0
    %3183 = vmatprep.subr.mxu0 0.0
    %3184 = vmatpush2.msra.mxu0 0.0
    %3185 = vmatprep.subr.mxu0 0.0
    %3186 = vmatpush2.msra.mxu0 0.0
    %3187 = vmatprep.subr.mxu0 0.0
    %3188 = vmatpush2.msra.mxu0 0.0
    %3189 = vmatprep.subr.mxu0 0.0
    %3190 = vmatpush2.msra.mxu0 0.0
    %3191 = vmatprep.subr.mxu0 0.0
    %3192 = vmatpush2.msra.mxu0 0.0
    %3193 = vmatprep.mubr.f32.mxu0 0.0
    %3194 = vmatmul.mubr.f32.gmra.mxu0 %v3127
    %v3195 = vpop.f32.mrf.mxu0
    %v3196 = vadd.f32 %v2219, %v3195
    %v3197 = vpop.f32.mrf.mxu0
    %3198 = vdwg.mxu0
    %v3199 = vxor.u32 %v3196, 2147483648
    %v3200 = vmul.f32 %v3199, 1.442695
    %v3201 = vpow.pop %v3200
    %v3202 = vadd.f32 %v3201, 1.0
    %v3203 = vrcp.pop %v3202
    %v3204 = vmul.f32 1.0, %v3203
    %v3205 = vtanh.pop %v3196
    %3207 = vrot.lane.b32.xlu0 %v3205, 64
    %v3208 = vpop.permute.xlu0 %3207
    %v3210 = vmul.f32 %v3204, %v3208
    %v3211 = vtanh.pop %v3210
    %3213 = vrot.lane.b32.xlu0 %v3211, 96
    %v3214 = vpop.permute.xlu0 %3213
    %v3216 = vmul.f32 %v3204, %v3214
    %3218 = vrot.lane.b32.xlu0 %v3216, 32
    %v3219 = vpop.permute.xlu0 %3218
    %v3220 = vsel %vm93, %v3219, 0
    %3222 = vmatprep.subr.mxu0 0.0
    %3223 = vmatpush1.msra.mxu0 0.0
    %3224 = vmatprep.subr.mxu0 0.0
    %3225 = vmatpush1.msra.mxu0 0.0
    %3226 = vmatprep.subr.mxu0 0.0
    %3227 = vmatpush1.msra.mxu0 0.0
    %3228 = vmatprep.subr.mxu0 0.0
    %3229 = vmatpush1.msra.mxu0 0.0
    %3230 = vmatprep.subr.mxu0 0.0
    %3231 = vmatpush1.msra.mxu0 0.0
    %3232 = vmatprep.subr.mxu0 0.0
    %3233 = vmatpush1.msra.mxu0 0.0
    %3234 = vmatprep.subr.mxu0 0.0
    %3235 = vmatpush1.msra.mxu0 0.0
    %3236 = vmatprep.subr.mxu0 0.0
    %3237 = vmatpush1.msra.mxu0 0.0
    %3238 = vmatprep.subr.mxu0 0.0
    %3239 = vmatpush1.msra.mxu0 0.0
    %3240 = vmatprep.subr.mxu0 0.0
    %3241 = vmatpush1.msra.mxu0 0.0
    %3242 = vmatprep.subr.mxu0 0.0
    %3243 = vmatpush1.msra.mxu0 0.0
    %3244 = vmatprep.subr.mxu0 0.0
    %3245 = vmatpush1.msra.mxu0 0.0
    %3246 = vmatprep.subr.mxu0 0.0
    %3247 = vmatpush1.msra.mxu0 %v2206
    %3248 = vmatprep.subr.mxu0 0.0
    %3249 = vmatpush1.msra.mxu0 %v2205
    %3250 = vmatprep.subr.mxu0 0.0
    %3251 = vmatpush1.msra.mxu0 %v2204
    %3252 = vmatprep.subr.mxu0 0.0
    %3253 = vmatpush1.msra.mxu0 %v2203
    %3254 = vmatprep.subr.mxu0 0.0
    %3255 = vmatpush2.msra.mxu0 0.0
    %3256 = vmatprep.subr.mxu0 0.0
    %3257 = vmatpush2.msra.mxu0 0.0
    %3258 = vmatprep.subr.mxu0 0.0
    %3259 = vmatpush2.msra.mxu0 0.0
    %3260 = vmatprep.subr.mxu0 0.0
    %3261 = vmatpush2.msra.mxu0 0.0
    %3262 = vmatprep.subr.mxu0 0.0
    %3263 = vmatpush2.msra.mxu0 0.0
    %3264 = vmatprep.subr.mxu0 0.0
    %3265 = vmatpush2.msra.mxu0 0.0
    %3266 = vmatprep.subr.mxu0 0.0
    %3267 = vmatpush2.msra.mxu0 0.0
    %3268 = vmatprep.subr.mxu0 0.0
    %3269 = vmatpush2.msra.mxu0 0.0
    %3270 = vmatprep.subr.mxu0 0.0
    %3271 = vmatpush2.msra.mxu0 0.0
    %3272 = vmatprep.subr.mxu0 0.0
    %3273 = vmatpush2.msra.mxu0 0.0
    %3274 = vmatprep.subr.mxu0 0.0
    %3275 = vmatpush2.msra.mxu0 0.0
    %3276 = vmatprep.subr.mxu0 0.0
    %3277 = vmatpush2.msra.mxu0 0.0
    %3278 = vmatprep.subr.mxu0 0.0
    %3279 = vmatpush2.msra.mxu0 0.0
    %3280 = vmatprep.subr.mxu0 0.0
    %3281 = vmatpush2.msra.mxu0 0.0
    %3282 = vmatprep.subr.mxu0 0.0
    %3283 = vmatpush2.msra.mxu0 0.0
    %3284 = vmatprep.subr.mxu0 0.0
    %3285 = vmatpush2.msra.mxu0 0.0
    %3286 = vmatprep.mubr.f32.mxu0 0.0
    %3287 = vmatmul.mubr.f32.gmra.mxu0 %v3220
    %v3288 = vpop.f32.mrf.mxu0
    %v3289 = vadd.f32 %v2226, %v3288
    %v3290 = vpop.f32.mrf.mxu0
    %3291 = vdwg.mxu0
    %s3292 = scalar_lea.vmem %s18, 16
    %3293 = vst [vmem:[%s3292] sm:$0xff] %v3289
    %3294 = vmax.xlane.f32.xlu0 %v3289
    %v3295 = vpop.xlane.xlu0 %3294
    %vm3296 = vcmp.eq.f32.partialorder %v3289, %v3295
    %v3297 = vsel %vm3296, %v2230, 128.0
    %3298 = vmin.xlane.f32.xlu0 %v3297
    %v3299 = vpop.xlane.xlu0 %3298
    %vm3300 = vcmp.eq.f32.partialorder %v2230, %v3299
    %v3301 = vsel %vm3300, 1, 0
    %v3302 = vcvt.s32.f32 %v3301
    %s3303 = scalar_lea.vmem %s8, 24
    %v3304 = vld [vmem:[%s3303] sm:$0xff]
    %3305 = vset.pattern.permute.xlu0 0
    %3306 = vperm.xlu0 %3305, %v3304
    %v3307 = vpop.permute.xlu0 %3306
    %vm3308 = vcmp.eq.s32.totalorder %v2229, %v3307
    %v3309 = vsel %vm3308, 1, 0
    %v3310 = vcvt.s32.f32 %v3309
    %s3311 = sld [smem:[#allocation3 + $0x3]]
    %p3312 = scmp.eq.s32.totalorder %s3311, 1
    %s3313 = scalar_select %p3312, 1, 0
    %s3314 = scvt.s32.f32 %s3313
    %v3315 = vstv %s3314
    %v3316 = vmul.f32 %v3315, %v3310
    %s3317 = ssub.f32 1.0, %s3314
    %v3318 = vstv %s3317
    %v3319 = vmul.f32 %v3318, %v3302
    %v3320 = vadd.f32 %v3316, %v3319
    %3321 = vmatprep.subr.mxu0 0.0
    %3322 = vmatpush1.msra.mxu0 %v2194
    %3323 = vmatprep.subr.mxu0 0.0
    %3324 = vmatpush1.msra.mxu0 %v2193
    %3325 = vmatprep.subr.mxu0 0.0
    %3326 = vmatpush1.msra.mxu0 %v2192
    %3327 = vmatprep.subr.mxu0 0.0
    %3328 = vmatpush1.msra.mxu0 %v2191
    %3329 = vmatprep.subr.mxu0 0.0
    %3330 = vmatpush1.msra.mxu0 %v2190
    %3331 = vmatprep.subr.mxu0 0.0
    %3332 = vmatpush1.msra.mxu0 %v2189
    %3333 = vmatprep.subr.mxu0 0.0
    %3334 = vmatpush1.msra.mxu0 %v2188
    %3335 = vmatprep.subr.mxu0 0.0
    %3336 = vmatpush1.msra.mxu0 %v2187
    %3337 = vmatprep.subr.mxu0 0.0
    %3338 = vmatpush1.msra.mxu0 %v2186
    %3339 = vmatprep.subr.mxu0 0.0
    %3340 = vmatpush1.msra.mxu0 %v2185
    %3341 = vmatprep.subr.mxu0 0.0
    %3342 = vmatpush1.msra.mxu0 %v2184
    %3343 = vmatprep.subr.mxu0 0.0
    %3344 = vmatpush1.msra.mxu0 %v2183
    %3345 = vmatprep.subr.mxu0 0.0
    %3346 = vmatpush1.msra.mxu0 %v2182
    %3347 = vmatprep.subr.mxu0 0.0
    %3348 = vmatpush1.msra.mxu0 %v2181
    %3349 = vmatprep.subr.mxu0 0.0
    %3350 = vmatpush1.msra.mxu0 %v2180
    %3351 = vmatprep.subr.mxu0 0.0
    %3352 = vmatpush1.msra.mxu0 %v2179
    %3353 = vmatprep.subr.mxu0 0.0
    %3354 = vmatpush2.msra.mxu0 0.0
    %3355 = vmatprep.subr.mxu0 0.0
    %3356 = vmatpush2.msra.mxu0 0.0
    %3357 = vmatprep.subr.mxu0 0.0
    %3358 = vmatpush2.msra.mxu0 0.0
    %3359 = vmatprep.subr.mxu0 0.0
    %3360 = vmatpush2.msra.mxu0 0.0
    %3361 = vmatprep.subr.mxu0 0.0
    %3362 = vmatpush2.msra.mxu0 0.0
    %3363 = vmatprep.subr.mxu0 0.0
    %3364 = vmatpush2.msra.mxu0 0.0
    %3365 = vmatprep.subr.mxu0 0.0
    %3366 = vmatpush2.msra.mxu0 0.0
    %3367 = vmatprep.subr.mxu0 0.0
    %3368 = vmatpush2.msra.mxu0 0.0
    %3369 = vmatprep.subr.mxu0 0.0
    %3370 = vmatpush2.msra.mxu0 0.0
    %3371 = vmatprep.subr.mxu0 0.0
    %3372 = vmatpush2.msra.mxu0 0.0
    %3373 = vmatprep.subr.mxu0 0.0
    %3374 = vmatpush2.msra.mxu0 0.0
    %3375 = vmatprep.subr.mxu0 0.0
    %3376 = vmatpush2.msra.mxu0 0.0
    %3377 = vmatprep.subr.mxu0 0.0
    %3378 = vmatpush2.msra.mxu0 0.0
    %3379 = vmatprep.subr.mxu0 0.0
    %3380 = vmatpush2.msra.mxu0 0.0
    %3381 = vmatprep.subr.mxu0 0.0
    %3382 = vmatpush2.msra.mxu0 0.0
    %3383 = vmatprep.subr.mxu0 0.0
    %3384 = vmatpush2.msra.mxu0 0.0
    %3385 = vmatprep.mubr.f32.mxu0 0.0
    %3386 = vmatmul.mubr.f32.gmra.mxu0 %v3320
    %v3387 = vpop.f32.mrf.mxu0
    %v3388 = vadd.f32 0.0, %v3387
    %v3389 = vpop.f32.mrf.mxu0
    %3390 = vdwg.mxu0
    %v3392 = vsel %vm93, %v3388, 0
    %3394 = vmatprep.subr.mxu0 0.0
    %3395 = vmatpush1.msra.mxu0 0.0
    %3396 = vmatprep.subr.mxu0 0.0
    %3397 = vmatpush1.msra.mxu0 0.0
    %3398 = vmatprep.subr.mxu0 0.0
    %3399 = vmatpush1.msra.mxu0 0.0
    %3400 = vmatprep.subr.mxu0 0.0
    %3401 = vmatpush1.msra.mxu0 0.0
    %3402 = vmatprep.subr.mxu0 0.0
    %3403 = vmatpush1.msra.mxu0 0.0
    %3404 = vmatprep.subr.mxu0 0.0
    %3405 = vmatpush1.msra.mxu0 0.0
    %3406 = vmatprep.subr.mxu0 0.0
    %3407 = vmatpush1.msra.mxu0 0.0
    %3408 = vmatprep.subr.mxu0 0.0
    %3409 = vmatpush1.msra.mxu0 0.0
    %3410 = vmatprep.subr.mxu0 0.0
    %3411 = vmatpush1.msra.mxu0 0.0
    %3412 = vmatprep.subr.mxu0 0.0
    %3413 = vmatpush1.msra.mxu0 0.0
    %3414 = vmatprep.subr.mxu0 0.0
    %3415 = vmatpush1.msra.mxu0 0.0
    %3416 = vmatprep.subr.mxu0 0.0
    %3417 = vmatpush1.msra.mxu0 0.0
    %3418 = vmatprep.subr.mxu0 0.0
    %3419 = vmatpush1.msra.mxu0 %v2198
    %3420 = vmatprep.subr.mxu0 0.0
    %3421 = vmatpush1.msra.mxu0 %v2197
    %3422 = vmatprep.subr.mxu0 0.0
    %3423 = vmatpush1.msra.mxu0 %v2196
    %3424 = vmatprep.subr.mxu0 0.0
    %3425 = vmatpush1.msra.mxu0 %v2195
    %3426 = vmatprep.subr.mxu0 0.0
    %3427 = vmatpush2.msra.mxu0 0.0
    %3428 = vmatprep.subr.mxu0 0.0
    %3429 = vmatpush2.msra.mxu0 0.0
    %3430 = vmatprep.subr.mxu0 0.0
    %3431 = vmatpush2.msra.mxu0 0.0
    %3432 = vmatprep.subr.mxu0 0.0
    %3433 = vmatpush2.msra.mxu0 0.0
    %3434 = vmatprep.subr.mxu0 0.0
    %3435 = vmatpush2.msra.mxu0 0.0
    %3436 = vmatprep.subr.mxu0 0.0
    %3437 = vmatpush2.msra.mxu0 0.0
    %3438 = vmatprep.subr.mxu0 0.0
    %3439 = vmatpush2.msra.mxu0 0.0
    %3440 = vmatprep.subr.mxu0 0.0
    %3441 = vmatpush2.msra.mxu0 0.0
    %3442 = vmatprep.subr.mxu0 0.0
    %3443 = vmatpush2.msra.mxu0 0.0
    %3444 = vmatprep.subr.mxu0 0.0
    %3445 = vmatpush2.msra.mxu0 0.0
    %3446 = vmatprep.subr.mxu0 0.0
    %3447 = vmatpush2.msra.mxu0 0.0
    %3448 = vmatprep.subr.mxu0 0.0
    %3449 = vmatpush2.msra.mxu0 0.0
    %3450 = vmatprep.subr.mxu0 0.0
    %3451 = vmatpush2.msra.mxu0 0.0
    %3452 = vmatprep.subr.mxu0 0.0
    %3453 = vmatpush2.msra.mxu0 0.0
    %3454 = vmatprep.subr.mxu0 0.0
    %3455 = vmatpush2.msra.mxu0 0.0
    %3456 = vmatprep.subr.mxu0 0.0
    %3457 = vmatpush2.msra.mxu0 0.0
    %3458 = vmatprep.mubr.f32.mxu0 0.0
    %3459 = vmatmul.mubr.f32.gmra.mxu0 %v3392
    %v3460 = vpop.f32.mrf.mxu0
    %v3461 = vadd.f32 %v2212, %v3460
    %v3462 = vpop.f32.mrf.mxu0
    %3463 = vdwg.mxu0
    %v3464 = vxor.u32 %v3461, 2147483648
    %v3465 = vmul.f32 %v3464, 1.442695
    %v3466 = vpow.pop %v3465
    %v3467 = vadd.f32 %v3466, 1.0
    %v3468 = vrcp.pop %v3467
    %v3469 = vmul.f32 1.0, %v3468
    %v3470 = vtanh.pop %v3461
    %3472 = vrot.lane.b32.xlu0 %v3470, 64
    %v3473 = vpop.permute.xlu0 %3472
    %v3475 = vmul.f32 %v3469, %v3473
    %v3476 = vtanh.pop %v3475
    %3478 = vrot.lane.b32.xlu0 %v3476, 96
    %v3479 = vpop.permute.xlu0 %3478
    %v3481 = vmul.f32 %v3469, %v3479
    %3483 = vrot.lane.b32.xlu0 %v3481, 32
    %v3484 = vpop.permute.xlu0 %3483
    %v3485 = vsel %vm93, %v3484, 0
    %3487 = vmatprep.subr.mxu0 0.0
    %3488 = vmatpush1.msra.mxu0 0.0
    %3489 = vmatprep.subr.mxu0 0.0
    %3490 = vmatpush1.msra.mxu0 0.0
    %3491 = vmatprep.subr.mxu0 0.0
    %3492 = vmatpush1.msra.mxu0 0.0
    %3493 = vmatprep.subr.mxu0 0.0
    %3494 = vmatpush1.msra.mxu0 0.0
    %3495 = vmatprep.subr.mxu0 0.0
    %3496 = vmatpush1.msra.mxu0 0.0
    %3497 = vmatprep.subr.mxu0 0.0
    %3498 = vmatpush1.msra.mxu0 0.0
    %3499 = vmatprep.subr.mxu0 0.0
    %3500 = vmatpush1.msra.mxu0 0.0
    %3501 = vmatprep.subr.mxu0 0.0
    %3502 = vmatpush1.msra.mxu0 0.0
    %3503 = vmatprep.subr.mxu0 0.0
    %3504 = vmatpush1.msra.mxu0 0.0
    %3505 = vmatprep.subr.mxu0 0.0
    %3506 = vmatpush1.msra.mxu0 0.0
    %3507 = vmatprep.subr.mxu0 0.0
    %3508 = vmatpush1.msra.mxu0 0.0
    %3509 = vmatprep.subr.mxu0 0.0
    %3510 = vmatpush1.msra.mxu0 0.0
    %3511 = vmatprep.subr.mxu0 0.0
    %3512 = vmatpush1.msra.mxu0 %v2202
    %3513 = vmatprep.subr.mxu0 0.0
    %3514 = vmatpush1.msra.mxu0 %v2201
    %3515 = vmatprep.subr.mxu0 0.0
    %3516 = vmatpush1.msra.mxu0 %v2200
    %3517 = vmatprep.subr.mxu0 0.0
    %3518 = vmatpush1.msra.mxu0 %v2199
    %3519 = vmatprep.subr.mxu0 0.0
    %3520 = vmatpush2.msra.mxu0 0.0
    %3521 = vmatprep.subr.mxu0 0.0
    %3522 = vmatpush2.msra.mxu0 0.0
    %3523 = vmatprep.subr.mxu0 0.0
    %3524 = vmatpush2.msra.mxu0 0.0
    %3525 = vmatprep.subr.mxu0 0.0
    %3526 = vmatpush2.msra.mxu0 0.0
    %3527 = vmatprep.subr.mxu0 0.0
    %3528 = vmatpush2.msra.mxu0 0.0
    %3529 = vmatprep.subr.mxu0 0.0
    %3530 = vmatpush2.msra.mxu0 0.0
    %3531 = vmatprep.subr.mxu0 0.0
    %3532 = vmatpush2.msra.mxu0 0.0
    %3533 = vmatprep.subr.mxu0 0.0
    %3534 = vmatpush2.msra.mxu0 0.0
    %3535 = vmatprep.subr.mxu0 0.0
    %3536 = vmatpush2.msra.mxu0 0.0
    %3537 = vmatprep.subr.mxu0 0.0
    %3538 = vmatpush2.msra.mxu0 0.0
    %3539 = vmatprep.subr.mxu0 0.0
    %3540 = vmatpush2.msra.mxu0 0.0
    %3541 = vmatprep.subr.mxu0 0.0
    %3542 = vmatpush2.msra.mxu0 0.0
    %3543 = vmatprep.subr.mxu0 0.0
    %3544 = vmatpush2.msra.mxu0 0.0
    %3545 = vmatprep.subr.mxu0 0.0
    %3546 = vmatpush2.msra.mxu0 0.0
    %3547 = vmatprep.subr.mxu0 0.0
    %3548 = vmatpush2.msra.mxu0 0.0
    %3549 = vmatprep.subr.mxu0 0.0
    %3550 = vmatpush2.msra.mxu0 0.0
    %3551 = vmatprep.mubr.f32.mxu0 0.0
    %3552 = vmatmul.mubr.f32.gmra.mxu0 %v3485
    %v3553 = vpop.f32.mrf.mxu0
    %v3554 = vadd.f32 %v2219, %v3553
    %v3555 = vpop.f32.mrf.mxu0
    %3556 = vdwg.mxu0
    %v3557 = vxor.u32 %v3554, 2147483648
    %v3558 = vmul.f32 %v3557, 1.442695
    %v3559 = vpow.pop %v3558
    %v3560 = vadd.f32 %v3559, 1.0
    %v3561 = vrcp.pop %v3560
    %v3562 = vmul.f32 1.0, %v3561
    %v3563 = vtanh.pop %v3554
    %3565 = vrot.lane.b32.xlu0 %v3563, 64
    %v3566 = vpop.permute.xlu0 %3565
    %v3568 = vmul.f32 %v3562, %v3566
    %v3569 = vtanh.pop %v3568
    %3571 = vrot.lane.b32.xlu0 %v3569, 96
    %v3572 = vpop.permute.xlu0 %3571
    %v3574 = vmul.f32 %v3562, %v3572
    %3576 = vrot.lane.b32.xlu0 %v3574, 32
    %v3577 = vpop.permute.xlu0 %3576
    %v3578 = vsel %vm93, %v3577, 0
    %3580 = vmatprep.subr.mxu0 0.0
    %3581 = vmatpush1.msra.mxu0 0.0
    %3582 = vmatprep.subr.mxu0 0.0
    %3583 = vmatpush1.msra.mxu0 0.0
    %3584 = vmatprep.subr.mxu0 0.0
    %3585 = vmatpush1.msra.mxu0 0.0
    %3586 = vmatprep.subr.mxu0 0.0
    %3587 = vmatpush1.msra.mxu0 0.0
    %3588 = vmatprep.subr.mxu0 0.0
    %3589 = vmatpush1.msra.mxu0 0.0
    %3590 = vmatprep.subr.mxu0 0.0
    %3591 = vmatpush1.msra.mxu0 0.0
    %3592 = vmatprep.subr.mxu0 0.0
    %3593 = vmatpush1.msra.mxu0 0.0
    %3594 = vmatprep.subr.mxu0 0.0
    %3595 = vmatpush1.msra.mxu0 0.0
    %3596 = vmatprep.subr.mxu0 0.0
    %3597 = vmatpush1.msra.mxu0 0.0
    %3598 = vmatprep.subr.mxu0 0.0
    %3599 = vmatpush1.msra.mxu0 0.0
    %3600 = vmatprep.subr.mxu0 0.0
    %3601 = vmatpush1.msra.mxu0 0.0
    %3602 = vmatprep.subr.mxu0 0.0
    %3603 = vmatpush1.msra.mxu0 0.0
    %3604 = vmatprep.subr.mxu0 0.0
    %3605 = vmatpush1.msra.mxu0 %v2206
    %3606 = vmatprep.subr.mxu0 0.0
    %3607 = vmatpush1.msra.mxu0 %v2205
    %3608 = vmatprep.subr.mxu0 0.0
    %3609 = vmatpush1.msra.mxu0 %v2204
    %3610 = vmatprep.subr.mxu0 0.0
    %3611 = vmatpush1.msra.mxu0 %v2203
    %3612 = vmatprep.subr.mxu0 0.0
    %3613 = vmatpush2.msra.mxu0 0.0
    %3614 = vmatprep.subr.mxu0 0.0
    %3615 = vmatpush2.msra.mxu0 0.0
    %3616 = vmatprep.subr.mxu0 0.0
    %3617 = vmatpush2.msra.mxu0 0.0
    %3618 = vmatprep.subr.mxu0 0.0
    %3619 = vmatpush2.msra.mxu0 0.0
    %3620 = vmatprep.subr.mxu0 0.0
    %3621 = vmatpush2.msra.mxu0 0.0
    %3622 = vmatprep.subr.mxu0 0.0
    %3623 = vmatpush2.msra.mxu0 0.0
    %3624 = vmatprep.subr.mxu0 0.0
    %3625 = vmatpush2.msra.mxu0 0.0
    %3626 = vmatprep.subr.mxu0 0.0
    %3627 = vmatpush2.msra.mxu0 0.0
    %3628 = vmatprep.subr.mxu0 0.0
    %3629 = vmatpush2.msra.mxu0 0.0
    %3630 = vmatprep.subr.mxu0 0.0
    %3631 = vmatpush2.msra.mxu0 0.0
    %3632 = vmatprep.subr.mxu0 0.0
    %3633 = vmatpush2.msra.mxu0 0.0
    %3634 = vmatprep.subr.mxu0 0.0
    %3635 = vmatpush2.msra.mxu0 0.0
    %3636 = vmatprep.subr.mxu0 0.0
    %3637 = vmatpush2.msra.mxu0 0.0
    %3638 = vmatprep.subr.mxu0 0.0
    %3639 = vmatpush2.msra.mxu0 0.0
    %3640 = vmatprep.subr.mxu0 0.0
    %3641 = vmatpush2.msra.mxu0 0.0
    %3642 = vmatprep.subr.mxu0 0.0
    %3643 = vmatpush2.msra.mxu0 0.0
    %3644 = vmatprep.mubr.f32.mxu0 0.0
    %3645 = vmatmul.mubr.f32.gmra.mxu0 %v3578
    %v3646 = vpop.f32.mrf.mxu0
    %v3647 = vadd.f32 %v2226, %v3646
    %v3648 = vpop.f32.mrf.mxu0
    %3649 = vdwg.mxu0
    %s3650 = scalar_lea.vmem %s18, 24
    %3651 = vst [vmem:[%s3650] sm:$0xff] %v3647
    // Predicated region
    $region62: #{_network_forward_device.1} parent=1 // pred_check
      _
    $region63: #{_network_forward_device.1} parent=1 // pred_check_branch
      %3653 = sbr.rel (0) target = $region65
    $region64: #{_network_forward_device.1} parent=1 // pred_region
      %s3655 = ssub.s32 256, 256
      %3656 = vsyncadd [#allocation5], %s3655
      %s3657 = sshll.u32 [#allocation4], 4
      %s3658 = int_to_ptr.vmem [resolvable:$true] %s3657
      %3663 = dma.vmem_to_hbm [thread:$0]  %s3658, 256, %s16, [#allocation5], 128, 128, 8
    $region65: #{_network_forward_device.1} parent=1 // pred_fallthru
      _
    // Predicated region
    $region66: #{_network_forward_device.1} parent=1 // pred_check
      _
    $region67: #{_network_forward_device.1} parent=1 // pred_check_branch
      %3665 = sbr.rel (0) target = $region69
    $region68: #{_network_forward_device.1} parent=1 // pred_region
      %s3667 = ssub.s32 256, 256
      %3668 = vsyncadd [#allocation7], %s3667
      %s3669 = sshll.u32 [#allocation6], 4
      %s3670 = int_to_ptr.vmem [resolvable:$true] %s3669
      %3675 = dma.vmem_to_hbm [thread:$0]  %s3670, 256, %s17, [#allocation7], 128, 128, 8
    $region69: #{_network_forward_device.1} parent=1 // pred_fallthru
      _
    // Predicated region
    $region70: #{_network_forward_device.1} parent=1 // pred_check
      _
    $region71: #{_network_forward_device.1} parent=1 // pred_check_branch
      %3677 = sbr.rel (0) target = $region73
    $region72: #{_network_forward_device.1} parent=1 // pred_region
      _
    $region73: #{_network_forward_device.1} parent=1 // pred_fallthru
      _
    // Predicated region
    $region74: #{_network_forward_device.1} parent=1 // pred_check
      _
    $region75: #{_network_forward_device.1} parent=1 // pred_check_branch
      %3679 = sbr.rel (0) target = $region77
    $region76: #{_network_forward_device.1} parent=1 // pred_region
      %3680 = dma.done [#allocation5], 256
    $region77: #{_network_forward_device.1} parent=1 // pred_fallthru
      _
    // Predicated region
    $region78: #{_network_forward_device.1} parent=1 // pred_check
      _
    $region79: #{_network_forward_device.1} parent=1 // pred_check_branch
      %3682 = sbr.rel (0) target = $region81
    $region80: #{_network_forward_device.1} parent=1 // pred_region
      %3683 = dma.done [#allocation7], 256
    $region81: #{_network_forward_device.1} parent=1 // pred_fallthru
      _
    // Predicated region
    $region82: #{_network_forward_device.1} parent=1 // pred_check
      _
    $region83: #{_network_forward_device.1} parent=1 // pred_check_branch
      %3685 = sbr.rel (0) target = $region85
    $region84: #{_network_forward_device.1} parent=1 // pred_region
      _
    $region85: #{_network_forward_device.1} parent=1 // pred_fallthru
      _
    %3686 = vsyncpa [#allocation5], 1
    %3687 = vsyncpa [#allocation7], 1

</llo_original>
